<compile_context>
chip_gen: v7x
topology: tpu7x:2x2x1
jax: 0.10.0
libtpu: 0.0.40
codegen_flags: <defaults>
</compile_context>

<pallas_src>
import jax
import jax.numpy as jnp
from jax.experimental import pallas as pl
from jax.experimental.pallas import tpu as pltpu

KSIZE = 7
PAD = KSIZE // 2


def _cbam_kernel(x_ref, w1_ref, b1_ref, w2_ref, b2_ref, t_ref, o_ref):
    # x_ref/o_ref: (Bt, H, W, C) NHWC blocks (C on lanes, W on sublanes).
    # t_ref: (2, 7, W, W) banded conv matrices (avg-channel, max-channel).
    Bt, H, W, C = x_ref.shape
    f32 = jnp.float32

    x = x_ref[...].astype(f32)                            # (Bt, H, W, C)

    # ---------------- channel attention (fused avg/max shared MLP) ----------
    s1 = jnp.sum(x, axis=1)                               # (Bt, W, C)
    m1 = jnp.max(x, axis=1)                               # (Bt, W, C)
    avg_r = jnp.sum(s1, axis=1) * (1.0 / (H * W))         # (Bt, C)
    max_r = jnp.max(m1, axis=1)                           # (Bt, C)

    pooled = jnp.concatenate([avg_r, max_r], axis=0)      # (2*Bt, C)
    hid = jnp.maximum(
        jnp.dot(pooled, w1_ref[...], preferred_element_type=f32) + b1_ref[...],
        0.0)
    y = jnp.dot(hid, w2_ref[...], preferred_element_type=f32) + b2_ref[...]
    ch_att = jax.nn.sigmoid(y[0:Bt] + y[Bt:2 * Bt])       # (Bt, C)

    zpad = jnp.zeros((PAD, W), f32)                       # zero rows for "same" pad

    for b in range(Bt):
        ab = ch_att[b:b + 1, :]                           # (1, C)
        x1 = x_ref[b].astype(f32) * ab[None, :, :]        # (H, W, C) channel-scaled

        # -------------- spatial attention on dense (H, W) planes ------------
        avg_s = jnp.mean(x1, axis=2)                      # (H, W), W on lanes
        max_s = jnp.max(x1, axis=2)                       # (H, W)

        # Park x1 in the output block so it is not live across the conv loop.
        o_ref[b] = x1.astype(o_ref.dtype)

        acc = jnp.zeros((H, W), f32)
        for ch, plane in enumerate((avg_s, max_s)):       # ch 0 = avg, 1 = max
            # zero "same" padding along H; padding along W is baked into t_ref.
            p = jnp.concatenate([zpad, plane, zpad], axis=0)   # (H + 2*PAD, W)
            for ki in range(KSIZE):
                # One banded (W, W) MXU matmul applies all 7 kj taps for this
                # row offset; the ki offset is a sublane-offset read.
                s = jnp.dot(p, t_ref[ch, ki], preferred_element_type=f32)
                acc = acc + s[ki:ki + H, :]

        sp = jax.nn.sigmoid(acc)                          # (H, W)
        # Re-introduce the channel axis only here (lane broadcast over C).
        o_ref[b] = (o_ref[b].astype(f32) * sp[:, :, None]).astype(o_ref.dtype)


def _band_weights(cw, width):
    """(2, 49) conv weights -> (2, 7, W, W) banded matrices.

    T[ch, ki, j_src, j_dst] = cw[ch, ki, j_src - j_dst + PAD] inside the band,
    0 outside, so (row-padded plane @ T[ch, ki])[r, j] applies all kj taps of
    row-offset ki with zero "same" padding along W.
    """
    cwr = cw.reshape(2, KSIZE, KSIZE).astype(jnp.float32)
    j_src = jnp.arange(width)[:, None]
    j_dst = jnp.arange(width)[None, :]
    k = j_src - j_dst + PAD                               # (W, W)
    valid = (k >= 0) & (k < KSIZE)
    kc = jnp.clip(k, 0, KSIZE - 1)
    t = cwr[:, :, kc]                                     # (2, 7, W, W)
    return jnp.where(valid[None, None], t, 0.0)


def _pick_block_b(batch, elem_bytes, target_bytes=1 << 20, max_bt=8):
    """Batch elements per grid step: big enough to amortize per-step overhead,
    but keep >= 2 grid steps when possible (dual-TC / megacore sharding), and
    bounded so blocks also fit v7x's smaller VMEM."""
    bt = int(max(1, min(batch, max_bt, target_bytes // max(elem_bytes, 1))))
    while bt > 1 and batch // bt < 2:
        bt -= 1
    while batch % bt:
        bt -= 1
    return bt


def cbam_pallas(x_nchw, w1, b1, w2, b2, cw, *, block_b=None):
    B, C, H, W = x_nchw.shape
    CH = w1.shape[1]
    if block_b is None:
        block_b = _pick_block_b(B, H * W * C * 4)
    Bt = block_b
    assert B % Bt == 0

    x_nhwc = jnp.transpose(x_nchw, (0, 2, 3, 1))          # glue: NCHW -> NHWC
    t_band = _band_weights(cw, W)                         # (2, 7, W, W)

    out_nhwc = pl.pallas_call(
        _cbam_kernel,
        out_shape=jax.ShapeDtypeStruct((B, H, W, C), x_nchw.dtype),
        grid_spec=pltpu.PrefetchScalarGridSpec(
            num_scalar_prefetch=0,
            grid=(B // Bt,),
            in_specs=[
                pl.BlockSpec((Bt, H, W, C), lambda g: (g, 0, 0, 0)),
                pl.BlockSpec((C, CH), lambda g: (0, 0)),
                pl.BlockSpec((1, CH), lambda g: (0, 0)),
                pl.BlockSpec((CH, C), lambda g: (0, 0)),
                pl.BlockSpec((1, C), lambda g: (0, 0)),
                pl.BlockSpec((2, KSIZE, W, W), lambda g: (0, 0, 0, 0)),
            ],
            out_specs=pl.BlockSpec((Bt, H, W, C), lambda g: (g, 0, 0, 0)),
        ),
        compiler_params=pltpu.CompilerParams(
            dimension_semantics=("parallel",)),
    )(x_nhwc, w1, b1, w2, b2, t_band)

    return jnp.transpose(out_nhwc, (0, 3, 1, 2))          # glue: NHWC -> NCHW


def cbam_ref(x, w1, b1, w2, b2, cw):
    """Pure-JAX reference matching the PyTorch forward (NCHW)."""
    avg = jnp.mean(x, axis=(2, 3))                        # (B, C)
    mx = jnp.max(x, axis=(2, 3))                          # (B, C)

    def mlp(v):
        h = jnp.maximum(
            jnp.dot(v, w1, precision=jax.lax.Precision.HIGHEST) + b1, 0.0)
        return jnp.dot(h, w2, precision=jax.lax.Precision.HIGHEST) + b2

    att = jax.nn.sigmoid(mlp(avg) + mlp(mx))[:, :, None, None]
    x1 = x * att
    sp_in = jnp.concatenate(
        [jnp.mean(x1, axis=1, keepdims=True),
         jnp.max(x1, axis=1, keepdims=True)], axis=1)     # (B, 2, H, W)
    conv_w = cw.reshape(2, KSIZE, KSIZE)[None]            # (1, 2, 7, 7) OIHW
    sp = jax.lax.conv_general_dilated(
        sp_in, conv_w, window_strides=(1, 1),
        padding=[(PAD, PAD), (PAD, PAD)],
        dimension_numbers=("NCHW", "OIHW", "NCHW"),
        precision=jax.lax.Precision.HIGHEST)
    return x1 * jax.nn.sigmoid(sp)


if __name__ == "__main__":
    B, C, H, W = 2, 32, 16, 16
    REDUCTION = 16
    CH = C // REDUCTION                                   # hidden width of the shared MLP

    key = jax.random.PRNGKey(0)
    ks = jax.random.split(key, 6)
    x = jax.random.normal(ks[0], (B, C, H, W), jnp.float32)
    # Deterministic synthetic parameters (Linear weights stored as (in, out) = W.T).
    w1 = jax.random.normal(ks[1], (C, CH), jnp.float32) * 0.2
    b1 = jax.random.normal(ks[2], (1, CH), jnp.float32) * 0.1
    w2 = jax.random.normal(ks[3], (CH, C), jnp.float32) * 0.2
    b2 = jax.random.normal(ks[4], (1, C), jnp.float32) * 0.1
    cw = jax.random.normal(ks[5], (2, KSIZE * KSIZE), jnp.float32) * 0.1  # Conv2d(2,1,7), no bias

    out = jax.block_until_ready(cbam_pallas(x, w1, b1, w2, b2, cw))
    ref = cbam_ref(x, w1, b1, w2, b2, cw)

    assert out.shape == x.shape and out.dtype == x.dtype
    err = float(jnp.max(jnp.abs(out - ref)))
    if err > 1e-3:
        raise AssertionError(f"kernel/reference mismatch: max abs err = {err}")
    print("KERNEL_OK")
</pallas_src>

<mosaic_0001>
module attributes {stable_mosaic.version = 11 : i64} {
  func.func @_cbam_kernel(%arg0: i32, %arg1: memref<1x16x16x32xf32, #tpu.memory_space<vmem>>, %arg2: memref<32x2xf32, #tpu.memory_space<vmem>>, %arg3: memref<1x2xf32, #tpu.memory_space<vmem>>, %arg4: memref<2x32xf32, #tpu.memory_space<vmem>>, %arg5: memref<1x32xf32, #tpu.memory_space<vmem>>, %arg6: memref<2x7x16x16xf32, #tpu.memory_space<vmem>>, %arg7: memref<1x16x16x32xf32, #tpu.memory_space<vmem>>) attributes {dimension_semantics = [#tpu.dimension_semantics<parallel>], iteration_bounds = array<i64: 2>, scalar_prefetch = 0 : i64, scratch_operands = 0 : i64, tpu.core_type = #tpu.core_type<tc>, window_params = [{transform_indices = @transform_0, window_bounds = array<i64: 1, 16, 16, 32>}, {pipeline_mode = #tpu.pipeline_mode<synchronous>, transform_indices = @transform_1, window_bounds = array<i64: 32, 2>}, {pipeline_mode = #tpu.pipeline_mode<synchronous>, transform_indices = @transform_2, window_bounds = array<i64: 1, 2>}, {pipeline_mode = #tpu.pipeline_mode<synchronous>, transform_indices = @transform_3, window_bounds = array<i64: 2, 32>}, {pipeline_mode = #tpu.pipeline_mode<synchronous>, transform_indices = @transform_4, window_bounds = array<i64: 1, 32>}, {pipeline_mode = #tpu.pipeline_mode<synchronous>, transform_indices = @transform_5, window_bounds = array<i64: 2, 7, 16, 16>}, {transform_indices = @transform_6, window_bounds = array<i64: 1, 16, 16, 32>}]} {
    %c0 = arith.constant 0 : index
    %c0_0 = arith.constant 0 : index
    %c0_1 = arith.constant 0 : index
    %c0_2 = arith.constant 0 : index
    %0 = vector.load %arg1[%c0, %c0_0, %c0_1, %c0_2] : memref<1x16x16x32xf32, #tpu.memory_space<vmem>>, vector<1x16x16x32xf32>
    %cst = arith.constant dense<0.000000e+00> : vector<1x16x32xf32>
    %1 = vector.multi_reduction <add>, %0, %cst [1] : vector<1x16x16x32xf32> to vector<1x16x32xf32>
    %cst_3 = arith.constant dense<0xFF800000> : vector<1x16x32xf32>
    %2 = vector.multi_reduction <maximumf>, %0, %cst_3 [1] : vector<1x16x16x32xf32> to vector<1x16x32xf32>
    %cst_4 = arith.constant dense<0.000000e+00> : vector<1x32xf32>
    %3 = vector.multi_reduction <add>, %1, %cst_4 [1] : vector<1x16x32xf32> to vector<1x32xf32>
    %cst_5 = arith.constant 3.906250e-03 : f32
    %4 = vector.broadcast %cst_5 : f32 to vector<1x32xf32>
    %5 = arith.mulf %3, %4 : vector<1x32xf32>
    %cst_6 = arith.constant dense<0xFF800000> : vector<1x32xf32>
    %6 = vector.multi_reduction <maximumf>, %2, %cst_6 [1] : vector<1x16x32xf32> to vector<1x32xf32>
    %7 = tpu.concatenate %5, %6 in 0 : vector<1x32xf32>, vector<1x32xf32> -> vector<2x32xf32>
    %c0_7 = arith.constant 0 : index
    %c0_8 = arith.constant 0 : index
    %8 = vector.load %arg2[%c0_7, %c0_8] : memref<32x2xf32, #tpu.memory_space<vmem>>, vector<32x2xf32>
    %cst_9 = arith.constant dense<0.000000e+00> : vector<2x2xf32>
    %9 = tpu.matmul %7, %8, %cst_9 {dimension_numbers = #tpu.dot_dimension_numbers<[1], [0], [0], [1], [0, 0, 1, 1], [], []>} : vector<2x32xf32>, vector<32x2xf32>, vector<2x2xf32> -> vector<2x2xf32>
    %c0_10 = arith.constant 0 : index
    %c0_11 = arith.constant 0 : index
    %10 = vector.load %arg3[%c0_10, %c0_11] : memref<1x2xf32, #tpu.memory_space<vmem>>, vector<1x2xf32>
    %11 = vector.broadcast %10 : vector<1x2xf32> to vector<2x2xf32>
    %12 = arith.addf %9, %11 : vector<2x2xf32>
    %cst_12 = arith.constant 0.000000e+00 : f32
    %13 = vector.broadcast %cst_12 : f32 to vector<2x2xf32>
    %14 = arith.maximumf %12, %13 : vector<2x2xf32>
    %c0_13 = arith.constant 0 : index
    %c0_14 = arith.constant 0 : index
    %15 = vector.load %arg4[%c0_13, %c0_14] : memref<2x32xf32, #tpu.memory_space<vmem>>, vector<2x32xf32>
    %cst_15 = arith.constant dense<0.000000e+00> : vector<2x32xf32>
    %16 = tpu.matmul %14, %15, %cst_15 {dimension_numbers = #tpu.dot_dimension_numbers<[1], [0], [0], [1], [0, 0, 1, 1], [], []>} : vector<2x2xf32>, vector<2x32xf32>, vector<2x32xf32> -> vector<2x32xf32>
    %c0_16 = arith.constant 0 : index
    %c0_17 = arith.constant 0 : index
    %17 = vector.load %arg5[%c0_16, %c0_17] : memref<1x32xf32, #tpu.memory_space<vmem>>, vector<1x32xf32>
    %18 = vector.broadcast %17 : vector<1x32xf32> to vector<2x32xf32>
    %19 = arith.addf %16, %18 : vector<2x32xf32>
    %20 = vector.extract_strided_slice %19 {offsets = [0, 0], sizes = [1, 32], strides = [1, 1]} : vector<2x32xf32> to vector<1x32xf32>
    %21 = vector.extract_strided_slice %19 {offsets = [1, 0], sizes = [1, 32], strides = [1, 1]} : vector<2x32xf32> to vector<1x32xf32>
    %22 = arith.addf %20, %21 : vector<1x32xf32>
    %23 = arith.negf %22 : vector<1x32xf32>
    %24 = math.exp %23 : vector<1x32xf32>
    %cst_18 = arith.constant 1.000000e+00 : f32
    %25 = vector.broadcast %cst_18 : f32 to vector<1x32xf32>
    %26 = arith.addf %25, %24 : vector<1x32xf32>
    %27 = arith.divf %25, %26 : vector<1x32xf32>
    %cst_19 = arith.constant 0.000000e+00 : f32
    %28 = vector.broadcast %cst_19 : f32 to vector<3x16xf32>
    %c0_20 = arith.constant 0 : index
    %c0_21 = arith.constant 0 : index
    %c0_22 = arith.constant 0 : index
    %c0_23 = arith.constant 0 : index
    %29 = vector.load %arg1[%c0_20, %c0_21, %c0_22, %c0_23] : memref<1x16x16x32xf32, #tpu.memory_space<vmem>>, vector<1x16x16x32xf32>
    %30 = vector.shape_cast %29 : vector<1x16x16x32xf32> to vector<16x16x32xf32>
    %31 = vector.shape_cast %27 : vector<1x32xf32> to vector<1x1x32xf32>
    %32 = vector.broadcast %31 : vector<1x1x32xf32> to vector<16x16x32xf32>
    %33 = arith.mulf %30, %32 : vector<16x16x32xf32>
    %cst_24 = arith.constant dense<0.000000e+00> : vector<16x16xf32>
    %34 = vector.multi_reduction <add>, %33, %cst_24 [2] : vector<16x16x32xf32> to vector<16x16xf32>
    %cst_25 = arith.constant 3.200000e+01 : f32
    %35 = vector.broadcast %cst_25 : f32 to vector<16x16xf32>
    %36 = arith.divf %34, %35 : vector<16x16xf32>
    %cst_26 = arith.constant dense<0xFF800000> : vector<16x16xf32>
    %37 = vector.multi_reduction <maximumf>, %33, %cst_26 [2] : vector<16x16x32xf32> to vector<16x16xf32>
    %c0_27 = arith.constant 0 : index
    %c0_28 = arith.constant 0 : index
    %c0_29 = arith.constant 0 : index
    %c0_30 = arith.constant 0 : index
    %38 = vector.load %arg7[%c0_27, %c0_28, %c0_29, %c0_30] : memref<1x16x16x32xf32, #tpu.memory_space<vmem>>, vector<1x16x16x32xf32>
    %39 = vector.shape_cast %38 : vector<1x16x16x32xf32> to vector<16x16x32xf32>
    %40 = vector.shape_cast %33 : vector<16x16x32xf32> to vector<1x16x16x32xf32>
    tpu.vector_store %arg7[%c0_27, %c0_28, %c0_29, %c0_30], %40 {strides = array<i32>} : memref<1x16x16x32xf32, #tpu.memory_space<vmem>>, vector<1x16x16x32xf32>,
    %cst_31 = arith.constant 0.000000e+00 : f32
    %41 = vector.broadcast %cst_31 : f32 to vector<16x16xf32>
    %42 = tpu.concatenate %28, %36, %28 in 0 : vector<3x16xf32>, vector<16x16xf32>, vector<3x16xf32> -> vector<22x16xf32>
    %c0_32 = arith.constant 0 : index
    %c0_33 = arith.constant 0 : index
    %c0_34 = arith.constant 0 : index
    %c0_35 = arith.constant 0 : index
    %43 = vector.load %arg6[%c0_32, %c0_33, %c0_34, %c0_35] : memref<2x7x16x16xf32, #tpu.memory_space<vmem>>, vector<1x1x16x16xf32>
    %44 = vector.shape_cast %43 : vector<1x1x16x16xf32> to vector<16x16xf32>
    %cst_36 = arith.constant dense<0.000000e+00> : vector<22x16xf32>
    %45 = tpu.matmul %42, %44, %cst_36 {dimension_numbers = #tpu.dot_dimension_numbers<[1], [0], [0], [1], [0, 0, 1, 1], [], []>} : vector<22x16xf32>, vector<16x16xf32>, vector<22x16xf32> -> vector<22x16xf32>
    %46 = vector.extract_strided_slice %45 {offsets = [0, 0], sizes = [16, 16], strides = [1, 1]} : vector<22x16xf32> to vector<16x16xf32>
    %47 = arith.addf %41, %46 : vector<16x16xf32>
    %c0_37 = arith.constant 0 : index
    %c1 = arith.constant 1 : index
    %c0_38 = arith.constant 0 : index
    %c0_39 = arith.constant 0 : index
    %48 = vector.load %arg6[%c0_37, %c1, %c0_38, %c0_39] : memref<2x7x16x16xf32, #tpu.memory_space<vmem>>, vector<1x1x16x16xf32>
    %49 = vector.shape_cast %48 : vector<1x1x16x16xf32> to vector<16x16xf32>
    %cst_40 = arith.constant dense<0.000000e+00> : vector<22x16xf32>
    %50 = tpu.matmul %42, %49, %cst_40 {dimension_numbers = #tpu.dot_dimension_numbers<[1], [0], [0], [1], [0, 0, 1, 1], [], []>} : vector<22x16xf32>, vector<16x16xf32>, vector<22x16xf32> -> vector<22x16xf32>
    %51 = vector.extract_strided_slice %50 {offsets = [1, 0], sizes = [16, 16], strides = [1, 1]} : vector<22x16xf32> to vector<16x16xf32>
    %52 = arith.addf %47, %51 : vector<16x16xf32>
    %c0_41 = arith.constant 0 : index
    %c2 = arith.constant 2 : index
    %c0_42 = arith.constant 0 : index
    %c0_43 = arith.constant 0 : index
    %53 = vector.load %arg6[%c0_41, %c2, %c0_42, %c0_43] : memref<2x7x16x16xf32, #tpu.memory_space<vmem>>, vector<1x1x16x16xf32>
    %54 = vector.shape_cast %53 : vector<1x1x16x16xf32> to vector<16x16xf32>
    %cst_44 = arith.constant dense<0.000000e+00> : vector<22x16xf32>
    %55 = tpu.matmul %42, %54, %cst_44 {dimension_numbers = #tpu.dot_dimension_numbers<[1], [0], [0], [1], [0, 0, 1, 1], [], []>} : vector<22x16xf32>, vector<16x16xf32>, vector<22x16xf32> -> vector<22x16xf32>
    %56 = vector.extract_strided_slice %55 {offsets = [2, 0], sizes = [16, 16], strides = [1, 1]} : vector<22x16xf32> to vector<16x16xf32>
    %57 = arith.addf %52, %56 : vector<16x16xf32>
    %c0_45 = arith.constant 0 : index
    %c3 = arith.constant 3 : index
    %c0_46 = arith.constant 0 : index
    %c0_47 = arith.constant 0 : index
    %58 = vector.load %arg6[%c0_45, %c3, %c0_46, %c0_47] : memref<2x7x16x16xf32, #tpu.memory_space<vmem>>, vector<1x1x16x16xf32>
    %59 = vector.shape_cast %58 : vector<1x1x16x16xf32> to vector<16x16xf32>
    %cst_48 = arith.constant dense<0.000000e+00> : vector<22x16xf32>
    %60 = tpu.matmul %42, %59, %cst_48 {dimension_numbers = #tpu.dot_dimension_numbers<[1], [0], [0], [1], [0, 0, 1, 1], [], []>} : vector<22x16xf32>, vector<16x16xf32>, vector<22x16xf32> -> vector<22x16xf32>
    %61 = vector.extract_strided_slice %60 {offsets = [3, 0], sizes = [16, 16], strides = [1, 1]} : vector<22x16xf32> to vector<16x16xf32>
    %62 = arith.addf %57, %61 : vector<16x16xf32>
    %c0_49 = arith.constant 0 : index
    %c4 = arith.constant 4 : index
    %c0_50 = arith.constant 0 : index
    %c0_51 = arith.constant 0 : index
    %63 = vector.load %arg6[%c0_49, %c4, %c0_50, %c0_51] : memref<2x7x16x16xf32, #tpu.memory_space<vmem>>, vector<1x1x16x16xf32>
    %64 = vector.shape_cast %63 : vector<1x1x16x16xf32> to vector<16x16xf32>
    %cst_52 = arith.constant dense<0.000000e+00> : vector<22x16xf32>
    %65 = tpu.matmul %42, %64, %cst_52 {dimension_numbers = #tpu.dot_dimension_numbers<[1], [0], [0], [1], [0, 0, 1, 1], [], []>} : vector<22x16xf32>, vector<16x16xf32>, vector<22x16xf32> -> vector<22x16xf32>
    %66 = vector.extract_strided_slice %65 {offsets = [4, 0], sizes = [16, 16], strides = [1, 1]} : vector<22x16xf32> to vector<16x16xf32>
    %67 = arith.addf %62, %66 : vector<16x16xf32>
    %c0_53 = arith.constant 0 : index
    %c5 = arith.constant 5 : index
    %c0_54 = arith.constant 0 : index
    %c0_55 = arith.constant 0 : index
    %68 = vector.load %arg6[%c0_53, %c5, %c0_54, %c0_55] : memref<2x7x16x16xf32, #tpu.memory_space<vmem>>, vector<1x1x16x16xf32>
    %69 = vector.shape_cast %68 : vector<1x1x16x16xf32> to vector<16x16xf32>
    %cst_56 = arith.constant dense<0.000000e+00> : vector<22x16xf32>
    %70 = tpu.matmul %42, %69, %cst_56 {dimension_numbers = #tpu.dot_dimension_numbers<[1], [0], [0], [1], [0, 0, 1, 1], [], []>} : vector<22x16xf32>, vector<16x16xf32>, vector<22x16xf32> -> vector<22x16xf32>
    %71 = vector.extract_strided_slice %70 {offsets = [5, 0], sizes = [16, 16], strides = [1, 1]} : vector<22x16xf32> to vector<16x16xf32>
    %72 = arith.addf %67, %71 : vector<16x16xf32>
    %c0_57 = arith.constant 0 : index
    %c6 = arith.constant 6 : index
    %c0_58 = arith.constant 0 : index
    %c0_59 = arith.constant 0 : index
    %73 = vector.load %arg6[%c0_57, %c6, %c0_58, %c0_59] : memref<2x7x16x16xf32, #tpu.memory_space<vmem>>, vector<1x1x16x16xf32>
    %74 = vector.shape_cast %73 : vector<1x1x16x16xf32> to vector<16x16xf32>
    %cst_60 = arith.constant dense<0.000000e+00> : vector<22x16xf32>
    %75 = tpu.matmul %42, %74, %cst_60 {dimension_numbers = #tpu.dot_dimension_numbers<[1], [0], [0], [1], [0, 0, 1, 1], [], []>} : vector<22x16xf32>, vector<16x16xf32>, vector<22x16xf32> -> vector<22x16xf32>
    %76 = vector.extract_strided_slice %75 {offsets = [6, 0], sizes = [16, 16], strides = [1, 1]} : vector<22x16xf32> to vector<16x16xf32>
    %77 = arith.addf %72, %76 : vector<16x16xf32>
    %78 = tpu.concatenate %28, %37, %28 in 0 : vector<3x16xf32>, vector<16x16xf32>, vector<3x16xf32> -> vector<22x16xf32>
    %c1_61 = arith.constant 1 : index
    %c0_62 = arith.constant 0 : index
    %c0_63 = arith.constant 0 : index
    %c0_64 = arith.constant 0 : index
    %79 = vector.load %arg6[%c1_61, %c0_62, %c0_63, %c0_64] : memref<2x7x16x16xf32, #tpu.memory_space<vmem>>, vector<1x1x16x16xf32>
    %80 = vector.shape_cast %79 : vector<1x1x16x16xf32> to vector<16x16xf32>
    %cst_65 = arith.constant dense<0.000000e+00> : vector<22x16xf32>
    %81 = tpu.matmul %78, %80, %cst_65 {dimension_numbers = #tpu.dot_dimension_numbers<[1], [0], [0], [1], [0, 0, 1, 1], [], []>} : vector<22x16xf32>, vector<16x16xf32>, vector<22x16xf32> -> vector<22x16xf32>
    %82 = vector.extract_strided_slice %81 {offsets = [0, 0], sizes = [16, 16], strides = [1, 1]} : vector<22x16xf32> to vector<16x16xf32>
    %83 = arith.addf %77, %82 : vector<16x16xf32>
    %c1_66 = arith.constant 1 : index
    %c1_67 = arith.constant 1 : index
    %c0_68 = arith.constant 0 : index
    %c0_69 = arith.constant 0 : index
    %84 = vector.load %arg6[%c1_66, %c1_67, %c0_68, %c0_69] : memref<2x7x16x16xf32, #tpu.memory_space<vmem>>, vector<1x1x16x16xf32>
    %85 = vector.shape_cast %84 : vector<1x1x16x16xf32> to vector<16x16xf32>
    %cst_70 = arith.constant dense<0.000000e+00> : vector<22x16xf32>
    %86 = tpu.matmul %78, %85, %cst_70 {dimension_numbers = #tpu.dot_dimension_numbers<[1], [0], [0], [1], [0, 0, 1, 1], [], []>} : vector<22x16xf32>, vector<16x16xf32>, vector<22x16xf32> -> vector<22x16xf32>
    %87 = vector.extract_strided_slice %86 {offsets = [1, 0], sizes = [16, 16], strides = [1, 1]} : vector<22x16xf32> to vector<16x16xf32>
    %88 = arith.addf %83, %87 : vector<16x16xf32>
    %c1_71 = arith.constant 1 : index
    %c2_72 = arith.constant 2 : index
    %c0_73 = arith.constant 0 : index
    %c0_74 = arith.constant 0 : index
    %89 = vector.load %arg6[%c1_71, %c2_72, %c0_73, %c0_74] : memref<2x7x16x16xf32, #tpu.memory_space<vmem>>, vector<1x1x16x16xf32>
    %90 = vector.shape_cast %89 : vector<1x1x16x16xf32> to vector<16x16xf32>
    %cst_75 = arith.constant dense<0.000000e+00> : vector<22x16xf32>
    %91 = tpu.matmul %78, %90, %cst_75 {dimension_numbers = #tpu.dot_dimension_numbers<[1], [0], [0], [1], [0, 0, 1, 1], [], []>} : vector<22x16xf32>, vector<16x16xf32>, vector<22x16xf32> -> vector<22x16xf32>
    %92 = vector.extract_strided_slice %91 {offsets = [2, 0], sizes = [16, 16], strides = [1, 1]} : vector<22x16xf32> to vector<16x16xf32>
    %93 = arith.addf %88, %92 : vector<16x16xf32>
    %c1_76 = arith.constant 1 : index
    %c3_77 = arith.constant 3 : index
    %c0_78 = arith.constant 0 : index
    %c0_79 = arith.constant 0 : index
    %94 = vector.load %arg6[%c1_76, %c3_77, %c0_78, %c0_79] : memref<2x7x16x16xf32, #tpu.memory_space<vmem>>, vector<1x1x16x16xf32>
    %95 = vector.shape_cast %94 : vector<1x1x16x16xf32> to vector<16x16xf32>
    %cst_80 = arith.constant dense<0.000000e+00> : vector<22x16xf32>
    %96 = tpu.matmul %78, %95, %cst_80 {dimension_numbers = #tpu.dot_dimension_numbers<[1], [0], [0], [1], [0, 0, 1, 1], [], []>} : vector<22x16xf32>, vector<16x16xf32>, vector<22x16xf32> -> vector<22x16xf32>
    %97 = vector.extract_strided_slice %96 {offsets = [3, 0], sizes = [16, 16], strides = [1, 1]} : vector<22x16xf32> to vector<16x16xf32>
    %98 = arith.addf %93, %97 : vector<16x16xf32>
    %c1_81 = arith.constant 1 : index
    %c4_82 = arith.constant 4 : index
    %c0_83 = arith.constant 0 : index
    %c0_84 = arith.constant 0 : index
    %99 = vector.load %arg6[%c1_81, %c4_82, %c0_83, %c0_84] : memref<2x7x16x16xf32, #tpu.memory_space<vmem>>, vector<1x1x16x16xf32>
    %100 = vector.shape_cast %99 : vector<1x1x16x16xf32> to vector<16x16xf32>
    %cst_85 = arith.constant dense<0.000000e+00> : vector<22x16xf32>
    %101 = tpu.matmul %78, %100, %cst_85 {dimension_numbers = #tpu.dot_dimension_numbers<[1], [0], [0], [1], [0, 0, 1, 1], [], []>} : vector<22x16xf32>, vector<16x16xf32>, vector<22x16xf32> -> vector<22x16xf32>
    %102 = vector.extract_strided_slice %101 {offsets = [4, 0], sizes = [16, 16], strides = [1, 1]} : vector<22x16xf32> to vector<16x16xf32>
    %103 = arith.addf %98, %102 : vector<16x16xf32>
    %c1_86 = arith.constant 1 : index
    %c5_87 = arith.constant 5 : index
    %c0_88 = arith.constant 0 : index
    %c0_89 = arith.constant 0 : index
    %104 = vector.load %arg6[%c1_86, %c5_87, %c0_88, %c0_89] : memref<2x7x16x16xf32, #tpu.memory_space<vmem>>, vector<1x1x16x16xf32>
    %105 = vector.shape_cast %104 : vector<1x1x16x16xf32> to vector<16x16xf32>
    %cst_90 = arith.constant dense<0.000000e+00> : vector<22x16xf32>
    %106 = tpu.matmul %78, %105, %cst_90 {dimension_numbers = #tpu.dot_dimension_numbers<[1], [0], [0], [1], [0, 0, 1, 1], [], []>} : vector<22x16xf32>, vector<16x16xf32>, vector<22x16xf32> -> vector<22x16xf32>
    %107 = vector.extract_strided_slice %106 {offsets = [5, 0], sizes = [16, 16], strides = [1, 1]} : vector<22x16xf32> to vector<16x16xf32>
    %108 = arith.addf %103, %107 : vector<16x16xf32>
    %c1_91 = arith.constant 1 : index
    %c6_92 = arith.constant 6 : index
    %c0_93 = arith.constant 0 : index
    %c0_94 = arith.constant 0 : index
    %109 = vector.load %arg6[%c1_91, %c6_92, %c0_93, %c0_94] : memref<2x7x16x16xf32, #tpu.memory_space<vmem>>, vector<1x1x16x16xf32>
    %110 = vector.shape_cast %109 : vector<1x1x16x16xf32> to vector<16x16xf32>
    %cst_95 = arith.constant dense<0.000000e+00> : vector<22x16xf32>
    %111 = tpu.matmul %78, %110, %cst_95 {dimension_numbers = #tpu.dot_dimension_numbers<[1], [0], [0], [1], [0, 0, 1, 1], [], []>} : vector<22x16xf32>, vector<16x16xf32>, vector<22x16xf32> -> vector<22x16xf32>
    %112 = vector.extract_strided_slice %111 {offsets = [6, 0], sizes = [16, 16], strides = [1, 1]} : vector<22x16xf32> to vector<16x16xf32>
    %113 = arith.addf %108, %112 : vector<16x16xf32>
    %114 = arith.negf %113 : vector<16x16xf32>
    %115 = math.exp %114 : vector<16x16xf32>
    %cst_96 = arith.constant 1.000000e+00 : f32
    %116 = vector.broadcast %cst_96 : f32 to vector<16x16xf32>
    %117 = arith.addf %116, %115 : vector<16x16xf32>
    %118 = arith.divf %116, %117 : vector<16x16xf32>
    %c0_97 = arith.constant 0 : index
    %c0_98 = arith.constant 0 : index
    %c0_99 = arith.constant 0 : index
    %c0_100 = arith.constant 0 : index
    %119 = vector.load %arg7[%c0_97, %c0_98, %c0_99, %c0_100] : memref<1x16x16x32xf32, #tpu.memory_space<vmem>>, vector<1x16x16x32xf32>
    %120 = vector.shape_cast %119 : vector<1x16x16x32xf32> to vector<16x16x32xf32>
    %121 = vector.shape_cast %118 : vector<16x16xf32> to vector<16x16x1xf32>
    %122 = vector.broadcast %121 : vector<16x16x1xf32> to vector<16x16x32xf32>
    %123 = arith.mulf %120, %122 : vector<16x16x32xf32>
    %c0_101 = arith.constant 0 : index
    %c0_102 = arith.constant 0 : index
    %c0_103 = arith.constant 0 : index
    %c0_104 = arith.constant 0 : index
    %124 = vector.load %arg7[%c0_101, %c0_102, %c0_103, %c0_104] : memref<1x16x16x32xf32, #tpu.memory_space<vmem>>, vector<1x16x16x32xf32>
    %125 = vector.shape_cast %124 : vector<1x16x16x32xf32> to vector<16x16x32xf32>
    %126 = vector.shape_cast %123 : vector<16x16x32xf32> to vector<1x16x16x32xf32>
    tpu.vector_store %arg7[%c0_101, %c0_102, %c0_103, %c0_104], %126 {strides = array<i32>} : memref<1x16x16x32xf32, #tpu.memory_space<vmem>>, vector<1x16x16x32xf32>,
    return
  }
  func.func @transform_0(%arg0: i32) -> (i32, i32, i32, i32) {
    %c0_i32 = arith.constant 0 : i32
    %c0_i32_0 = arith.constant 0 : i32
    %c0_i32_1 = arith.constant 0 : i32
    %c0_i32_2 = arith.constant 0 : i32
    return %arg0, %c0_i32, %c0_i32_0, %c0_i32_1 : i32, i32, i32, i32
  }
  func.func @transform_1(%arg0: i32) -> (i32, i32) {
    %c0_i32 = arith.constant 0 : i32
    %c0_i32_0 = arith.constant 0 : i32
    %c0_i32_1 = arith.constant 0 : i32
    return %c0_i32, %c0_i32_0 : i32, i32
  }
  func.func @transform_2(%arg0: i32) -> (i32, i32) {
    %c0_i32 = arith.constant 0 : i32
    %c0_i32_0 = arith.constant 0 : i32
    %c0_i32_1 = arith.constant 0 : i32
    return %c0_i32, %c0_i32_0 : i32, i32
  }
  func.func @transform_3(%arg0: i32) -> (i32, i32) {
    %c0_i32 = arith.constant 0 : i32
    %c0_i32_0 = arith.constant 0 : i32
    %c0_i32_1 = arith.constant 0 : i32
    return %c0_i32, %c0_i32_0 : i32, i32
  }
  func.func @transform_4(%arg0: i32) -> (i32, i32) {
    %c0_i32 = arith.constant 0 : i32
    %c0_i32_0 = arith.constant 0 : i32
    %c0_i32_1 = arith.constant 0 : i32
    return %c0_i32, %c0_i32_0 : i32, i32
  }
  func.func @transform_5(%arg0: i32) -> (i32, i32, i32, i32) {
    %c0_i32 = arith.constant 0 : i32
    %c0_i32_0 = arith.constant 0 : i32
    %c0_i32_1 = arith.constant 0 : i32
    %c0_i32_2 = arith.constant 0 : i32
    %c0_i32_3 = arith.constant 0 : i32
    return %c0_i32, %c0_i32_0, %c0_i32_1, %c0_i32_2 : i32, i32, i32, i32
  }
  func.func @transform_6(%arg0: i32) -> (i32, i32, i32, i32) {
    %c0_i32 = arith.constant 0 : i32
    %c0_i32_0 = arith.constant 0 : i32
    %c0_i32_1 = arith.constant 0 : i32
    %c0_i32_2 = arith.constant 0 : i32
    return %arg0, %c0_i32, %c0_i32_0, %c0_i32_1 : i32, i32, i32, i32
  }
}

</mosaic_0001>

<llo_original>
// kernel: tpu_custom_call.1
$region0: #{tpu_custom_call.1}
  #allocation0 [shape = 'u32[]', space=smem, size = 0x4, offset = 0x4, fixed_abs, tag = 'smem constant byte address 0x4 - core index']
  #allocation1 [shape = 'u32[144,128]{1,0:T(1,128)}', space=vmem, size = 0x12000, scoped, tag = 'internal scratch']
  %s0 = inlined_call_operand.hbm [shape: f32[2,16,16,32], index: 0, kind: input, shape index: {}]
  %s1 = inlined_call_operand.vmem [shape: f32[32,2], index: 1, kind: input, shape index: {}]
  %s2 = inlined_call_operand.vmem [shape: f32[1,2], index: 2, kind: input, shape index: {}]
  %s3 = inlined_call_operand.vmem [shape: f32[2,32], index: 3, kind: input, shape index: {}]
  %s4 = inlined_call_operand.vmem [shape: f32[1,32], index: 4, kind: input, shape index: {}]
  %s5 = inlined_call_operand.hbm [shape: f32[2,7,16,16], index: 5, kind: input, shape index: {}]
  %s6 = inlined_call_operand.hbm [shape: f32[2,16,16,32], index: 6, kind: output, shape index: {}]
  %s7 = sld [smem:[#allocation0]]
  $region65: #{tpu_custom_call.1} parent=0
    _
  %s9 = ssub.s32 1, %s7
  %s10 = scalar_select 0, %s9, %s7
  $region1: #{tpu_custom_call.1} parent=0
    #allocation2 [shape = 'u8[262144]{0}', space=vmem, size = 0x40000, scoped, tag = 'input window, operand 0']
    #allocation3 [shape = 's32[2]{0}', space=sflag, size = 0x8, scoped, tag = 'scoped memory for tpu_custom_call.1']
    #allocation4 [shape = 's32[2]{0}', space=sflag, size = 0x8, scoped, tag = 'scoped memory for tpu_custom_call.1']
    #allocation5 [shape = 'u8[114688]{0}', space=vmem, size = 0x1c000, scoped, tag = 'input window, operand 5, single buffered']
    #allocation6 [shape = 's32[1]{0}', space=sflag, size = 0x4, scoped, tag = 'scoped memory for tpu_custom_call.1']
    #allocation7 [shape = 'u8[262144]{0}', space=vmem, size = 0x40000, scoped, tag = 'output window, operand 0']
    %11 = vsyncpa [#allocation3], 0
    %s12 = scalar_lea.sflag [#allocation3], 1
    %13 = vsyncpa %s12, 0
    %14 = vsyncpa [#allocation6], 0
    %15 = vsyncpa [#allocation4], 0
    %s16 = scalar_lea.sflag [#allocation4], 1
    %17 = vsyncpa %s16, 0
    loop: start=0, step=1, limit=4
    $region2: #{tpu_custom_call.1} parent=1 // loop_pre_header
      _
    $region3: #{tpu_custom_call.1} parent=1 // loop_header
      %s19 = sphi 0, %s23
      %p20 = scmp.ge.s32.totalorder %s19, 4
      %s29 = sphi 0, %s31
      %s32 = sphi 0, %s29
      %s33 = sphi 0, %s32
      %s49 = sphi 0, %s33
      %s53 = sphi 0, %s53
      %s55 = sphi 0, %s53
      %s56 = sphi 0, %s55
      %s70 = sphi 0, %s56
      %s74 = sphi 0, %s74
      %s76 = sphi 0, %s74
      %s77 = sphi 0, %s76
      %s91 = sphi 0, %s77
      %s95 = sphi 0, %s95
      %s97 = sphi 0, %s95
      %s98 = sphi 0, %s97
      %s112 = sphi 0, %s98
      %s116 = sphi 0, %s116
      %s118 = sphi 0, %s116
      %s119 = sphi 0, %s118
      %s133 = sphi 0, %s119
      %s137 = sphi 0, %s137
      %s139 = sphi 0, %s137
      %s140 = sphi 0, %s139
      %s154 = sphi 0, %s140
      %s160 = sphi 0, %s162
      %s163 = sphi 0, %s160
      %s164 = sphi 0, %s163
      %s180 = sphi 0, %s164
    $region4: #{tpu_custom_call.1} parent=1 // loop_header_branch
      %22 = sbr.rel (%p20) target = $region8
    $region5: #{tpu_custom_call.1} parent=1 // loop_body
      %s24 = ssub.s32 %s19, 1
      %s25 = ssub.s32 %s19, 2
      %s26 = sadd.s32 %s19, 1
      %s27 = ssub.s32 %s19, %s26
      %p28 = scmp.eq.s32.totalorder %s27, 0
      %s30 = sadd.s32 %s29, 1
      %s31 = scalar_select %p28, %s29, %s30
      %p34 = pneg %p28
      %p35 = scmp.eq.s32.totalorder %s19, 1
      %p36 = por %p34, %p35
      %p37 = scmp.ne.s32.totalorder %s29, %s32
      %p38 = scmp.eq.s32.totalorder %s19, 0
      %p39 = por %p37, %p38
      %p40 = scmp.ne.s32.totalorder %s29, %s32
      %p41 = scmp.eq.s32.totalorder %s24, 1
      %p42 = por %p40, %p41
      %p43 = scmp.ne.s32.totalorder %s32, %s33
      %p44 = scmp.eq.s32.totalorder %s24, 0
      %p45 = por %p43, %p44
      %p46 = scmp.ne.s32.totalorder %s32, %s33
      %p47 = scmp.eq.s32.totalorder %s25, 1
      %p48 = por %p46, %p47
      %p50 = scmp.ne.s32.totalorder %s33, %s49
      %p51 = scmp.eq.s32.totalorder %s25, 0
      %p52 = por %p50, %p51
      %s54 = sadd.s32 %s53, 1
      %p57 = scmp.eq.s32.totalorder %s19, 1
      %p58 = scmp.ne.s32.totalorder %s53, %s55
      %p59 = scmp.eq.s32.totalorder %s19, 0
      %p60 = por %p58, %p59
      %p61 = scmp.ne.s32.totalorder %s53, %s55
      %p62 = scmp.eq.s32.totalorder %s24, 1
      %p63 = por %p61, %p62
      %p64 = scmp.ne.s32.totalorder %s55, %s56
      %p65 = scmp.eq.s32.totalorder %s24, 0
      %p66 = por %p64, %p65
      %p67 = scmp.ne.s32.totalorder %s55, %s56
      %p68 = scmp.eq.s32.totalorder %s25, 1
      %p69 = por %p67, %p68
      %p71 = scmp.ne.s32.totalorder %s56, %s70
      %p72 = scmp.eq.s32.totalorder %s25, 0
      %p73 = por %p71, %p72
      %s75 = sadd.s32 %s74, 1
      %p78 = scmp.eq.s32.totalorder %s19, 1
      %p79 = scmp.ne.s32.totalorder %s74, %s76
      %p80 = scmp.eq.s32.totalorder %s19, 0
      %p81 = por %p79, %p80
      %p82 = scmp.ne.s32.totalorder %s74, %s76
      %p83 = scmp.eq.s32.totalorder %s24, 1
      %p84 = por %p82, %p83
      %p85 = scmp.ne.s32.totalorder %s76, %s77
      %p86 = scmp.eq.s32.totalorder %s24, 0
      %p87 = por %p85, %p86
      %p88 = scmp.ne.s32.totalorder %s76, %s77
      %p89 = scmp.eq.s32.totalorder %s25, 1
      %p90 = por %p88, %p89
      %p92 = scmp.ne.s32.totalorder %s77, %s91
      %p93 = scmp.eq.s32.totalorder %s25, 0
      %p94 = por %p92, %p93
      %s96 = sadd.s32 %s95, 1
      %p99 = scmp.eq.s32.totalorder %s19, 1
      %p100 = scmp.ne.s32.totalorder %s95, %s97
      %p101 = scmp.eq.s32.totalorder %s19, 0
      %p102 = por %p100, %p101
      %p103 = scmp.ne.s32.totalorder %s95, %s97
      %p104 = scmp.eq.s32.totalorder %s24, 1
      %p105 = por %p103, %p104
      %p106 = scmp.ne.s32.totalorder %s97, %s98
      %p107 = scmp.eq.s32.totalorder %s24, 0
      %p108 = por %p106, %p107
      %p109 = scmp.ne.s32.totalorder %s97, %s98
      %p110 = scmp.eq.s32.totalorder %s25, 1
      %p111 = por %p109, %p110
      %p113 = scmp.ne.s32.totalorder %s98, %s112
      %p114 = scmp.eq.s32.totalorder %s25, 0
      %p115 = por %p113, %p114
      %s117 = sadd.s32 %s116, 1
      %p120 = scmp.eq.s32.totalorder %s19, 1
      %p121 = scmp.ne.s32.totalorder %s116, %s118
      %p122 = scmp.eq.s32.totalorder %s19, 0
      %p123 = por %p121, %p122
      %p124 = scmp.ne.s32.totalorder %s116, %s118
      %p125 = scmp.eq.s32.totalorder %s24, 1
      %p126 = por %p124, %p125
      %p127 = scmp.ne.s32.totalorder %s118, %s119
      %p128 = scmp.eq.s32.totalorder %s24, 0
      %p129 = por %p127, %p128
      %p130 = scmp.ne.s32.totalorder %s118, %s119
      %p131 = scmp.eq.s32.totalorder %s25, 1
      %p132 = por %p130, %p131
      %p134 = scmp.ne.s32.totalorder %s119, %s133
      %p135 = scmp.eq.s32.totalorder %s25, 0
      %p136 = por %p134, %p135
      %s138 = sadd.s32 %s137, 1
      %p141 = scmp.eq.s32.totalorder %s19, 1
      %p142 = scmp.ne.s32.totalorder %s137, %s139
      %p143 = scmp.eq.s32.totalorder %s19, 0
      %p144 = por %p142, %p143
      %p145 = scmp.ne.s32.totalorder %s137, %s139
      %p146 = scmp.eq.s32.totalorder %s24, 1
      %p147 = por %p145, %p146
      %p148 = scmp.ne.s32.totalorder %s139, %s140
      %p149 = scmp.eq.s32.totalorder %s24, 0
      %p150 = por %p148, %p149
      %p151 = scmp.ne.s32.totalorder %s139, %s140
      %p152 = scmp.eq.s32.totalorder %s25, 1
      %p153 = por %p151, %p152
      %p155 = scmp.ne.s32.totalorder %s140, %s154
      %p156 = scmp.eq.s32.totalorder %s25, 0
      %p157 = por %p155, %p156
      %s158 = ssub.s32 %s19, %s26
      %p159 = scmp.eq.s32.totalorder %s158, 0
      %s161 = sadd.s32 %s160, 1
      %s162 = scalar_select %p159, %s160, %s161
      %p165 = pneg %p159
      %p166 = scmp.eq.s32.totalorder %s19, 1
      %p167 = por %p165, %p166
      %p168 = scmp.ne.s32.totalorder %s160, %s163
      %p169 = scmp.eq.s32.totalorder %s19, 0
      %p170 = por %p168, %p169
      %p171 = scmp.ne.s32.totalorder %s160, %s163
      %p172 = scmp.eq.s32.totalorder %s24, 1
      %p173 = por %p171, %p172
      %p174 = scmp.ne.s32.totalorder %s163, %s164
      %p175 = scmp.eq.s32.totalorder %s24, 0
      %p176 = por %p174, %p175
      %p177 = scmp.ne.s32.totalorder %s163, %s164
      %p178 = scmp.eq.s32.totalorder %s25, 1
      %p179 = por %p177, %p178
      %p181 = scmp.ne.s32.totalorder %s164, %s180
      %p182 = scmp.eq.s32.totalorder %s25, 0
      %p183 = por %p181, %p182
      %p184 = scmp.le.s32.totalorder 1, %s19
      %p185 = scmp.lt.s32.totalorder %s19, 3
      %p186 = pnand %p184, %p185
      %p187 = pneg %p186
      // Predicated region
      $region9: #{tpu_custom_call.1} parent=5 // pred_check
        _
      $region10: #{tpu_custom_call.1} parent=5 // pred_check_branch
        %189 = sbr.rel (%p186) target = $region12
      $region11: #{tpu_custom_call.1} parent=5 // pred_region
        %s190 = ssub.s32 %s19, 1
        // Predicated region
        $region13: #{tpu_custom_call.1} parent=11 // pred_check
          %p191 = pneg %p66
        $region14: #{tpu_custom_call.1} parent=11 // pred_check_branch
          %193 = sbr.rel (%p191) target = $region16
        $region15: #{tpu_custom_call.1} parent=11 // pred_region
          _
        $region16: #{tpu_custom_call.1} parent=11 // pred_fallthru
          _
        // Predicated region
        $region17: #{tpu_custom_call.1} parent=11 // pred_check
          %p194 = pneg %p87
        $region18: #{tpu_custom_call.1} parent=11 // pred_check_branch
          %196 = sbr.rel (%p194) target = $region20
        $region19: #{tpu_custom_call.1} parent=11 // pred_region
          _
        $region20: #{tpu_custom_call.1} parent=11 // pred_fallthru
          _
        // Predicated region
        $region21: #{tpu_custom_call.1} parent=11 // pred_check
          %p197 = pneg %p108
        $region22: #{tpu_custom_call.1} parent=11 // pred_check_branch
          %199 = sbr.rel (%p197) target = $region24
        $region23: #{tpu_custom_call.1} parent=11 // pred_region
          _
        $region24: #{tpu_custom_call.1} parent=11 // pred_fallthru
          _
        // Predicated region
        $region25: #{tpu_custom_call.1} parent=11 // pred_check
          %p200 = pneg %p129
        $region26: #{tpu_custom_call.1} parent=11 // pred_check_branch
          %202 = sbr.rel (%p200) target = $region28
        $region27: #{tpu_custom_call.1} parent=11 // pred_region
          _
        $region28: #{tpu_custom_call.1} parent=11 // pred_fallthru
          _
        // Predicated region
        $region29: #{tpu_custom_call.1} parent=11 // pred_check
          %p203 = pneg %p150
        $region30: #{tpu_custom_call.1} parent=11 // pred_check_branch
          %205 = sbr.rel (%p203) target = $region32
        $region31: #{tpu_custom_call.1} parent=11 // pred_region
          %s207 = ssub.s32 3584, 3584
          %208 = vsyncadd [#allocation6], %s207
          %s209 = sshll.u32 [#allocation5], 4
          %s210 = int_to_ptr.vmem [resolvable:$true] %s209
          %215 = dma.hbm_to_vmem [thread:$0]  %s5, 3584, %s210, [#allocation6], 128, 128, 8
        $region32: #{tpu_custom_call.1} parent=11 // pred_fallthru
          _
      $region12: #{tpu_custom_call.1} parent=5 // pred_fallthru
        _
      %p216 = scmp.lt.s32.totalorder %s19, 2
      // Predicated region
      $region33: #{tpu_custom_call.1} parent=5 // pred_check
        %p217 = pneg %p216
      $region34: #{tpu_custom_call.1} parent=5 // pred_check_branch
        %219 = sbr.rel (%p217) target = $region36
      $region35: #{tpu_custom_call.1} parent=5 // pred_region
        // Predicated region
        $region37: #{tpu_custom_call.1} parent=35 // pred_check
          %p220 = pneg %p39
        $region38: #{tpu_custom_call.1} parent=35 // pred_check_branch
          %222 = sbr.rel (%p220) target = $region40
        $region39: #{tpu_custom_call.1} parent=35 // pred_region
          %s223 = sand.u32 %s29, 1
          %s224 = scalar_lea.sflag [#allocation3], %s223
          %s225 = sand.u32 %s29, 1
          %s226 = smul.addr %s225, 256
          %s227 = scalar_lea.vmem [#allocation2], %s226
          %s229 = ssub.s32 4096, 4096
          %230 = vsyncadd %s224, %s229
          %s231 = smul.addr %s19, 32
          %s232 = smul.addr %s231, 128
          %s233 = scalar_lea.hbm %s0, %s232
          %s234 = sshll.u32 %s227, 4
          %s235 = int_to_ptr.vmem [resolvable:$true] %s234
          %240 = dma.hbm_to_vmem [thread:$0]  %s233, 4096, %s235, %s224, 128, 128, 8
        $region40: #{tpu_custom_call.1} parent=35 // pred_fallthru
          _
      $region36: #{tpu_custom_call.1} parent=5 // pred_fallthru
        _
      %p241 = scmp.le.s32.totalorder 1, %s19
      %p242 = scmp.lt.s32.totalorder %s19, 3
      %p243 = pnand %p241, %p242
      %p244 = pneg %p243
      // Predicated region
      $region41: #{tpu_custom_call.1} parent=5 // pred_check
        _
      $region42: #{tpu_custom_call.1} parent=5 // pred_check_branch
        %246 = sbr.rel (%p243) target = $region44
      $region43: #{tpu_custom_call.1} parent=5 // pred_region
        %s247 = ssub.s32 %s19, 1
        %s248 = sand.u32 %s32, 1
        %s249 = scalar_lea.sflag [#allocation3], %s248
        %s250 = sand.u32 %s32, 1
        %s251 = smul.addr %s250, 256
        %s252 = scalar_lea.vmem [#allocation2], %s251
        // Predicated region
        $region45: #{tpu_custom_call.1} parent=43 // pred_check
          %p253 = pneg %p45
        $region46: #{tpu_custom_call.1} parent=43 // pred_check_branch
          %255 = sbr.rel (%p253) target = $region48
        $region47: #{tpu_custom_call.1} parent=43 // pred_region
          %256 = dma.done %s249, 4096
        $region48: #{tpu_custom_call.1} parent=43 // pred_fallthru
          _
        // Predicated region
        $region49: #{tpu_custom_call.1} parent=43 // pred_check
          %p257 = pneg %p150
        $region50: #{tpu_custom_call.1} parent=43 // pred_check_branch
          %259 = sbr.rel (%p257) target = $region52
        $region51: #{tpu_custom_call.1} parent=43 // pred_region
          %260 = dma.done [#allocation6], 3584
        $region52: #{tpu_custom_call.1} parent=43 // pred_fallthru
          _
        %s261 = sand.u32 %s32, 1
        %s262 = scalar_lea.sflag [#allocation3], %s261
        %s263 = sand.u32 %s32, 1
        %s264 = smul.addr %s263, 256
        %s265 = scalar_lea.vmem [#allocation2], %s264
        %p266 = pneg %p45
        %p267 = pneg %p42
        %p268 = pneg %p66
        %p269 = pneg %p63
        %p270 = pneg %p87
        %p271 = pneg %p84
        %p272 = pneg %p108
        %p273 = pneg %p105
        %p274 = pneg %p129
        %p275 = pneg %p126
        %p276 = pneg %p150
        %p277 = pneg %p147
        %p278 = pneg %p176
        %p279 = pneg %p173
        %s280 = sand.u32 %s163, 1
        %s281 = scalar_lea.sflag [#allocation4], %s280
        %s282 = sand.u32 %s163, 1
        %s283 = smul.addr %s282, 256
        %s284 = scalar_lea.vmem [#allocation7], %s283
        %v285 = vld [vmem:[%s252] sm:$0xff]
        %v286 = vld [vmem:[%s252 + $0x8] sm:$0xff]
        %v287 = vld [vmem:[%s252 + $0x10] sm:$0xff]
        %v288 = vld [vmem:[%s252 + $0x18] sm:$0xff]
        %v289 = vld [vmem:[%s252 + $0x20] sm:$0xff]
        %v290 = vld [vmem:[%s252 + $0x28] sm:$0xff]
        %v291 = vld [vmem:[%s252 + $0x30] sm:$0xff]
        %v292 = vld [vmem:[%s252 + $0x38] sm:$0xff]
        %v293 = vld [vmem:[%s252 + $0x40] sm:$0xff]
        %v294 = vld [vmem:[%s252 + $0x48] sm:$0xff]
        %v295 = vld [vmem:[%s252 + $0x50] sm:$0xff]
        %v296 = vld [vmem:[%s252 + $0x58] sm:$0xff]
        %v297 = vld [vmem:[%s252 + $0x60] sm:$0xff]
        %v298 = vld [vmem:[%s252 + $0x68] sm:$0xff]
        %v299 = vld [vmem:[%s252 + $0x70] sm:$0xff]
        %v300 = vld [vmem:[%s252 + $0x78] sm:$0xff]
        %v301 = vld [vmem:[%s252 + $0x80] sm:$0xff]
        %v302 = vld [vmem:[%s252 + $0x88] sm:$0xff]
        %v303 = vld [vmem:[%s252 + $0x90] sm:$0xff]
        %v304 = vld [vmem:[%s252 + $0x98] sm:$0xff]
        %v305 = vld [vmem:[%s252 + $0xa0] sm:$0xff]
        %v306 = vld [vmem:[%s252 + $0xa8] sm:$0xff]
        %v307 = vld [vmem:[%s252 + $0xb0] sm:$0xff]
        %v308 = vld [vmem:[%s252 + $0xb8] sm:$0xff]
        %v309 = vld [vmem:[%s252 + $0xc0] sm:$0xff]
        %v310 = vld [vmem:[%s252 + $0xc8] sm:$0xff]
        %v311 = vld [vmem:[%s252 + $0xd0] sm:$0xff]
        %v312 = vld [vmem:[%s252 + $0xd8] sm:$0xff]
        %v313 = vld [vmem:[%s252 + $0xe0] sm:$0xff]
        %v314 = vld [vmem:[%s252 + $0xe8] sm:$0xff]
        %v315 = vld [vmem:[%s252 + $0xf0] sm:$0xff]
        %v316 = vld [vmem:[%s252 + $0xf8] sm:$0xff]
        %vm317 = vcmask 261120
        %v318 = vsel %vm317, %v285, 0.0
        %v319 = vsel %vm317, %v287, 0.0
        %v320 = vadd.f32 %v318, %v319
        %v321 = vsel %vm317, %v289, 0.0
        %v322 = vadd.f32 %v320, %v321
        %v323 = vsel %vm317, %v291, 0.0
        %v324 = vadd.f32 %v322, %v323
        %v325 = vsel %vm317, %v293, 0.0
        %v326 = vadd.f32 %v324, %v325
        %v327 = vsel %vm317, %v295, 0.0
        %v328 = vadd.f32 %v326, %v327
        %v329 = vsel %vm317, %v297, 0.0
        %v330 = vadd.f32 %v328, %v329
        %v331 = vsel %vm317, %v299, 0.0
        %v332 = vadd.f32 %v330, %v331
        %v333 = vsel %vm317, %v301, 0.0
        %v334 = vadd.f32 %v332, %v333
        %v335 = vsel %vm317, %v303, 0.0
        %v336 = vadd.f32 %v334, %v335
        %v337 = vsel %vm317, %v305, 0.0
        %v338 = vadd.f32 %v336, %v337
        %v339 = vsel %vm317, %v307, 0.0
        %v340 = vadd.f32 %v338, %v339
        %v341 = vsel %vm317, %v309, 0.0
        %v342 = vadd.f32 %v340, %v341
        %v343 = vsel %vm317, %v311, 0.0
        %v344 = vadd.f32 %v342, %v343
        %v345 = vsel %vm317, %v313, 0.0
        %v346 = vadd.f32 %v344, %v345
        %v347 = vsel %vm317, %v315, 0.0
        %v348 = vadd.f32 %v346, %v347
        %v349 = vsel %vm317, %v286, 0.0
        %v350 = vsel %vm317, %v288, 0.0
        %v351 = vadd.f32 %v349, %v350
        %v352 = vsel %vm317, %v290, 0.0
        %v353 = vadd.f32 %v351, %v352
        %v354 = vsel %vm317, %v292, 0.0
        %v355 = vadd.f32 %v353, %v354
        %v356 = vsel %vm317, %v294, 0.0
        %v357 = vadd.f32 %v355, %v356
        %v358 = vsel %vm317, %v296, 0.0
        %v359 = vadd.f32 %v357, %v358
        %v360 = vsel %vm317, %v298, 0.0
        %v361 = vadd.f32 %v359, %v360
        %v362 = vsel %vm317, %v300, 0.0
        %v363 = vadd.f32 %v361, %v362
        %v364 = vsel %vm317, %v302, 0.0
        %v365 = vadd.f32 %v363, %v364
        %v366 = vsel %vm317, %v304, 0.0
        %v367 = vadd.f32 %v365, %v366
        %v368 = vsel %vm317, %v306, 0.0
        %v369 = vadd.f32 %v367, %v368
        %v370 = vsel %vm317, %v308, 0.0
        %v371 = vadd.f32 %v369, %v370
        %v372 = vsel %vm317, %v310, 0.0
        %v373 = vadd.f32 %v371, %v372
        %v374 = vsel %vm317, %v312, 0.0
        %v375 = vadd.f32 %v373, %v374
        %v376 = vsel %vm317, %v314, 0.0
        %v377 = vadd.f32 %v375, %v376
        %v378 = vsel %vm317, %v316, 0.0
        %v379 = vadd.f32 %v377, %v378
        %v380 = vsel %vm317, %v285, -inf
        %v381 = vsel %vm317, %v287, -inf
        %v382 = vsel %vm317, %v289, -inf
        %v383 = vmax.f32 %v380, %v382
        %v384 = vsel %vm317, %v291, -inf
        %v385 = vmax.f32 %v381, %v384
        %v386 = vsel %vm317, %v293, -inf
        %v387 = vmax.f32 %v383, %v386
        %v388 = vsel %vm317, %v295, -inf
        %v389 = vmax.f32 %v385, %v388
        %v390 = vsel %vm317, %v297, -inf
        %v391 = vmax.f32 %v387, %v390
        %v392 = vsel %vm317, %v299, -inf
        %v393 = vmax.f32 %v389, %v392
        %v394 = vsel %vm317, %v301, -inf
        %v395 = vmax.f32 %v391, %v394
        %v396 = vsel %vm317, %v303, -inf
        %v397 = vmax.f32 %v393, %v396
        %v398 = vsel %vm317, %v305, -inf
        %v399 = vmax.f32 %v395, %v398
        %v400 = vsel %vm317, %v307, -inf
        %v401 = vmax.f32 %v397, %v400
        %v402 = vsel %vm317, %v309, -inf
        %v403 = vmax.f32 %v399, %v402
        %v404 = vsel %vm317, %v311, -inf
        %v405 = vmax.f32 %v401, %v404
        %v406 = vsel %vm317, %v313, -inf
        %v407 = vmax.f32 %v403, %v406
        %v408 = vsel %vm317, %v315, -inf
        %v409 = vmax.f32 %v405, %v408
        %v410 = vmax.f32 %v407, %v409
        %v411 = vsel %vm317, %v286, -inf
        %v412 = vsel %vm317, %v288, -inf
        %v413 = vsel %vm317, %v290, -inf
        %v414 = vmax.f32 %v411, %v413
        %v415 = vsel %vm317, %v292, -inf
        %v416 = vmax.f32 %v412, %v415
        %v417 = vsel %vm317, %v294, -inf
        %v418 = vmax.f32 %v414, %v417
        %v419 = vsel %vm317, %v296, -inf
        %v420 = vmax.f32 %v416, %v419
        %v421 = vsel %vm317, %v298, -inf
        %v422 = vmax.f32 %v418, %v421
        %v423 = vsel %vm317, %v300, -inf
        %v424 = vmax.f32 %v420, %v423
        %v425 = vsel %vm317, %v302, -inf
        %v426 = vmax.f32 %v422, %v425
        %v427 = vsel %vm317, %v304, -inf
        %v428 = vmax.f32 %v424, %v427
        %v429 = vsel %vm317, %v306, -inf
        %v430 = vmax.f32 %v426, %v429
        %v431 = vsel %vm317, %v308, -inf
        %v432 = vmax.f32 %v428, %v431
        %v433 = vsel %vm317, %v310, -inf
        %v434 = vmax.f32 %v430, %v433
        %v435 = vsel %vm317, %v312, -inf
        %v436 = vmax.f32 %v432, %v435
        %v437 = vsel %vm317, %v314, -inf
        %v438 = vmax.f32 %v434, %v437
        %v439 = vsel %vm317, %v316, -inf
        %v440 = vmax.f32 %v436, %v439
        %v441 = vmax.f32 %v438, %v440
        %v442 = vsel %vm317, %v348, 0.0
        %v443 = vsel %vm317, %v379, 0.0
        %v444 = vadd.f32 %v442, %v443
        %v445 = vrot.slane %v444, 4
        %v446 = vadd.f32 %v444, %v445
        %v447 = vrot.slane %v446, 2
        %v448 = vadd.f32 %v446, %v447
        %v449 = vrot.slane %v448, 1
        %v450 = vadd.f32 %v448, %v449
        %v451 = vmul.f32 %v450, 0.00390625
        %v452 = vsel %vm317, %v410, -inf
        %v453 = vsel %vm317, %v441, -inf
        %v454 = vmax.f32 %v452, %v453
        %v455 = vrot.slane %v454, 4
        %v456 = vmax.f32 %v454, %v455
        %v457 = vrot.slane %v456, 2
        %v458 = vmax.f32 %v456, %v457
        %v459 = vrot.slane %v458, 1
        %v460 = vmax.f32 %v458, %v459
        %vm461 = vcmask 1040384
        %v462 = vsel %vm461, %v451, %v460
        %v463 = vld [vmem:[%s1] sm:$0xff]
        %v464 = vld [vmem:[%s1 + $0x8] sm:$0xff]
        %v465 = vld [vmem:[%s1 + $0x10] sm:$0xff]
        %v466 = vld [vmem:[%s1 + $0x18] sm:$0xff]
        %v467 = vld [vmem:[%s2] sm:$0x1]
        %v469 = vlaneseq
        %v470 = vshrl.u32 %v469, 7
        %v471 = vsub.s32 0, %v470
        %v472 = vrot.slane %v467, %v471
        %v475 = vsel %vm317, %v462, 0
        %477 = vmatprep.subr.mxu0 0.0
        %478 = vmatpush1.msra.mxu0 %v463
        %479 = vmatprep.subr.mxu0 0.0
        %480 = vmatpush1.msra.mxu0 %v464
        %481 = vmatprep.subr.mxu0 0.0
        %482 = vmatpush1.msra.mxu0 %v465
        %483 = vmatprep.subr.mxu0 0.0
        %484 = vmatpush1.msra.mxu0 %v466
        %485 = vmatprep.subr.mxu0 0.0
        %486 = vmatpush1.msra.mxu0 0.0
        %487 = vmatprep.subr.mxu0 0.0
        %488 = vmatpush1.msra.mxu0 0.0
        %489 = vmatprep.subr.mxu0 0.0
        %490 = vmatpush1.msra.mxu0 0.0
        %491 = vmatprep.subr.mxu0 0.0
        %492 = vmatpush1.msra.mxu0 0.0
        %493 = vmatprep.subr.mxu0 0.0
        %494 = vmatpush1.msra.mxu0 0.0
        %495 = vmatprep.subr.mxu0 0.0
        %496 = vmatpush1.msra.mxu0 0.0
        %497 = vmatprep.subr.mxu0 0.0
        %498 = vmatpush1.msra.mxu0 0.0
        %499 = vmatprep.subr.mxu0 0.0
        %500 = vmatpush1.msra.mxu0 0.0
        %501 = vmatprep.subr.mxu0 0.0
        %502 = vmatpush1.msra.mxu0 0.0
        %503 = vmatprep.subr.mxu0 0.0
        %504 = vmatpush1.msra.mxu0 0.0
        %505 = vmatprep.subr.mxu0 0.0
        %506 = vmatpush1.msra.mxu0 0.0
        %507 = vmatprep.subr.mxu0 0.0
        %508 = vmatpush1.msra.mxu0 0.0
        %509 = vmatprep.subr.mxu0 0.0
        %510 = vmatpush1.msra.mxu0 0.0
        %511 = vmatprep.subr.mxu0 0.0
        %512 = vmatpush1.msra.mxu0 0.0
        %513 = vmatprep.subr.mxu0 0.0
        %514 = vmatpush1.msra.mxu0 0.0
        %515 = vmatprep.subr.mxu0 0.0
        %516 = vmatpush1.msra.mxu0 0.0
        %517 = vmatprep.subr.mxu0 0.0
        %518 = vmatpush1.msra.mxu0 0.0
        %519 = vmatprep.subr.mxu0 0.0
        %520 = vmatpush1.msra.mxu0 0.0
        %521 = vmatprep.subr.mxu0 0.0
        %522 = vmatpush1.msra.mxu0 0.0
        %523 = vmatprep.subr.mxu0 0.0
        %524 = vmatpush1.msra.mxu0 0.0
        %525 = vmatprep.subr.mxu0 0.0
        %526 = vmatpush1.msra.mxu0 0.0
        %527 = vmatprep.subr.mxu0 0.0
        %528 = vmatpush1.msra.mxu0 0.0
        %529 = vmatprep.subr.mxu0 0.0
        %530 = vmatpush1.msra.mxu0 0.0
        %531 = vmatprep.subr.mxu0 0.0
        %532 = vmatpush1.msra.mxu0 0.0
        %533 = vmatprep.subr.mxu0 0.0
        %534 = vmatpush1.msra.mxu0 0.0
        %535 = vmatprep.subr.mxu0 0.0
        %536 = vmatpush1.msra.mxu0 0.0
        %537 = vmatprep.subr.mxu0 0.0
        %538 = vmatpush1.msra.mxu0 0.0
        %539 = vmatprep.subr.mxu0 0.0
        %540 = vmatpush1.msra.mxu0 0.0
        %541 = vmatprep.mubr.f32.mxu0 0.0
        %542 = vmatmul.mubr.f32.gmra.mrb[0].mxu0 %v475
        %v543 = vpop.f32.mrb[0].mxu0
        %v544 = vadd.f32 %v472, %v543
        %v545 = vpop.f32.mrb[0].mxu0
        %546 = vdwg.mxu0
        %v547 = vmax.f32 %v544, 0.0
        %v548 = vld [vmem:[%s3] sm:$0x3]
        %v549 = vld [vmem:[%s4] sm:$0x1]
        %v551 = vlaneseq
        %v552 = vshrl.u32 %v551, 7
        %v553 = vsub.s32 0, %v552
        %v554 = vrot.slane %v549, %v553
        %vm556 = vcmask 15360
        %v558 = vsel %vm556, %v547, 0
        %vm560 = vcmask 1041408
        %v562 = vsel %vm560, %v548, 0
        %564 = vmatprep.subr.mxu0 0.0
        %565 = vmatpush1.msra.mxu0 %v562
        %566 = vmatprep.subr.mxu0 0.0
        %567 = vmatpush1.msra.mxu0 0.0
        %568 = vmatprep.subr.mxu0 0.0
        %569 = vmatpush1.msra.mxu0 0.0
        %570 = vmatprep.subr.mxu0 0.0
        %571 = vmatpush1.msra.mxu0 0.0
        %572 = vmatprep.subr.mxu0 0.0
        %573 = vmatpush1.msra.mxu0 0.0
        %574 = vmatprep.subr.mxu0 0.0
        %575 = vmatpush1.msra.mxu0 0.0
        %576 = vmatprep.subr.mxu0 0.0
        %577 = vmatpush1.msra.mxu0 0.0
        %578 = vmatprep.subr.mxu0 0.0
        %579 = vmatpush1.msra.mxu0 0.0
        %580 = vmatprep.subr.mxu0 0.0
        %581 = vmatpush1.msra.mxu0 0.0
        %582 = vmatprep.subr.mxu0 0.0
        %583 = vmatpush1.msra.mxu0 0.0
        %584 = vmatprep.subr.mxu0 0.0
        %585 = vmatpush1.msra.mxu0 0.0
        %586 = vmatprep.subr.mxu0 0.0
        %587 = vmatpush1.msra.mxu0 0.0
        %588 = vmatprep.subr.mxu0 0.0
        %589 = vmatpush1.msra.mxu0 0.0
        %590 = vmatprep.subr.mxu0 0.0
        %591 = vmatpush1.msra.mxu0 0.0
        %592 = vmatprep.subr.mxu0 0.0
        %593 = vmatpush1.msra.mxu0 0.0
        %594 = vmatprep.subr.mxu0 0.0
        %595 = vmatpush1.msra.mxu0 0.0
        %596 = vmatprep.subr.mxu0 0.0
        %597 = vmatpush1.msra.mxu0 0.0
        %598 = vmatprep.subr.mxu0 0.0
        %599 = vmatpush1.msra.mxu0 0.0
        %600 = vmatprep.subr.mxu0 0.0
        %601 = vmatpush1.msra.mxu0 0.0
        %602 = vmatprep.subr.mxu0 0.0
        %603 = vmatpush1.msra.mxu0 0.0
        %604 = vmatprep.subr.mxu0 0.0
        %605 = vmatpush1.msra.mxu0 0.0
        %606 = vmatprep.subr.mxu0 0.0
        %607 = vmatpush1.msra.mxu0 0.0
        %608 = vmatprep.subr.mxu0 0.0
        %609 = vmatpush1.msra.mxu0 0.0
        %610 = vmatprep.subr.mxu0 0.0
        %611 = vmatpush1.msra.mxu0 0.0
        %612 = vmatprep.subr.mxu0 0.0
        %613 = vmatpush1.msra.mxu0 0.0
        %614 = vmatprep.subr.mxu0 0.0
        %615 = vmatpush1.msra.mxu0 0.0
        %616 = vmatprep.subr.mxu0 0.0
        %617 = vmatpush1.msra.mxu0 0.0
        %618 = vmatprep.subr.mxu0 0.0
        %619 = vmatpush1.msra.mxu0 0.0
        %620 = vmatprep.subr.mxu0 0.0
        %621 = vmatpush1.msra.mxu0 0.0
        %622 = vmatprep.subr.mxu0 0.0
        %623 = vmatpush1.msra.mxu0 0.0
        %624 = vmatprep.subr.mxu0 0.0
        %625 = vmatpush1.msra.mxu0 0.0
        %626 = vmatprep.subr.mxu0 0.0
        %627 = vmatpush1.msra.mxu0 0.0
        %628 = vmatprep.mubr.f32.mxu0 0.0
        %629 = vmatmul.mubr.f32.gmra.mrb[0].mxu0 %v558
        %v630 = vpop.f32.mrb[0].mxu0
        %v631 = vadd.f32 %v554, %v630
        %v632 = vpop.f32.mrb[0].mxu0
        %633 = vdwg.mxu0
        %v635 = vrot.slane %v631, 1
        %v637 = vadd.f32 %v631, %v635
        %v638 = vxor.u32 %v637, 2147483648
        %v639 = vmul.f32 %v638, 1.442695
        %v640 = vpow.pop %v639
        %v641 = vadd.f32 %v640, 1.0
        %v642 = vrcp.pop %v641
        %v643 = vmul.f32 1.0, %v642
        %v644 = vlaneseq
        %v645 = vshrl.u32 %v644, 7
        %v646 = vsub.s32 0, %v645
        %v647 = vrot.slane %v643, %v646
        %v648 = vmul.f32 %v285, %v647
        %v649 = vmul.f32 %v286, %v647
        %v650 = vmul.f32 %v287, %v647
        %v651 = vmul.f32 %v288, %v647
        %v652 = vmul.f32 %v289, %v647
        %v653 = vmul.f32 %v290, %v647
        %v654 = vmul.f32 %v291, %v647
        %v655 = vmul.f32 %v292, %v647
        %v656 = vmul.f32 %v293, %v647
        %v657 = vmul.f32 %v294, %v647
        %v658 = vmul.f32 %v295, %v647
        %v659 = vmul.f32 %v296, %v647
        %v660 = vmul.f32 %v297, %v647
        %v661 = vmul.f32 %v298, %v647
        %v662 = vmul.f32 %v299, %v647
        %v663 = vmul.f32 %v300, %v647
        %v664 = vmul.f32 %v301, %v647
        %v665 = vmul.f32 %v302, %v647
        %v666 = vmul.f32 %v303, %v647
        %v667 = vmul.f32 %v304, %v647
        %v668 = vmul.f32 %v305, %v647
        %v669 = vmul.f32 %v306, %v647
        %v670 = vmul.f32 %v307, %v647
        %v671 = vmul.f32 %v308, %v647
        %v672 = vmul.f32 %v309, %v647
        %v673 = vmul.f32 %v310, %v647
        %v674 = vmul.f32 %v311, %v647
        %v675 = vmul.f32 %v312, %v647
        %v676 = vmul.f32 %v313, %v647
        %v677 = vmul.f32 %v314, %v647
        %v678 = vmul.f32 %v315, %v647
        %v679 = vmul.f32 %v316, %v647
        %v680 = vsel %vm317, %v648, 0.0
        %681 = vadd.xlane.f32.xlu0 %v680
        %v682 = vpop.xlane.xlu0 %681
        %v683 = vsel %vm317, %v649, 0.0
        %684 = vadd.xlane.f32.xlu0 %v683
        %v685 = vpop.xlane.xlu0 %684
        %v686 = vsel %vm317, %v650, 0.0
        %687 = vadd.xlane.f32.xlu0 %v686
        %v688 = vpop.xlane.xlu0 %687
        %v689 = vsel %vm317, %v651, 0.0
        %690 = vadd.xlane.f32.xlu0 %v689
        %v691 = vpop.xlane.xlu0 %690
        %v692 = vsel %vm317, %v652, 0.0
        %693 = vadd.xlane.f32.xlu0 %v692
        %v694 = vpop.xlane.xlu0 %693
        %v695 = vsel %vm317, %v653, 0.0
        %696 = vadd.xlane.f32.xlu0 %v695
        %v697 = vpop.xlane.xlu0 %696
        %v698 = vsel %vm317, %v654, 0.0
        %699 = vadd.xlane.f32.xlu0 %v698
        %v700 = vpop.xlane.xlu0 %699
        %v701 = vsel %vm317, %v655, 0.0
        %702 = vadd.xlane.f32.xlu0 %v701
        %v703 = vpop.xlane.xlu0 %702
        %v704 = vsel %vm317, %v656, 0.0
        %705 = vadd.xlane.f32.xlu0 %v704
        %v706 = vpop.xlane.xlu0 %705
        %v707 = vsel %vm317, %v657, 0.0
        %708 = vadd.xlane.f32.xlu0 %v707
        %v709 = vpop.xlane.xlu0 %708
        %v710 = vsel %vm317, %v658, 0.0
        %711 = vadd.xlane.f32.xlu0 %v710
        %v712 = vpop.xlane.xlu0 %711
        %v713 = vsel %vm317, %v659, 0.0
        %714 = vadd.xlane.f32.xlu0 %v713
        %v715 = vpop.xlane.xlu0 %714
        %v716 = vsel %vm317, %v660, 0.0
        %717 = vadd.xlane.f32.xlu0 %v716
        %v718 = vpop.xlane.xlu0 %717
        %v719 = vsel %vm317, %v661, 0.0
        %720 = vadd.xlane.f32.xlu0 %v719
        %v721 = vpop.xlane.xlu0 %720
        %v722 = vsel %vm317, %v662, 0.0
        %723 = vadd.xlane.f32.xlu0 %v722
        %v724 = vpop.xlane.xlu0 %723
        %v725 = vsel %vm317, %v663, 0.0
        %726 = vadd.xlane.f32.xlu0 %v725
        %v727 = vpop.xlane.xlu0 %726
        %v728 = vsel %vm317, %v664, 0.0
        %729 = vadd.xlane.f32.xlu0 %v728
        %v730 = vpop.xlane.xlu0 %729
        %v731 = vsel %vm317, %v665, 0.0
        %732 = vadd.xlane.f32.xlu0 %v731
        %v733 = vpop.xlane.xlu0 %732
        %v734 = vsel %vm317, %v666, 0.0
        %735 = vadd.xlane.f32.xlu0 %v734
        %v736 = vpop.xlane.xlu0 %735
        %v737 = vsel %vm317, %v667, 0.0
        %738 = vadd.xlane.f32.xlu0 %v737
        %v739 = vpop.xlane.xlu0 %738
        %v740 = vsel %vm317, %v668, 0.0
        %741 = vadd.xlane.f32.xlu0 %v740
        %v742 = vpop.xlane.xlu0 %741
        %v743 = vsel %vm317, %v669, 0.0
        %744 = vadd.xlane.f32.xlu0 %v743
        %v745 = vpop.xlane.xlu0 %744
        %v746 = vsel %vm317, %v670, 0.0
        %747 = vadd.xlane.f32.xlu0 %v746
        %v748 = vpop.xlane.xlu0 %747
        %v749 = vsel %vm317, %v671, 0.0
        %750 = vadd.xlane.f32.xlu0 %v749
        %v751 = vpop.xlane.xlu0 %750
        %v752 = vsel %vm317, %v672, 0.0
        %753 = vadd.xlane.f32.xlu0 %v752
        %v754 = vpop.xlane.xlu0 %753
        %v755 = vsel %vm317, %v673, 0.0
        %756 = vadd.xlane.f32.xlu0 %v755
        %v757 = vpop.xlane.xlu0 %756
        %v758 = vsel %vm317, %v674, 0.0
        %759 = vadd.xlane.f32.xlu0 %v758
        %v760 = vpop.xlane.xlu0 %759
        %v761 = vsel %vm317, %v675, 0.0
        %762 = vadd.xlane.f32.xlu0 %v761
        %v763 = vpop.xlane.xlu0 %762
        %v764 = vsel %vm317, %v676, 0.0
        %765 = vadd.xlane.f32.xlu0 %v764
        %v766 = vpop.xlane.xlu0 %765
        %v767 = vsel %vm317, %v677, 0.0
        %768 = vadd.xlane.f32.xlu0 %v767
        %v769 = vpop.xlane.xlu0 %768
        %v770 = vsel %vm317, %v678, 0.0
        %771 = vadd.xlane.f32.xlu0 %v770
        %v772 = vpop.xlane.xlu0 %771
        %v773 = vsel %vm317, %v679, 0.0
        %774 = vadd.xlane.f32.xlu0 %v773
        %v775 = vpop.xlane.xlu0 %774
        %v776 = vrcp.pop 32.0
        %v777 = vmul.f32 %v682, %v776
        %v778 = vmul.f32 %v685, %v776
        %v779 = vmul.f32 %v688, %v776
        %v780 = vmul.f32 %v691, %v776
        %v781 = vmul.f32 %v694, %v776
        %v782 = vmul.f32 %v697, %v776
        %v783 = vmul.f32 %v700, %v776
        %v784 = vmul.f32 %v703, %v776
        %v785 = vmul.f32 %v706, %v776
        %v786 = vmul.f32 %v709, %v776
        %v787 = vmul.f32 %v712, %v776
        %v788 = vmul.f32 %v715, %v776
        %v789 = vmul.f32 %v718, %v776
        %v790 = vmul.f32 %v721, %v776
        %v791 = vmul.f32 %v724, %v776
        %v792 = vmul.f32 %v727, %v776
        %v793 = vmul.f32 %v730, %v776
        %v794 = vmul.f32 %v733, %v776
        %v795 = vmul.f32 %v736, %v776
        %v796 = vmul.f32 %v739, %v776
        %v797 = vmul.f32 %v742, %v776
        %v798 = vmul.f32 %v745, %v776
        %v799 = vmul.f32 %v748, %v776
        %v800 = vmul.f32 %v751, %v776
        %v801 = vmul.f32 %v754, %v776
        %v802 = vmul.f32 %v757, %v776
        %v803 = vmul.f32 %v760, %v776
        %v804 = vmul.f32 %v763, %v776
        %v805 = vmul.f32 %v766, %v776
        %v806 = vmul.f32 %v769, %v776
        %v807 = vmul.f32 %v772, %v776
        %v808 = vmul.f32 %v775, %v776
        %v809 = vsel %vm317, %v648, -inf
        %810 = vmax.xlane.f32.xlu0 %v809
        %v811 = vpop.xlane.xlu0 %810
        %v812 = vsel %vm317, %v649, -inf
        %813 = vmax.xlane.f32.xlu0 %v812
        %v814 = vpop.xlane.xlu0 %813
        %v815 = vsel %vm317, %v650, -inf
        %816 = vmax.xlane.f32.xlu0 %v815
        %v817 = vpop.xlane.xlu0 %816
        %v818 = vsel %vm317, %v651, -inf
        %819 = vmax.xlane.f32.xlu0 %v818
        %v820 = vpop.xlane.xlu0 %819
        %v821 = vsel %vm317, %v652, -inf
        %822 = vmax.xlane.f32.xlu0 %v821
        %v823 = vpop.xlane.xlu0 %822
        %v824 = vsel %vm317, %v653, -inf
        %825 = vmax.xlane.f32.xlu0 %v824
        %v826 = vpop.xlane.xlu0 %825
        %v827 = vsel %vm317, %v654, -inf
        %828 = vmax.xlane.f32.xlu0 %v827
        %v829 = vpop.xlane.xlu0 %828
        %v830 = vsel %vm317, %v655, -inf
        %831 = vmax.xlane.f32.xlu0 %v830
        %v832 = vpop.xlane.xlu0 %831
        %v833 = vsel %vm317, %v656, -inf
        %834 = vmax.xlane.f32.xlu0 %v833
        %v835 = vpop.xlane.xlu0 %834
        %v836 = vsel %vm317, %v657, -inf
        %837 = vmax.xlane.f32.xlu0 %v836
        %v838 = vpop.xlane.xlu0 %837
        %v839 = vsel %vm317, %v658, -inf
        %840 = vmax.xlane.f32.xlu0 %v839
        %v841 = vpop.xlane.xlu0 %840
        %v842 = vsel %vm317, %v659, -inf
        %843 = vmax.xlane.f32.xlu0 %v842
        %v844 = vpop.xlane.xlu0 %843
        %v845 = vsel %vm317, %v660, -inf
        %846 = vmax.xlane.f32.xlu0 %v845
        %v847 = vpop.xlane.xlu0 %846
        %v848 = vsel %vm317, %v661, -inf
        %849 = vmax.xlane.f32.xlu0 %v848
        %v850 = vpop.xlane.xlu0 %849
        %v851 = vsel %vm317, %v662, -inf
        %852 = vmax.xlane.f32.xlu0 %v851
        %v853 = vpop.xlane.xlu0 %852
        %v854 = vsel %vm317, %v663, -inf
        %855 = vmax.xlane.f32.xlu0 %v854
        %v856 = vpop.xlane.xlu0 %855
        %v857 = vsel %vm317, %v664, -inf
        %858 = vmax.xlane.f32.xlu0 %v857
        %v859 = vpop.xlane.xlu0 %858
        %v860 = vsel %vm317, %v665, -inf
        %861 = vmax.xlane.f32.xlu0 %v860
        %v862 = vpop.xlane.xlu0 %861
        %v863 = vsel %vm317, %v666, -inf
        %864 = vmax.xlane.f32.xlu0 %v863
        %v865 = vpop.xlane.xlu0 %864
        %v866 = vsel %vm317, %v667, -inf
        %867 = vmax.xlane.f32.xlu0 %v866
        %v868 = vpop.xlane.xlu0 %867
        %v869 = vsel %vm317, %v668, -inf
        %870 = vmax.xlane.f32.xlu0 %v869
        %v871 = vpop.xlane.xlu0 %870
        %v872 = vsel %vm317, %v669, -inf
        %873 = vmax.xlane.f32.xlu0 %v872
        %v874 = vpop.xlane.xlu0 %873
        %v875 = vsel %vm317, %v670, -inf
        %876 = vmax.xlane.f32.xlu0 %v875
        %v877 = vpop.xlane.xlu0 %876
        %v878 = vsel %vm317, %v671, -inf
        %879 = vmax.xlane.f32.xlu0 %v878
        %v880 = vpop.xlane.xlu0 %879
        %v881 = vsel %vm317, %v672, -inf
        %882 = vmax.xlane.f32.xlu0 %v881
        %v883 = vpop.xlane.xlu0 %882
        %v884 = vsel %vm317, %v673, -inf
        %885 = vmax.xlane.f32.xlu0 %v884
        %v886 = vpop.xlane.xlu0 %885
        %v887 = vsel %vm317, %v674, -inf
        %888 = vmax.xlane.f32.xlu0 %v887
        %v889 = vpop.xlane.xlu0 %888
        %v890 = vsel %vm317, %v675, -inf
        %891 = vmax.xlane.f32.xlu0 %v890
        %v892 = vpop.xlane.xlu0 %891
        %v893 = vsel %vm317, %v676, -inf
        %894 = vmax.xlane.f32.xlu0 %v893
        %v895 = vpop.xlane.xlu0 %894
        %v896 = vsel %vm317, %v677, -inf
        %897 = vmax.xlane.f32.xlu0 %v896
        %v898 = vpop.xlane.xlu0 %897
        %v899 = vsel %vm317, %v678, -inf
        %900 = vmax.xlane.f32.xlu0 %v899
        %v901 = vpop.xlane.xlu0 %900
        %v902 = vsel %vm317, %v679, -inf
        %903 = vmax.xlane.f32.xlu0 %v902
        %v904 = vpop.xlane.xlu0 %903
        %905 = vst.msk [vmem:[%s284] sm:$0xff] %vm317, %v648
        %906 = vst.msk [vmem:[%s284 + $0x8] sm:$0xff] %vm317, %v649
        %907 = vst.msk [vmem:[%s284 + $0x10] sm:$0xff] %vm317, %v650
        %908 = vst.msk [vmem:[%s284 + $0x18] sm:$0xff] %vm317, %v651
        %909 = vst.msk [vmem:[%s284 + $0x20] sm:$0xff] %vm317, %v652
        %910 = vst.msk [vmem:[%s284 + $0x28] sm:$0xff] %vm317, %v653
        %911 = vst.msk [vmem:[%s284 + $0x30] sm:$0xff] %vm317, %v654
        %912 = vst.msk [vmem:[%s284 + $0x38] sm:$0xff] %vm317, %v655
        %913 = vst.msk [vmem:[%s284 + $0x40] sm:$0xff] %vm317, %v656
        %914 = vst.msk [vmem:[%s284 + $0x48] sm:$0xff] %vm317, %v657
        %915 = vst.msk [vmem:[%s284 + $0x50] sm:$0xff] %vm317, %v658
        %916 = vst.msk [vmem:[%s284 + $0x58] sm:$0xff] %vm317, %v659
        %917 = vst.msk [vmem:[%s284 + $0x60] sm:$0xff] %vm317, %v660
        %918 = vst.msk [vmem:[%s284 + $0x68] sm:$0xff] %vm317, %v661
        %919 = vst.msk [vmem:[%s284 + $0x70] sm:$0xff] %vm317, %v662
        %920 = vst.msk [vmem:[%s284 + $0x78] sm:$0xff] %vm317, %v663
        %921 = vst.msk [vmem:[%s284 + $0x80] sm:$0xff] %vm317, %v664
        %922 = vst.msk [vmem:[%s284 + $0x88] sm:$0xff] %vm317, %v665
        %923 = vst.msk [vmem:[%s284 + $0x90] sm:$0xff] %vm317, %v666
        %924 = vst.msk [vmem:[%s284 + $0x98] sm:$0xff] %vm317, %v667
        %925 = vst.msk [vmem:[%s284 + $0xa0] sm:$0xff] %vm317, %v668
        %926 = vst.msk [vmem:[%s284 + $0xa8] sm:$0xff] %vm317, %v669
        %927 = vst.msk [vmem:[%s284 + $0xb0] sm:$0xff] %vm317, %v670
        %928 = vst.msk [vmem:[%s284 + $0xb8] sm:$0xff] %vm317, %v671
        %929 = vst.msk [vmem:[%s284 + $0xc0] sm:$0xff] %vm317, %v672
        %930 = vst.msk [vmem:[%s284 + $0xc8] sm:$0xff] %vm317, %v673
        %931 = vst.msk [vmem:[%s284 + $0xd0] sm:$0xff] %vm317, %v674
        %932 = vst.msk [vmem:[%s284 + $0xd8] sm:$0xff] %vm317, %v675
        %933 = vst.msk [vmem:[%s284 + $0xe0] sm:$0xff] %vm317, %v676
        %934 = vst.msk [vmem:[%s284 + $0xe8] sm:$0xff] %vm317, %v677
        %935 = vst.msk [vmem:[%s284 + $0xf0] sm:$0xff] %vm317, %v678
        %936 = vst.msk [vmem:[%s284 + $0xf8] sm:$0xff] %vm317, %v679
        %v969 = vlaneseq
        %v970 = vand.u32 %v969, 127
        %v971 = vlaneseq
        %v972 = vshrl.u32 %v971, 7
        %v973 = vsub.s32 %v970, %v972
        %v974 = vrot.slane %v777, %v973
        %v975 = vadd.s32 %v970, 4294967288
        %v976 = vlaneseq
        %v977 = vshrl.u32 %v976, 7
        %v978 = vsub.s32 %v975, %v977
        %v979 = vrot.slane %v778, %v978
        %vm980 = vcmask 130112
        %v981 = vsel %vm980, %v979, %v974
        %v982 = vlaneseq
        %v983 = vshrl.u32 %v982, 7
        %v984 = vsub.s32 %v970, %v983
        %v985 = vrot.slane %v779, %v984
        %v986 = vlaneseq
        %v987 = vshrl.u32 %v986, 7
        %v988 = vsub.s32 %v975, %v987
        %v989 = vrot.slane %v780, %v988
        %v990 = vsel %vm980, %v989, %v985
        %v991 = vlaneseq
        %v992 = vshrl.u32 %v991, 7
        %v993 = vsub.s32 %v970, %v992
        %v994 = vrot.slane %v781, %v993
        %v995 = vlaneseq
        %v996 = vshrl.u32 %v995, 7
        %v997 = vsub.s32 %v975, %v996
        %v998 = vrot.slane %v782, %v997
        %v999 = vsel %vm980, %v998, %v994
        %v1000 = vlaneseq
        %v1001 = vshrl.u32 %v1000, 7
        %v1002 = vsub.s32 %v970, %v1001
        %v1003 = vrot.slane %v783, %v1002
        %v1004 = vlaneseq
        %v1005 = vshrl.u32 %v1004, 7
        %v1006 = vsub.s32 %v975, %v1005
        %v1007 = vrot.slane %v784, %v1006
        %v1008 = vsel %vm980, %v1007, %v1003
        %v1009 = vlaneseq
        %v1010 = vshrl.u32 %v1009, 7
        %v1011 = vsub.s32 %v970, %v1010
        %v1012 = vrot.slane %v785, %v1011
        %v1013 = vlaneseq
        %v1014 = vshrl.u32 %v1013, 7
        %v1015 = vsub.s32 %v975, %v1014
        %v1016 = vrot.slane %v786, %v1015
        %v1017 = vsel %vm980, %v1016, %v1012
        %v1018 = vlaneseq
        %v1019 = vshrl.u32 %v1018, 7
        %v1020 = vsub.s32 %v970, %v1019
        %v1021 = vrot.slane %v787, %v1020
        %v1022 = vlaneseq
        %v1023 = vshrl.u32 %v1022, 7
        %v1024 = vsub.s32 %v975, %v1023
        %v1025 = vrot.slane %v788, %v1024
        %v1026 = vsel %vm980, %v1025, %v1021
        %v1027 = vlaneseq
        %v1028 = vshrl.u32 %v1027, 7
        %v1029 = vsub.s32 %v970, %v1028
        %v1030 = vrot.slane %v789, %v1029
        %v1031 = vlaneseq
        %v1032 = vshrl.u32 %v1031, 7
        %v1033 = vsub.s32 %v975, %v1032
        %v1034 = vrot.slane %v790, %v1033
        %v1035 = vsel %vm980, %v1034, %v1030
        %v1036 = vlaneseq
        %v1037 = vshrl.u32 %v1036, 7
        %v1038 = vsub.s32 %v970, %v1037
        %v1039 = vrot.slane %v791, %v1038
        %v1040 = vlaneseq
        %v1041 = vshrl.u32 %v1040, 7
        %v1042 = vsub.s32 %v975, %v1041
        %v1043 = vrot.slane %v792, %v1042
        %v1044 = vsel %vm980, %v1043, %v1039
        %v1045 = vlaneseq
        %v1046 = vshrl.u32 %v1045, 7
        %v1047 = vsub.s32 %v970, %v1046
        %v1048 = vrot.slane %v793, %v1047
        %v1049 = vlaneseq
        %v1050 = vshrl.u32 %v1049, 7
        %v1051 = vsub.s32 %v975, %v1050
        %v1052 = vrot.slane %v794, %v1051
        %v1053 = vsel %vm980, %v1052, %v1048
        %v1054 = vlaneseq
        %v1055 = vshrl.u32 %v1054, 7
        %v1056 = vsub.s32 %v970, %v1055
        %v1057 = vrot.slane %v795, %v1056
        %v1058 = vlaneseq
        %v1059 = vshrl.u32 %v1058, 7
        %v1060 = vsub.s32 %v975, %v1059
        %v1061 = vrot.slane %v796, %v1060
        %v1062 = vsel %vm980, %v1061, %v1057
        %v1063 = vlaneseq
        %v1064 = vshrl.u32 %v1063, 7
        %v1065 = vsub.s32 %v970, %v1064
        %v1066 = vrot.slane %v797, %v1065
        %v1067 = vlaneseq
        %v1068 = vshrl.u32 %v1067, 7
        %v1069 = vsub.s32 %v975, %v1068
        %v1070 = vrot.slane %v798, %v1069
        %v1071 = vsel %vm980, %v1070, %v1066
        %v1072 = vlaneseq
        %v1073 = vshrl.u32 %v1072, 7
        %v1074 = vsub.s32 %v970, %v1073
        %v1075 = vrot.slane %v799, %v1074
        %v1076 = vlaneseq
        %v1077 = vshrl.u32 %v1076, 7
        %v1078 = vsub.s32 %v975, %v1077
        %v1079 = vrot.slane %v800, %v1078
        %v1080 = vsel %vm980, %v1079, %v1075
        %v1081 = vlaneseq
        %v1082 = vshrl.u32 %v1081, 7
        %v1083 = vsub.s32 %v970, %v1082
        %v1084 = vrot.slane %v801, %v1083
        %v1085 = vlaneseq
        %v1086 = vshrl.u32 %v1085, 7
        %v1087 = vsub.s32 %v975, %v1086
        %v1088 = vrot.slane %v802, %v1087
        %v1089 = vsel %vm980, %v1088, %v1084
        %v1090 = vlaneseq
        %v1091 = vshrl.u32 %v1090, 7
        %v1092 = vsub.s32 %v970, %v1091
        %v1093 = vrot.slane %v803, %v1092
        %v1094 = vlaneseq
        %v1095 = vshrl.u32 %v1094, 7
        %v1096 = vsub.s32 %v975, %v1095
        %v1097 = vrot.slane %v804, %v1096
        %v1098 = vsel %vm980, %v1097, %v1093
        %v1099 = vlaneseq
        %v1100 = vshrl.u32 %v1099, 7
        %v1101 = vsub.s32 %v970, %v1100
        %v1102 = vrot.slane %v805, %v1101
        %v1103 = vlaneseq
        %v1104 = vshrl.u32 %v1103, 7
        %v1105 = vsub.s32 %v975, %v1104
        %v1106 = vrot.slane %v806, %v1105
        %v1107 = vsel %vm980, %v1106, %v1102
        %v1108 = vlaneseq
        %v1109 = vshrl.u32 %v1108, 7
        %v1110 = vsub.s32 %v970, %v1109
        %v1111 = vrot.slane %v807, %v1110
        %v1112 = vlaneseq
        %v1113 = vshrl.u32 %v1112, 7
        %v1114 = vsub.s32 %v975, %v1113
        %v1115 = vrot.slane %v808, %v1114
        %v1116 = vsel %vm980, %v1115, %v1111
        %vm1117 = vcmask 1044484
        %v1118 = vsel %vm1117, %v990, %v981
        %vm1119 = vcmask 1045509
        %v1120 = vsel %vm1119, %v999, %v1118
        %vm1121 = vcmask 1046534
        %v1122 = vsel %vm1121, %v1008, %v1120
        %vm1123 = vcmask 1047559
        %v1124 = vsel %vm1123, %v1017, %v1122
        %vm1125 = vcmask 1041409
        %v1126 = vsel %vm1125, %v1035, %v1026
        %vm1127 = vcmask 1042434
        %v1128 = vsel %vm1127, %v1044, %v1126
        %vm1129 = vcmask 1043459
        %v1130 = vsel %vm1129, %v1053, %v1128
        %v1131 = vsel %vm1117, %v1062, %v1130
        %v1132 = vsel %vm1119, %v1071, %v1131
        %v1133 = vsel %vm1121, %v1080, %v1132
        %v1134 = vsel %vm1123, %v1089, %v1133
        %v1135 = vsel %vm1125, %v1107, %v1098
        %v1136 = vsel %vm1127, %v1116, %v1135
        %vm1139 = vcmask 1042432
        %v1140 = vsel %vm1139, 0.0, %v1124
        %v1141 = vsel %vm1139, %v1136, 0.0
        %v1142 = vld [vmem:[#allocation5] sm:$0xff]
        %v1143 = vld [vmem:[#allocation5 + $0x8] sm:$0xff]
        %vm1144 = vcmask 130048
        %v1146 = vsel %vm1144, %v1140, 0
        %v1148 = vsel %vm1144, %v1134, 0
        %v1151 = vsel %vm1144, %v1141, 0
        %1153 = vmatprep.subr.mxu0 0.0
        %1154 = vmatpush1.msra.mxu0 %v1142
        %1155 = vmatprep.subr.mxu0 0.0
        %1156 = vmatpush1.msra.mxu0 %v1143
        %1157 = vmatprep.subr.mxu0 0.0
        %1158 = vmatpush1.msra.mxu0 0.0
        %1159 = vmatprep.subr.mxu0 0.0
        %1160 = vmatpush1.msra.mxu0 0.0
        %1161 = vmatprep.subr.mxu0 0.0
        %1162 = vmatpush1.msra.mxu0 0.0
        %1163 = vmatprep.subr.mxu0 0.0
        %1164 = vmatpush1.msra.mxu0 0.0
        %1165 = vmatprep.subr.mxu0 0.0
        %1166 = vmatpush1.msra.mxu0 0.0
        %1167 = vmatprep.subr.mxu0 0.0
        %1168 = vmatpush1.msra.mxu0 0.0
        %1169 = vmatprep.subr.mxu0 0.0
        %1170 = vmatpush1.msra.mxu0 0.0
        %1171 = vmatprep.subr.mxu0 0.0
        %1172 = vmatpush1.msra.mxu0 0.0
        %1173 = vmatprep.subr.mxu0 0.0
        %1174 = vmatpush1.msra.mxu0 0.0
        %1175 = vmatprep.subr.mxu0 0.0
        %1176 = vmatpush1.msra.mxu0 0.0
        %1177 = vmatprep.subr.mxu0 0.0
        %1178 = vmatpush1.msra.mxu0 0.0
        %1179 = vmatprep.subr.mxu0 0.0
        %1180 = vmatpush1.msra.mxu0 0.0
        %1181 = vmatprep.subr.mxu0 0.0
        %1182 = vmatpush1.msra.mxu0 0.0
        %1183 = vmatprep.subr.mxu0 0.0
        %1184 = vmatpush1.msra.mxu0 0.0
        %1185 = vmatprep.subr.mxu0 0.0
        %1186 = vmatpush1.msra.mxu0 0.0
        %1187 = vmatprep.subr.mxu0 0.0
        %1188 = vmatpush1.msra.mxu0 0.0
        %1189 = vmatprep.subr.mxu0 0.0
        %1190 = vmatpush1.msra.mxu0 0.0
        %1191 = vmatprep.subr.mxu0 0.0
        %1192 = vmatpush1.msra.mxu0 0.0
        %1193 = vmatprep.subr.mxu0 0.0
        %1194 = vmatpush1.msra.mxu0 0.0
        %1195 = vmatprep.subr.mxu0 0.0
        %1196 = vmatpush1.msra.mxu0 0.0
        %1197 = vmatprep.subr.mxu0 0.0
        %1198 = vmatpush1.msra.mxu0 0.0
        %1199 = vmatprep.subr.mxu0 0.0
        %1200 = vmatpush1.msra.mxu0 0.0
        %1201 = vmatprep.subr.mxu0 0.0
        %1202 = vmatpush1.msra.mxu0 0.0
        %1203 = vmatprep.subr.mxu0 0.0
        %1204 = vmatpush1.msra.mxu0 0.0
        %1205 = vmatprep.subr.mxu0 0.0
        %1206 = vmatpush1.msra.mxu0 0.0
        %1207 = vmatprep.subr.mxu0 0.0
        %1208 = vmatpush1.msra.mxu0 0.0
        %1209 = vmatprep.subr.mxu0 0.0
        %1210 = vmatpush1.msra.mxu0 0.0
        %1211 = vmatprep.subr.mxu0 0.0
        %1212 = vmatpush1.msra.mxu0 0.0
        %1213 = vmatprep.subr.mxu0 0.0
        %1214 = vmatpush1.msra.mxu0 0.0
        %1215 = vmatprep.subr.mxu0 0.0
        %1216 = vmatpush1.msra.mxu0 0.0
        %1217 = vmatprep.mubr.f32.mxu0 0.0
        %1218 = vmatmul.mubr.f32.gmra.mrb[0].mxu0 %v1146
        %v1219 = vpop.f32.mrb[0].mxu0
        %v1220 = vadd.f32 0.0, %v1219
        %v1221 = vpop.f32.mrb[0].mxu0
        %1222 = vmatprep.mubr.f32.mxu0 0.0
        %1223 = vmatmul.mubr.f32.gmra.mrb[0].mxu0 %v1148
        %v1224 = vpop.f32.mrb[0].mxu0
        %v1225 = vadd.f32 0.0, %v1224
        %v1226 = vpop.f32.mrb[0].mxu0
        %1227 = vmatprep.mubr.f32.mxu0 0.0
        %1228 = vmatmul.mubr.f32.gmra.mrb[0].mxu0 %v1151
        %v1229 = vpop.f32.mrb[0].mxu0
        %v1230 = vpop.f32.mrb[0].mxu0
        %1231 = vdwg.mxu0
        %v1232 = vadd.f32 %v1220, 0.0
        %v1233 = vadd.f32 %v1225, 0.0
        %s1234 = scalar_lea.vmem [#allocation5], 16
        %v1235 = vld [vmem:[%s1234] sm:$0xff]
        %v1236 = vld [vmem:[%s1234 + $0x8] sm:$0xff]
        %1237 = vmatprep.subr.mxu0 0.0
        %1238 = vmatpush1.msra.mxu0 %v1235
        %1239 = vmatprep.subr.mxu0 0.0
        %1240 = vmatpush1.msra.mxu0 %v1236
        %1241 = vmatprep.subr.mxu0 0.0
        %1242 = vmatpush1.msra.mxu0 0.0
        %1243 = vmatprep.subr.mxu0 0.0
        %1244 = vmatpush1.msra.mxu0 0.0
        %1245 = vmatprep.subr.mxu0 0.0
        %1246 = vmatpush1.msra.mxu0 0.0
        %1247 = vmatprep.subr.mxu0 0.0
        %1248 = vmatpush1.msra.mxu0 0.0
        %1249 = vmatprep.subr.mxu0 0.0
        %1250 = vmatpush1.msra.mxu0 0.0
        %1251 = vmatprep.subr.mxu0 0.0
        %1252 = vmatpush1.msra.mxu0 0.0
        %1253 = vmatprep.subr.mxu0 0.0
        %1254 = vmatpush1.msra.mxu0 0.0
        %1255 = vmatprep.subr.mxu0 0.0
        %1256 = vmatpush1.msra.mxu0 0.0
        %1257 = vmatprep.subr.mxu0 0.0
        %1258 = vmatpush1.msra.mxu0 0.0
        %1259 = vmatprep.subr.mxu0 0.0
        %1260 = vmatpush1.msra.mxu0 0.0
        %1261 = vmatprep.subr.mxu0 0.0
        %1262 = vmatpush1.msra.mxu0 0.0
        %1263 = vmatprep.subr.mxu0 0.0
        %1264 = vmatpush1.msra.mxu0 0.0
        %1265 = vmatprep.subr.mxu0 0.0
        %1266 = vmatpush1.msra.mxu0 0.0
        %1267 = vmatprep.subr.mxu0 0.0
        %1268 = vmatpush1.msra.mxu0 0.0
        %1269 = vmatprep.subr.mxu0 0.0
        %1270 = vmatpush1.msra.mxu0 0.0
        %1271 = vmatprep.subr.mxu0 0.0
        %1272 = vmatpush1.msra.mxu0 0.0
        %1273 = vmatprep.subr.mxu0 0.0
        %1274 = vmatpush1.msra.mxu0 0.0
        %1275 = vmatprep.subr.mxu0 0.0
        %1276 = vmatpush1.msra.mxu0 0.0
        %1277 = vmatprep.subr.mxu0 0.0
        %1278 = vmatpush1.msra.mxu0 0.0
        %1279 = vmatprep.subr.mxu0 0.0
        %1280 = vmatpush1.msra.mxu0 0.0
        %1281 = vmatprep.subr.mxu0 0.0
        %1282 = vmatpush1.msra.mxu0 0.0
        %1283 = vmatprep.subr.mxu0 0.0
        %1284 = vmatpush1.msra.mxu0 0.0
        %1285 = vmatprep.subr.mxu0 0.0
        %1286 = vmatpush1.msra.mxu0 0.0
        %1287 = vmatprep.subr.mxu0 0.0
        %1288 = vmatpush1.msra.mxu0 0.0
        %1289 = vmatprep.subr.mxu0 0.0
        %1290 = vmatpush1.msra.mxu0 0.0
        %1291 = vmatprep.subr.mxu0 0.0
        %1292 = vmatpush1.msra.mxu0 0.0
        %1293 = vmatprep.subr.mxu0 0.0
        %1294 = vmatpush1.msra.mxu0 0.0
        %1295 = vmatprep.subr.mxu0 0.0
        %1296 = vmatpush1.msra.mxu0 0.0
        %1297 = vmatprep.subr.mxu0 0.0
        %1298 = vmatpush1.msra.mxu0 0.0
        %1299 = vmatprep.subr.mxu0 0.0
        %1300 = vmatpush1.msra.mxu0 0.0
        %1301 = vmatprep.mubr.f32.mxu0 0.0
        %1302 = vmatmul.mubr.f32.gmra.mrb[0].mxu0 %v1146
        %v1303 = vpop.f32.mrb[0].mxu0
        %v1304 = vadd.f32 0.0, %v1303
        %v1305 = vpop.f32.mrb[0].mxu0
        %1306 = vmatprep.mubr.f32.mxu0 0.0
        %1307 = vmatmul.mubr.f32.gmra.mrb[0].mxu0 %v1148
        %v1308 = vpop.f32.mrb[0].mxu0
        %v1309 = vadd.f32 0.0, %v1308
        %v1310 = vpop.f32.mrb[0].mxu0
        %1311 = vmatprep.mubr.f32.mxu0 0.0
        %1312 = vmatmul.mubr.f32.gmra.mrb[0].mxu0 %v1151
        %v1313 = vpop.f32.mrb[0].mxu0
        %v1314 = vadd.f32 0.0, %v1313
        %v1315 = vpop.f32.mrb[0].mxu0
        %1316 = vdwg.mxu0
        %vm1320 = vcmask 1046528
        %v1321 = vrot.slane %v1304, 1
        %v1322 = vrot.slane %v1309, 1
        %v1323 = vsel %vm1320, %v1321, %v1322
        %v1324 = vrot.slane %v1314, 1
        %v1325 = vsel %vm1320, %v1322, %v1324
        %v1328 = vadd.f32 %v1232, %v1323
        %v1329 = vadd.f32 %v1233, %v1325
        %s1330 = scalar_lea.vmem [#allocation5], 32
        %v1331 = vld [vmem:[%s1330] sm:$0xff]
        %v1332 = vld [vmem:[%s1330 + $0x8] sm:$0xff]
        %1333 = vmatprep.subr.mxu0 0.0
        %1334 = vmatpush1.msra.mxu0 %v1331
        %1335 = vmatprep.subr.mxu0 0.0
        %1336 = vmatpush1.msra.mxu0 %v1332
        %1337 = vmatprep.subr.mxu0 0.0
        %1338 = vmatpush1.msra.mxu0 0.0
        %1339 = vmatprep.subr.mxu0 0.0
        %1340 = vmatpush1.msra.mxu0 0.0
        %1341 = vmatprep.subr.mxu0 0.0
        %1342 = vmatpush1.msra.mxu0 0.0
        %1343 = vmatprep.subr.mxu0 0.0
        %1344 = vmatpush1.msra.mxu0 0.0
        %1345 = vmatprep.subr.mxu0 0.0
        %1346 = vmatpush1.msra.mxu0 0.0
        %1347 = vmatprep.subr.mxu0 0.0
        %1348 = vmatpush1.msra.mxu0 0.0
        %1349 = vmatprep.subr.mxu0 0.0
        %1350 = vmatpush1.msra.mxu0 0.0
        %1351 = vmatprep.subr.mxu0 0.0
        %1352 = vmatpush1.msra.mxu0 0.0
        %1353 = vmatprep.subr.mxu0 0.0
        %1354 = vmatpush1.msra.mxu0 0.0
        %1355 = vmatprep.subr.mxu0 0.0
        %1356 = vmatpush1.msra.mxu0 0.0
        %1357 = vmatprep.subr.mxu0 0.0
        %1358 = vmatpush1.msra.mxu0 0.0
        %1359 = vmatprep.subr.mxu0 0.0
        %1360 = vmatpush1.msra.mxu0 0.0
        %1361 = vmatprep.subr.mxu0 0.0
        %1362 = vmatpush1.msra.mxu0 0.0
        %1363 = vmatprep.subr.mxu0 0.0
        %1364 = vmatpush1.msra.mxu0 0.0
        %1365 = vmatprep.subr.mxu0 0.0
        %1366 = vmatpush1.msra.mxu0 0.0
        %1367 = vmatprep.subr.mxu0 0.0
        %1368 = vmatpush1.msra.mxu0 0.0
        %1369 = vmatprep.subr.mxu0 0.0
        %1370 = vmatpush1.msra.mxu0 0.0
        %1371 = vmatprep.subr.mxu0 0.0
        %1372 = vmatpush1.msra.mxu0 0.0
        %1373 = vmatprep.subr.mxu0 0.0
        %1374 = vmatpush1.msra.mxu0 0.0
        %1375 = vmatprep.subr.mxu0 0.0
        %1376 = vmatpush1.msra.mxu0 0.0
        %1377 = vmatprep.subr.mxu0 0.0
        %1378 = vmatpush1.msra.mxu0 0.0
        %1379 = vmatprep.subr.mxu0 0.0
        %1380 = vmatpush1.msra.mxu0 0.0
        %1381 = vmatprep.subr.mxu0 0.0
        %1382 = vmatpush1.msra.mxu0 0.0
        %1383 = vmatprep.subr.mxu0 0.0
        %1384 = vmatpush1.msra.mxu0 0.0
        %1385 = vmatprep.subr.mxu0 0.0
        %1386 = vmatpush1.msra.mxu0 0.0
        %1387 = vmatprep.subr.mxu0 0.0
        %1388 = vmatpush1.msra.mxu0 0.0
        %1389 = vmatprep.subr.mxu0 0.0
        %1390 = vmatpush1.msra.mxu0 0.0
        %1391 = vmatprep.subr.mxu0 0.0
        %1392 = vmatpush1.msra.mxu0 0.0
        %1393 = vmatprep.subr.mxu0 0.0
        %1394 = vmatpush1.msra.mxu0 0.0
        %1395 = vmatprep.subr.mxu0 0.0
        %1396 = vmatpush1.msra.mxu0 0.0
        %1397 = vmatprep.mubr.f32.mxu0 0.0
        %1398 = vmatmul.mubr.f32.gmra.mrb[0].mxu0 %v1146
        %v1399 = vpop.f32.mrb[0].mxu0
        %v1400 = vadd.f32 0.0, %v1399
        %v1401 = vpop.f32.mrb[0].mxu0
        %1402 = vmatprep.mubr.f32.mxu0 0.0
        %1403 = vmatmul.mubr.f32.gmra.mrb[0].mxu0 %v1148
        %v1404 = vpop.f32.mrb[0].mxu0
        %v1405 = vadd.f32 0.0, %v1404
        %v1406 = vpop.f32.mrb[0].mxu0
        %1407 = vmatprep.mubr.f32.mxu0 0.0
        %1408 = vmatmul.mubr.f32.gmra.mrb[0].mxu0 %v1151
        %v1409 = vpop.f32.mrb[0].mxu0
        %v1410 = vadd.f32 0.0, %v1409
        %v1411 = vpop.f32.mrb[0].mxu0
        %1412 = vdwg.mxu0
        %vm1416 = vcmask 1045504
        %v1417 = vrot.slane %v1400, 2
        %v1418 = vrot.slane %v1405, 2
        %v1419 = vsel %vm1416, %v1417, %v1418
        %v1420 = vrot.slane %v1410, 2
        %v1421 = vsel %vm1416, %v1418, %v1420
        %v1424 = vadd.f32 %v1328, %v1419
        %v1425 = vadd.f32 %v1329, %v1421
        %s1426 = scalar_lea.vmem [#allocation5], 48
        %v1427 = vld [vmem:[%s1426] sm:$0xff]
        %v1428 = vld [vmem:[%s1426 + $0x8] sm:$0xff]
        %1429 = vmatprep.subr.mxu0 0.0
        %1430 = vmatpush1.msra.mxu0 %v1427
        %1431 = vmatprep.subr.mxu0 0.0
        %1432 = vmatpush1.msra.mxu0 %v1428
        %1433 = vmatprep.subr.mxu0 0.0
        %1434 = vmatpush1.msra.mxu0 0.0
        %1435 = vmatprep.subr.mxu0 0.0
        %1436 = vmatpush1.msra.mxu0 0.0
        %1437 = vmatprep.subr.mxu0 0.0
        %1438 = vmatpush1.msra.mxu0 0.0
        %1439 = vmatprep.subr.mxu0 0.0
        %1440 = vmatpush1.msra.mxu0 0.0
        %1441 = vmatprep.subr.mxu0 0.0
        %1442 = vmatpush1.msra.mxu0 0.0
        %1443 = vmatprep.subr.mxu0 0.0
        %1444 = vmatpush1.msra.mxu0 0.0
        %1445 = vmatprep.subr.mxu0 0.0
        %1446 = vmatpush1.msra.mxu0 0.0
        %1447 = vmatprep.subr.mxu0 0.0
        %1448 = vmatpush1.msra.mxu0 0.0
        %1449 = vmatprep.subr.mxu0 0.0
        %1450 = vmatpush1.msra.mxu0 0.0
        %1451 = vmatprep.subr.mxu0 0.0
        %1452 = vmatpush1.msra.mxu0 0.0
        %1453 = vmatprep.subr.mxu0 0.0
        %1454 = vmatpush1.msra.mxu0 0.0
        %1455 = vmatprep.subr.mxu0 0.0
        %1456 = vmatpush1.msra.mxu0 0.0
        %1457 = vmatprep.subr.mxu0 0.0
        %1458 = vmatpush1.msra.mxu0 0.0
        %1459 = vmatprep.subr.mxu0 0.0
        %1460 = vmatpush1.msra.mxu0 0.0
        %1461 = vmatprep.subr.mxu0 0.0
        %1462 = vmatpush1.msra.mxu0 0.0
        %1463 = vmatprep.subr.mxu0 0.0
        %1464 = vmatpush1.msra.mxu0 0.0
        %1465 = vmatprep.subr.mxu0 0.0
        %1466 = vmatpush1.msra.mxu0 0.0
        %1467 = vmatprep.subr.mxu0 0.0
        %1468 = vmatpush1.msra.mxu0 0.0
        %1469 = vmatprep.subr.mxu0 0.0
        %1470 = vmatpush1.msra.mxu0 0.0
        %1471 = vmatprep.subr.mxu0 0.0
        %1472 = vmatpush1.msra.mxu0 0.0
        %1473 = vmatprep.subr.mxu0 0.0
        %1474 = vmatpush1.msra.mxu0 0.0
        %1475 = vmatprep.subr.mxu0 0.0
        %1476 = vmatpush1.msra.mxu0 0.0
        %1477 = vmatprep.subr.mxu0 0.0
        %1478 = vmatpush1.msra.mxu0 0.0
        %1479 = vmatprep.subr.mxu0 0.0
        %1480 = vmatpush1.msra.mxu0 0.0
        %1481 = vmatprep.subr.mxu0 0.0
        %1482 = vmatpush1.msra.mxu0 0.0
        %1483 = vmatprep.subr.mxu0 0.0
        %1484 = vmatpush1.msra.mxu0 0.0
        %1485 = vmatprep.subr.mxu0 0.0
        %1486 = vmatpush1.msra.mxu0 0.0
        %1487 = vmatprep.subr.mxu0 0.0
        %1488 = vmatpush1.msra.mxu0 0.0
        %1489 = vmatprep.subr.mxu0 0.0
        %1490 = vmatpush1.msra.mxu0 0.0
        %1491 = vmatprep.subr.mxu0 0.0
        %1492 = vmatpush1.msra.mxu0 0.0
        %1493 = vmatprep.mubr.f32.mxu0 0.0
        %1494 = vmatmul.mubr.f32.gmra.mrb[0].mxu0 %v1146
        %v1495 = vpop.f32.mrb[0].mxu0
        %v1496 = vadd.f32 0.0, %v1495
        %v1497 = vpop.f32.mrb[0].mxu0
        %1498 = vmatprep.mubr.f32.mxu0 0.0
        %1499 = vmatmul.mubr.f32.gmra.mrb[0].mxu0 %v1148
        %v1500 = vpop.f32.mrb[0].mxu0
        %v1501 = vadd.f32 0.0, %v1500
        %v1502 = vpop.f32.mrb[0].mxu0
        %1503 = vmatprep.mubr.f32.mxu0 0.0
        %1504 = vmatmul.mubr.f32.gmra.mrb[0].mxu0 %v1151
        %v1505 = vpop.f32.mrb[0].mxu0
        %v1506 = vadd.f32 0.0, %v1505
        %v1507 = vpop.f32.mrb[0].mxu0
        %1508 = vdwg.mxu0
        %vm1512 = vcmask 1044480
        %v1513 = vrot.slane %v1496, 3
        %v1514 = vrot.slane %v1501, 3
        %v1515 = vsel %vm1512, %v1513, %v1514
        %v1516 = vrot.slane %v1506, 3
        %v1517 = vsel %vm1512, %v1514, %v1516
        %v1520 = vadd.f32 %v1424, %v1515
        %v1521 = vadd.f32 %v1425, %v1517
        %s1522 = scalar_lea.vmem [#allocation5], 64
        %v1523 = vld [vmem:[%s1522] sm:$0xff]
        %v1524 = vld [vmem:[%s1522 + $0x8] sm:$0xff]
        %1525 = vmatprep.subr.mxu0 0.0
        %1526 = vmatpush1.msra.mxu0 %v1523
        %1527 = vmatprep.subr.mxu0 0.0
        %1528 = vmatpush1.msra.mxu0 %v1524
        %1529 = vmatprep.subr.mxu0 0.0
        %1530 = vmatpush1.msra.mxu0 0.0
        %1531 = vmatprep.subr.mxu0 0.0
        %1532 = vmatpush1.msra.mxu0 0.0
        %1533 = vmatprep.subr.mxu0 0.0
        %1534 = vmatpush1.msra.mxu0 0.0
        %1535 = vmatprep.subr.mxu0 0.0
        %1536 = vmatpush1.msra.mxu0 0.0
        %1537 = vmatprep.subr.mxu0 0.0
        %1538 = vmatpush1.msra.mxu0 0.0
        %1539 = vmatprep.subr.mxu0 0.0
        %1540 = vmatpush1.msra.mxu0 0.0
        %1541 = vmatprep.subr.mxu0 0.0
        %1542 = vmatpush1.msra.mxu0 0.0
        %1543 = vmatprep.subr.mxu0 0.0
        %1544 = vmatpush1.msra.mxu0 0.0
        %1545 = vmatprep.subr.mxu0 0.0
        %1546 = vmatpush1.msra.mxu0 0.0
        %1547 = vmatprep.subr.mxu0 0.0
        %1548 = vmatpush1.msra.mxu0 0.0
        %1549 = vmatprep.subr.mxu0 0.0
        %1550 = vmatpush1.msra.mxu0 0.0
        %1551 = vmatprep.subr.mxu0 0.0
        %1552 = vmatpush1.msra.mxu0 0.0
        %1553 = vmatprep.subr.mxu0 0.0
        %1554 = vmatpush1.msra.mxu0 0.0
        %1555 = vmatprep.subr.mxu0 0.0
        %1556 = vmatpush1.msra.mxu0 0.0
        %1557 = vmatprep.subr.mxu0 0.0
        %1558 = vmatpush1.msra.mxu0 0.0
        %1559 = vmatprep.subr.mxu0 0.0
        %1560 = vmatpush1.msra.mxu0 0.0
        %1561 = vmatprep.subr.mxu0 0.0
        %1562 = vmatpush1.msra.mxu0 0.0
        %1563 = vmatprep.subr.mxu0 0.0
        %1564 = vmatpush1.msra.mxu0 0.0
        %1565 = vmatprep.subr.mxu0 0.0
        %1566 = vmatpush1.msra.mxu0 0.0
        %1567 = vmatprep.subr.mxu0 0.0
        %1568 = vmatpush1.msra.mxu0 0.0
        %1569 = vmatprep.subr.mxu0 0.0
        %1570 = vmatpush1.msra.mxu0 0.0
        %1571 = vmatprep.subr.mxu0 0.0
        %1572 = vmatpush1.msra.mxu0 0.0
        %1573 = vmatprep.subr.mxu0 0.0
        %1574 = vmatpush1.msra.mxu0 0.0
        %1575 = vmatprep.subr.mxu0 0.0
        %1576 = vmatpush1.msra.mxu0 0.0
        %1577 = vmatprep.subr.mxu0 0.0
        %1578 = vmatpush1.msra.mxu0 0.0
        %1579 = vmatprep.subr.mxu0 0.0
        %1580 = vmatpush1.msra.mxu0 0.0
        %1581 = vmatprep.subr.mxu0 0.0
        %1582 = vmatpush1.msra.mxu0 0.0
        %1583 = vmatprep.subr.mxu0 0.0
        %1584 = vmatpush1.msra.mxu0 0.0
        %1585 = vmatprep.subr.mxu0 0.0
        %1586 = vmatpush1.msra.mxu0 0.0
        %1587 = vmatprep.subr.mxu0 0.0
        %1588 = vmatpush1.msra.mxu0 0.0
        %1589 = vmatprep.mubr.f32.mxu0 0.0
        %1590 = vmatmul.mubr.f32.gmra.mrb[0].mxu0 %v1146
        %v1591 = vpop.f32.mrb[0].mxu0
        %v1592 = vadd.f32 0.0, %v1591
        %v1593 = vpop.f32.mrb[0].mxu0
        %1594 = vmatprep.mubr.f32.mxu0 0.0
        %1595 = vmatmul.mubr.f32.gmra.mrb[0].mxu0 %v1148
        %v1596 = vpop.f32.mrb[0].mxu0
        %v1597 = vadd.f32 0.0, %v1596
        %v1598 = vpop.f32.mrb[0].mxu0
        %1599 = vmatprep.mubr.f32.mxu0 0.0
        %1600 = vmatmul.mubr.f32.gmra.mrb[0].mxu0 %v1151
        %v1601 = vpop.f32.mrb[0].mxu0
        %v1602 = vadd.f32 0.0, %v1601
        %v1603 = vpop.f32.mrb[0].mxu0
        %1604 = vdwg.mxu0
        %vm1608 = vcmask 1043456
        %v1609 = vrot.slane %v1592, 4
        %v1610 = vrot.slane %v1597, 4
        %v1611 = vsel %vm1608, %v1609, %v1610
        %v1612 = vrot.slane %v1602, 4
        %v1613 = vsel %vm1608, %v1610, %v1612
        %v1616 = vadd.f32 %v1520, %v1611
        %v1617 = vadd.f32 %v1521, %v1613
        %s1618 = scalar_lea.vmem [#allocation5], 80
        %v1619 = vld [vmem:[%s1618] sm:$0xff]
        %v1620 = vld [vmem:[%s1618 + $0x8] sm:$0xff]
        %1621 = vmatprep.subr.mxu0 0.0
        %1622 = vmatpush1.msra.mxu0 %v1619
        %1623 = vmatprep.subr.mxu0 0.0
        %1624 = vmatpush1.msra.mxu0 %v1620
        %1625 = vmatprep.subr.mxu0 0.0
        %1626 = vmatpush1.msra.mxu0 0.0
        %1627 = vmatprep.subr.mxu0 0.0
        %1628 = vmatpush1.msra.mxu0 0.0
        %1629 = vmatprep.subr.mxu0 0.0
        %1630 = vmatpush1.msra.mxu0 0.0
        %1631 = vmatprep.subr.mxu0 0.0
        %1632 = vmatpush1.msra.mxu0 0.0
        %1633 = vmatprep.subr.mxu0 0.0
        %1634 = vmatpush1.msra.mxu0 0.0
        %1635 = vmatprep.subr.mxu0 0.0
        %1636 = vmatpush1.msra.mxu0 0.0
        %1637 = vmatprep.subr.mxu0 0.0
        %1638 = vmatpush1.msra.mxu0 0.0
        %1639 = vmatprep.subr.mxu0 0.0
        %1640 = vmatpush1.msra.mxu0 0.0
        %1641 = vmatprep.subr.mxu0 0.0
        %1642 = vmatpush1.msra.mxu0 0.0
        %1643 = vmatprep.subr.mxu0 0.0
        %1644 = vmatpush1.msra.mxu0 0.0
        %1645 = vmatprep.subr.mxu0 0.0
        %1646 = vmatpush1.msra.mxu0 0.0
        %1647 = vmatprep.subr.mxu0 0.0
        %1648 = vmatpush1.msra.mxu0 0.0
        %1649 = vmatprep.subr.mxu0 0.0
        %1650 = vmatpush1.msra.mxu0 0.0
        %1651 = vmatprep.subr.mxu0 0.0
        %1652 = vmatpush1.msra.mxu0 0.0
        %1653 = vmatprep.subr.mxu0 0.0
        %1654 = vmatpush1.msra.mxu0 0.0
        %1655 = vmatprep.subr.mxu0 0.0
        %1656 = vmatpush1.msra.mxu0 0.0
        %1657 = vmatprep.subr.mxu0 0.0
        %1658 = vmatpush1.msra.mxu0 0.0
        %1659 = vmatprep.subr.mxu0 0.0
        %1660 = vmatpush1.msra.mxu0 0.0
        %1661 = vmatprep.subr.mxu0 0.0
        %1662 = vmatpush1.msra.mxu0 0.0
        %1663 = vmatprep.subr.mxu0 0.0
        %1664 = vmatpush1.msra.mxu0 0.0
        %1665 = vmatprep.subr.mxu0 0.0
        %1666 = vmatpush1.msra.mxu0 0.0
        %1667 = vmatprep.subr.mxu0 0.0
        %1668 = vmatpush1.msra.mxu0 0.0
        %1669 = vmatprep.subr.mxu0 0.0
        %1670 = vmatpush1.msra.mxu0 0.0
        %1671 = vmatprep.subr.mxu0 0.0
        %1672 = vmatpush1.msra.mxu0 0.0
        %1673 = vmatprep.subr.mxu0 0.0
        %1674 = vmatpush1.msra.mxu0 0.0
        %1675 = vmatprep.subr.mxu0 0.0
        %1676 = vmatpush1.msra.mxu0 0.0
        %1677 = vmatprep.subr.mxu0 0.0
        %1678 = vmatpush1.msra.mxu0 0.0
        %1679 = vmatprep.subr.mxu0 0.0
        %1680 = vmatpush1.msra.mxu0 0.0
        %1681 = vmatprep.subr.mxu0 0.0
        %1682 = vmatpush1.msra.mxu0 0.0
        %1683 = vmatprep.subr.mxu0 0.0
        %1684 = vmatpush1.msra.mxu0 0.0
        %1685 = vmatprep.mubr.f32.mxu0 0.0
        %1686 = vmatmul.mubr.f32.gmra.mrb[0].mxu0 %v1146
        %v1687 = vpop.f32.mrb[0].mxu0
        %v1688 = vadd.f32 0.0, %v1687
        %v1689 = vpop.f32.mrb[0].mxu0
        %1690 = vmatprep.mubr.f32.mxu0 0.0
        %1691 = vmatmul.mubr.f32.gmra.mrb[0].mxu0 %v1148
        %v1692 = vpop.f32.mrb[0].mxu0
        %v1693 = vadd.f32 0.0, %v1692
        %v1694 = vpop.f32.mrb[0].mxu0
        %1695 = vmatprep.mubr.f32.mxu0 0.0
        %1696 = vmatmul.mubr.f32.gmra.mrb[0].mxu0 %v1151
        %v1697 = vpop.f32.mrb[0].mxu0
        %v1698 = vadd.f32 0.0, %v1697
        %v1699 = vpop.f32.mrb[0].mxu0
        %1700 = vdwg.mxu0
        %v1704 = vrot.slane %v1688, 5
        %v1705 = vrot.slane %v1693, 5
        %v1706 = vsel %vm1139, %v1704, %v1705
        %v1707 = vrot.slane %v1698, 5
        %v1708 = vsel %vm1139, %v1705, %v1707
        %v1711 = vadd.f32 %v1616, %v1706
        %v1712 = vadd.f32 %v1617, %v1708
        %s1713 = scalar_lea.vmem [#allocation5], 96
        %v1714 = vld [vmem:[%s1713] sm:$0xff]
        %v1715 = vld [vmem:[%s1713 + $0x8] sm:$0xff]
        %1716 = vmatprep.subr.mxu0 0.0
        %1717 = vmatpush1.msra.mxu0 %v1714
        %1718 = vmatprep.subr.mxu0 0.0
        %1719 = vmatpush1.msra.mxu0 %v1715
        %1720 = vmatprep.subr.mxu0 0.0
        %1721 = vmatpush1.msra.mxu0 0.0
        %1722 = vmatprep.subr.mxu0 0.0
        %1723 = vmatpush1.msra.mxu0 0.0
        %1724 = vmatprep.subr.mxu0 0.0
        %1725 = vmatpush1.msra.mxu0 0.0
        %1726 = vmatprep.subr.mxu0 0.0
        %1727 = vmatpush1.msra.mxu0 0.0
        %1728 = vmatprep.subr.mxu0 0.0
        %1729 = vmatpush1.msra.mxu0 0.0
        %1730 = vmatprep.subr.mxu0 0.0
        %1731 = vmatpush1.msra.mxu0 0.0
        %1732 = vmatprep.subr.mxu0 0.0
        %1733 = vmatpush1.msra.mxu0 0.0
        %1734 = vmatprep.subr.mxu0 0.0
        %1735 = vmatpush1.msra.mxu0 0.0
        %1736 = vmatprep.subr.mxu0 0.0
        %1737 = vmatpush1.msra.mxu0 0.0
        %1738 = vmatprep.subr.mxu0 0.0
        %1739 = vmatpush1.msra.mxu0 0.0
        %1740 = vmatprep.subr.mxu0 0.0
        %1741 = vmatpush1.msra.mxu0 0.0
        %1742 = vmatprep.subr.mxu0 0.0
        %1743 = vmatpush1.msra.mxu0 0.0
        %1744 = vmatprep.subr.mxu0 0.0
        %1745 = vmatpush1.msra.mxu0 0.0
        %1746 = vmatprep.subr.mxu0 0.0
        %1747 = vmatpush1.msra.mxu0 0.0
        %1748 = vmatprep.subr.mxu0 0.0
        %1749 = vmatpush1.msra.mxu0 0.0
        %1750 = vmatprep.subr.mxu0 0.0
        %1751 = vmatpush1.msra.mxu0 0.0
        %1752 = vmatprep.subr.mxu0 0.0
        %1753 = vmatpush1.msra.mxu0 0.0
        %1754 = vmatprep.subr.mxu0 0.0
        %1755 = vmatpush1.msra.mxu0 0.0
        %1756 = vmatprep.subr.mxu0 0.0
        %1757 = vmatpush1.msra.mxu0 0.0
        %1758 = vmatprep.subr.mxu0 0.0
        %1759 = vmatpush1.msra.mxu0 0.0
        %1760 = vmatprep.subr.mxu0 0.0
        %1761 = vmatpush1.msra.mxu0 0.0
        %1762 = vmatprep.subr.mxu0 0.0
        %1763 = vmatpush1.msra.mxu0 0.0
        %1764 = vmatprep.subr.mxu0 0.0
        %1765 = vmatpush1.msra.mxu0 0.0
        %1766 = vmatprep.subr.mxu0 0.0
        %1767 = vmatpush1.msra.mxu0 0.0
        %1768 = vmatprep.subr.mxu0 0.0
        %1769 = vmatpush1.msra.mxu0 0.0
        %1770 = vmatprep.subr.mxu0 0.0
        %1771 = vmatpush1.msra.mxu0 0.0
        %1772 = vmatprep.subr.mxu0 0.0
        %1773 = vmatpush1.msra.mxu0 0.0
        %1774 = vmatprep.subr.mxu0 0.0
        %1775 = vmatpush1.msra.mxu0 0.0
        %1776 = vmatprep.subr.mxu0 0.0
        %1777 = vmatpush1.msra.mxu0 0.0
        %1778 = vmatprep.subr.mxu0 0.0
        %1779 = vmatpush1.msra.mxu0 0.0
        %1780 = vmatprep.mubr.f32.mxu0 0.0
        %1781 = vmatmul.mubr.f32.gmra.mrb[0].mxu0 %v1146
        %v1782 = vpop.f32.mrb[0].mxu0
        %v1783 = vadd.f32 0.0, %v1782
        %v1784 = vpop.f32.mrb[0].mxu0
        %1785 = vmatprep.mubr.f32.mxu0 0.0
        %1786 = vmatmul.mubr.f32.gmra.mrb[0].mxu0 %v1148
        %v1787 = vpop.f32.mrb[0].mxu0
        %v1788 = vadd.f32 0.0, %v1787
        %v1789 = vpop.f32.mrb[0].mxu0
        %1790 = vmatprep.mubr.f32.mxu0 0.0
        %1791 = vmatmul.mubr.f32.gmra.mrb[0].mxu0 %v1151
        %v1792 = vpop.f32.mrb[0].mxu0
        %v1793 = vadd.f32 0.0, %v1792
        %v1794 = vpop.f32.mrb[0].mxu0
        %1795 = vdwg.mxu0
        %v1799 = vrot.slane %v1783, 6
        %v1800 = vrot.slane %v1788, 6
        %v1801 = vsel %vm560, %v1799, %v1800
        %v1802 = vrot.slane %v1793, 6
        %v1803 = vsel %vm560, %v1800, %v1802
        %v1806 = vadd.f32 %v1711, %v1801
        %v1807 = vadd.f32 %v1712, %v1803
        %v1840 = vlaneseq
        %v1841 = vshrl.u32 %v1840, 7
        %v1842 = vsub.s32 %v970, %v1841
        %v1843 = vrot.slane %v811, %v1842
        %v1844 = vlaneseq
        %v1845 = vshrl.u32 %v1844, 7
        %v1846 = vsub.s32 %v975, %v1845
        %v1847 = vrot.slane %v814, %v1846
        %v1848 = vsel %vm980, %v1847, %v1843
        %v1849 = vlaneseq
        %v1850 = vshrl.u32 %v1849, 7
        %v1851 = vsub.s32 %v970, %v1850
        %v1852 = vrot.slane %v817, %v1851
        %v1853 = vlaneseq
        %v1854 = vshrl.u32 %v1853, 7
        %v1855 = vsub.s32 %v975, %v1854
        %v1856 = vrot.slane %v820, %v1855
        %v1857 = vsel %vm980, %v1856, %v1852
        %v1858 = vlaneseq
        %v1859 = vshrl.u32 %v1858, 7
        %v1860 = vsub.s32 %v970, %v1859
        %v1861 = vrot.slane %v823, %v1860
        %v1862 = vlaneseq
        %v1863 = vshrl.u32 %v1862, 7
        %v1864 = vsub.s32 %v975, %v1863
        %v1865 = vrot.slane %v826, %v1864
        %v1866 = vsel %vm980, %v1865, %v1861
        %v1867 = vlaneseq
        %v1868 = vshrl.u32 %v1867, 7
        %v1869 = vsub.s32 %v970, %v1868
        %v1870 = vrot.slane %v829, %v1869
        %v1871 = vlaneseq
        %v1872 = vshrl.u32 %v1871, 7
        %v1873 = vsub.s32 %v975, %v1872
        %v1874 = vrot.slane %v832, %v1873
        %v1875 = vsel %vm980, %v1874, %v1870
        %v1876 = vlaneseq
        %v1877 = vshrl.u32 %v1876, 7
        %v1878 = vsub.s32 %v970, %v1877
        %v1879 = vrot.slane %v835, %v1878
        %v1880 = vlaneseq
        %v1881 = vshrl.u32 %v1880, 7
        %v1882 = vsub.s32 %v975, %v1881
        %v1883 = vrot.slane %v838, %v1882
        %v1884 = vsel %vm980, %v1883, %v1879
        %v1885 = vlaneseq
        %v1886 = vshrl.u32 %v1885, 7
        %v1887 = vsub.s32 %v970, %v1886
        %v1888 = vrot.slane %v841, %v1887
        %v1889 = vlaneseq
        %v1890 = vshrl.u32 %v1889, 7
        %v1891 = vsub.s32 %v975, %v1890
        %v1892 = vrot.slane %v844, %v1891
        %v1893 = vsel %vm980, %v1892, %v1888
        %v1894 = vlaneseq
        %v1895 = vshrl.u32 %v1894, 7
        %v1896 = vsub.s32 %v970, %v1895
        %v1897 = vrot.slane %v847, %v1896
        %v1898 = vlaneseq
        %v1899 = vshrl.u32 %v1898, 7
        %v1900 = vsub.s32 %v975, %v1899
        %v1901 = vrot.slane %v850, %v1900
        %v1902 = vsel %vm980, %v1901, %v1897
        %v1903 = vlaneseq
        %v1904 = vshrl.u32 %v1903, 7
        %v1905 = vsub.s32 %v970, %v1904
        %v1906 = vrot.slane %v853, %v1905
        %v1907 = vlaneseq
        %v1908 = vshrl.u32 %v1907, 7
        %v1909 = vsub.s32 %v975, %v1908
        %v1910 = vrot.slane %v856, %v1909
        %v1911 = vsel %vm980, %v1910, %v1906
        %v1912 = vlaneseq
        %v1913 = vshrl.u32 %v1912, 7
        %v1914 = vsub.s32 %v970, %v1913
        %v1915 = vrot.slane %v859, %v1914
        %v1916 = vlaneseq
        %v1917 = vshrl.u32 %v1916, 7
        %v1918 = vsub.s32 %v975, %v1917
        %v1919 = vrot.slane %v862, %v1918
        %v1920 = vsel %vm980, %v1919, %v1915
        %v1921 = vlaneseq
        %v1922 = vshrl.u32 %v1921, 7
        %v1923 = vsub.s32 %v970, %v1922
        %v1924 = vrot.slane %v865, %v1923
        %v1925 = vlaneseq
        %v1926 = vshrl.u32 %v1925, 7
        %v1927 = vsub.s32 %v975, %v1926
        %v1928 = vrot.slane %v868, %v1927
        %v1929 = vsel %vm980, %v1928, %v1924
        %v1930 = vlaneseq
        %v1931 = vshrl.u32 %v1930, 7
        %v1932 = vsub.s32 %v970, %v1931
        %v1933 = vrot.slane %v871, %v1932
        %v1934 = vlaneseq
        %v1935 = vshrl.u32 %v1934, 7
        %v1936 = vsub.s32 %v975, %v1935
        %v1937 = vrot.slane %v874, %v1936
        %v1938 = vsel %vm980, %v1937, %v1933
        %v1939 = vlaneseq
        %v1940 = vshrl.u32 %v1939, 7
        %v1941 = vsub.s32 %v970, %v1940
        %v1942 = vrot.slane %v877, %v1941
        %v1943 = vlaneseq
        %v1944 = vshrl.u32 %v1943, 7
        %v1945 = vsub.s32 %v975, %v1944
        %v1946 = vrot.slane %v880, %v1945
        %v1947 = vsel %vm980, %v1946, %v1942
        %v1948 = vlaneseq
        %v1949 = vshrl.u32 %v1948, 7
        %v1950 = vsub.s32 %v970, %v1949
        %v1951 = vrot.slane %v883, %v1950
        %v1952 = vlaneseq
        %v1953 = vshrl.u32 %v1952, 7
        %v1954 = vsub.s32 %v975, %v1953
        %v1955 = vrot.slane %v886, %v1954
        %v1956 = vsel %vm980, %v1955, %v1951
        %v1957 = vlaneseq
        %v1958 = vshrl.u32 %v1957, 7
        %v1959 = vsub.s32 %v970, %v1958
        %v1960 = vrot.slane %v889, %v1959
        %v1961 = vlaneseq
        %v1962 = vshrl.u32 %v1961, 7
        %v1963 = vsub.s32 %v975, %v1962
        %v1964 = vrot.slane %v892, %v1963
        %v1965 = vsel %vm980, %v1964, %v1960
        %v1966 = vlaneseq
        %v1967 = vshrl.u32 %v1966, 7
        %v1968 = vsub.s32 %v970, %v1967
        %v1969 = vrot.slane %v895, %v1968
        %v1970 = vlaneseq
        %v1971 = vshrl.u32 %v1970, 7
        %v1972 = vsub.s32 %v975, %v1971
        %v1973 = vrot.slane %v898, %v1972
        %v1974 = vsel %vm980, %v1973, %v1969
        %v1975 = vlaneseq
        %v1976 = vshrl.u32 %v1975, 7
        %v1977 = vsub.s32 %v970, %v1976
        %v1978 = vrot.slane %v901, %v1977
        %v1979 = vlaneseq
        %v1980 = vshrl.u32 %v1979, 7
        %v1981 = vsub.s32 %v975, %v1980
        %v1982 = vrot.slane %v904, %v1981
        %v1983 = vsel %vm980, %v1982, %v1978
        %v1984 = vsel %vm1117, %v1857, %v1848
        %v1985 = vsel %vm1119, %v1866, %v1984
        %v1986 = vsel %vm1121, %v1875, %v1985
        %v1987 = vsel %vm1123, %v1884, %v1986
        %v1988 = vsel %vm1125, %v1902, %v1893
        %v1989 = vsel %vm1127, %v1911, %v1988
        %v1990 = vsel %vm1129, %v1920, %v1989
        %v1991 = vsel %vm1117, %v1929, %v1990
        %v1992 = vsel %vm1119, %v1938, %v1991
        %v1993 = vsel %vm1121, %v1947, %v1992
        %v1994 = vsel %vm1123, %v1956, %v1993
        %v1995 = vsel %vm1125, %v1974, %v1965
        %v1996 = vsel %vm1127, %v1983, %v1995
        %v1999 = vsel %vm1139, 0.0, %v1987
        %v2000 = vsel %vm1139, %v1996, 0.0
        %s2001 = scalar_lea.vmem [#allocation5], 112
        %v2002 = vld [vmem:[%s2001] sm:$0xff]
        %v2003 = vld [vmem:[%s2001 + $0x8] sm:$0xff]
        %v2005 = vsel %vm1144, %v1999, 0
        %v2007 = vsel %vm1144, %v1994, 0
        %v2010 = vsel %vm1144, %v2000, 0
        %2012 = vmatprep.subr.mxu0 0.0
        %2013 = vmatpush1.msra.mxu0 %v2002
        %2014 = vmatprep.subr.mxu0 0.0
        %2015 = vmatpush1.msra.mxu0 %v2003
        %2016 = vmatprep.subr.mxu0 0.0
        %2017 = vmatpush1.msra.mxu0 0.0
        %2018 = vmatprep.subr.mxu0 0.0
        %2019 = vmatpush1.msra.mxu0 0.0
        %2020 = vmatprep.subr.mxu0 0.0
        %2021 = vmatpush1.msra.mxu0 0.0
        %2022 = vmatprep.subr.mxu0 0.0
        %2023 = vmatpush1.msra.mxu0 0.0
        %2024 = vmatprep.subr.mxu0 0.0
        %2025 = vmatpush1.msra.mxu0 0.0
        %2026 = vmatprep.subr.mxu0 0.0
        %2027 = vmatpush1.msra.mxu0 0.0
        %2028 = vmatprep.subr.mxu0 0.0
        %2029 = vmatpush1.msra.mxu0 0.0
        %2030 = vmatprep.subr.mxu0 0.0
        %2031 = vmatpush1.msra.mxu0 0.0
        %2032 = vmatprep.subr.mxu0 0.0
        %2033 = vmatpush1.msra.mxu0 0.0
        %2034 = vmatprep.subr.mxu0 0.0
        %2035 = vmatpush1.msra.mxu0 0.0
        %2036 = vmatprep.subr.mxu0 0.0
        %2037 = vmatpush1.msra.mxu0 0.0
        %2038 = vmatprep.subr.mxu0 0.0
        %2039 = vmatpush1.msra.mxu0 0.0
        %2040 = vmatprep.subr.mxu0 0.0
        %2041 = vmatpush1.msra.mxu0 0.0
        %2042 = vmatprep.subr.mxu0 0.0
        %2043 = vmatpush1.msra.mxu0 0.0
        %2044 = vmatprep.subr.mxu0 0.0
        %2045 = vmatpush1.msra.mxu0 0.0
        %2046 = vmatprep.subr.mxu0 0.0
        %2047 = vmatpush1.msra.mxu0 0.0
        %2048 = vmatprep.subr.mxu0 0.0
        %2049 = vmatpush1.msra.mxu0 0.0
        %2050 = vmatprep.subr.mxu0 0.0
        %2051 = vmatpush1.msra.mxu0 0.0
        %2052 = vmatprep.subr.mxu0 0.0
        %2053 = vmatpush1.msra.mxu0 0.0
        %2054 = vmatprep.subr.mxu0 0.0
        %2055 = vmatpush1.msra.mxu0 0.0
        %2056 = vmatprep.subr.mxu0 0.0
        %2057 = vmatpush1.msra.mxu0 0.0
        %2058 = vmatprep.subr.mxu0 0.0
        %2059 = vmatpush1.msra.mxu0 0.0
        %2060 = vmatprep.subr.mxu0 0.0
        %2061 = vmatpush1.msra.mxu0 0.0
        %2062 = vmatprep.subr.mxu0 0.0
        %2063 = vmatpush1.msra.mxu0 0.0
        %2064 = vmatprep.subr.mxu0 0.0
        %2065 = vmatpush1.msra.mxu0 0.0
        %2066 = vmatprep.subr.mxu0 0.0
        %2067 = vmatpush1.msra.mxu0 0.0
        %2068 = vmatprep.subr.mxu0 0.0
        %2069 = vmatpush1.msra.mxu0 0.0
        %2070 = vmatprep.subr.mxu0 0.0
        %2071 = vmatpush1.msra.mxu0 0.0
        %2072 = vmatprep.subr.mxu0 0.0
        %2073 = vmatpush1.msra.mxu0 0.0
        %2074 = vmatprep.subr.mxu0 0.0
        %2075 = vmatpush1.msra.mxu0 0.0
        %2076 = vmatprep.mubr.f32.mxu0 0.0
        %2077 = vmatmul.mubr.f32.gmra.mrb[0].mxu0 %v2005
        %v2078 = vpop.f32.mrb[0].mxu0
        %v2079 = vadd.f32 0.0, %v2078
        %v2080 = vpop.f32.mrb[0].mxu0
        %2081 = vmatprep.mubr.f32.mxu0 0.0
        %2082 = vmatmul.mubr.f32.gmra.mrb[0].mxu0 %v2007
        %v2083 = vpop.f32.mrb[0].mxu0
        %v2084 = vadd.f32 0.0, %v2083
        %v2085 = vpop.f32.mrb[0].mxu0
        %2086 = vmatprep.mubr.f32.mxu0 0.0
        %2087 = vmatmul.mubr.f32.gmra.mrb[0].mxu0 %v2010
        %v2088 = vpop.f32.mrb[0].mxu0
        %v2089 = vpop.f32.mrb[0].mxu0
        %2090 = vdwg.mxu0
        %v2091 = vadd.f32 %v1806, %v2079
        %v2092 = vadd.f32 %v1807, %v2084
        %s2093 = scalar_lea.vmem [#allocation5], 128
        %v2094 = vld [vmem:[%s2093] sm:$0xff]
        %v2095 = vld [vmem:[%s2093 + $0x8] sm:$0xff]
        %2096 = vmatprep.subr.mxu0 0.0
        %2097 = vmatpush1.msra.mxu0 %v2094
        %2098 = vmatprep.subr.mxu0 0.0
        %2099 = vmatpush1.msra.mxu0 %v2095
        %2100 = vmatprep.subr.mxu0 0.0
        %2101 = vmatpush1.msra.mxu0 0.0
        %2102 = vmatprep.subr.mxu0 0.0
        %2103 = vmatpush1.msra.mxu0 0.0
        %2104 = vmatprep.subr.mxu0 0.0
        %2105 = vmatpush1.msra.mxu0 0.0
        %2106 = vmatprep.subr.mxu0 0.0
        %2107 = vmatpush1.msra.mxu0 0.0
        %2108 = vmatprep.subr.mxu0 0.0
        %2109 = vmatpush1.msra.mxu0 0.0
        %2110 = vmatprep.subr.mxu0 0.0
        %2111 = vmatpush1.msra.mxu0 0.0
        %2112 = vmatprep.subr.mxu0 0.0
        %2113 = vmatpush1.msra.mxu0 0.0
        %2114 = vmatprep.subr.mxu0 0.0
        %2115 = vmatpush1.msra.mxu0 0.0
        %2116 = vmatprep.subr.mxu0 0.0
        %2117 = vmatpush1.msra.mxu0 0.0
        %2118 = vmatprep.subr.mxu0 0.0
        %2119 = vmatpush1.msra.mxu0 0.0
        %2120 = vmatprep.subr.mxu0 0.0
        %2121 = vmatpush1.msra.mxu0 0.0
        %2122 = vmatprep.subr.mxu0 0.0
        %2123 = vmatpush1.msra.mxu0 0.0
        %2124 = vmatprep.subr.mxu0 0.0
        %2125 = vmatpush1.msra.mxu0 0.0
        %2126 = vmatprep.subr.mxu0 0.0
        %2127 = vmatpush1.msra.mxu0 0.0
        %2128 = vmatprep.subr.mxu0 0.0
        %2129 = vmatpush1.msra.mxu0 0.0
        %2130 = vmatprep.subr.mxu0 0.0
        %2131 = vmatpush1.msra.mxu0 0.0
        %2132 = vmatprep.subr.mxu0 0.0
        %2133 = vmatpush1.msra.mxu0 0.0
        %2134 = vmatprep.subr.mxu0 0.0
        %2135 = vmatpush1.msra.mxu0 0.0
        %2136 = vmatprep.subr.mxu0 0.0
        %2137 = vmatpush1.msra.mxu0 0.0
        %2138 = vmatprep.subr.mxu0 0.0
        %2139 = vmatpush1.msra.mxu0 0.0
        %2140 = vmatprep.subr.mxu0 0.0
        %2141 = vmatpush1.msra.mxu0 0.0
        %2142 = vmatprep.subr.mxu0 0.0
        %2143 = vmatpush1.msra.mxu0 0.0
        %2144 = vmatprep.subr.mxu0 0.0
        %2145 = vmatpush1.msra.mxu0 0.0
        %2146 = vmatprep.subr.mxu0 0.0
        %2147 = vmatpush1.msra.mxu0 0.0
        %2148 = vmatprep.subr.mxu0 0.0
        %2149 = vmatpush1.msra.mxu0 0.0
        %2150 = vmatprep.subr.mxu0 0.0
        %2151 = vmatpush1.msra.mxu0 0.0
        %2152 = vmatprep.subr.mxu0 0.0
        %2153 = vmatpush1.msra.mxu0 0.0
        %2154 = vmatprep.subr.mxu0 0.0
        %2155 = vmatpush1.msra.mxu0 0.0
        %2156 = vmatprep.subr.mxu0 0.0
        %2157 = vmatpush1.msra.mxu0 0.0
        %2158 = vmatprep.subr.mxu0 0.0
        %2159 = vmatpush1.msra.mxu0 0.0
        %2160 = vmatprep.mubr.f32.mxu0 0.0
        %2161 = vmatmul.mubr.f32.gmra.mrb[0].mxu0 %v2005
        %v2162 = vpop.f32.mrb[0].mxu0
        %v2163 = vadd.f32 0.0, %v2162
        %v2164 = vpop.f32.mrb[0].mxu0
        %2165 = vmatprep.mubr.f32.mxu0 0.0
        %2166 = vmatmul.mubr.f32.gmra.mrb[0].mxu0 %v2007
        %v2167 = vpop.f32.mrb[0].mxu0
        %v2168 = vadd.f32 0.0, %v2167
        %v2169 = vpop.f32.mrb[0].mxu0
        %2170 = vmatprep.mubr.f32.mxu0 0.0
        %2171 = vmatmul.mubr.f32.gmra.mrb[0].mxu0 %v2010
        %v2172 = vpop.f32.mrb[0].mxu0
        %v2173 = vadd.f32 0.0, %v2172
        %v2174 = vpop.f32.mrb[0].mxu0
        %2175 = vdwg.mxu0
        %v2179 = vrot.slane %v2163, 1
        %v2180 = vrot.slane %v2168, 1
        %v2181 = vsel %vm1320, %v2179, %v2180
        %v2182 = vrot.slane %v2173, 1
        %v2183 = vsel %vm1320, %v2180, %v2182
        %v2186 = vadd.f32 %v2091, %v2181
        %v2187 = vadd.f32 %v2092, %v2183
        %s2188 = scalar_lea.vmem [#allocation5], 144
        %v2189 = vld [vmem:[%s2188] sm:$0xff]
        %v2190 = vld [vmem:[%s2188 + $0x8] sm:$0xff]
        %2191 = vmatprep.subr.mxu0 0.0
        %2192 = vmatpush1.msra.mxu0 %v2189
        %2193 = vmatprep.subr.mxu0 0.0
        %2194 = vmatpush1.msra.mxu0 %v2190
        %2195 = vmatprep.subr.mxu0 0.0
        %2196 = vmatpush1.msra.mxu0 0.0
        %2197 = vmatprep.subr.mxu0 0.0
        %2198 = vmatpush1.msra.mxu0 0.0
        %2199 = vmatprep.subr.mxu0 0.0
        %2200 = vmatpush1.msra.mxu0 0.0
        %2201 = vmatprep.subr.mxu0 0.0
        %2202 = vmatpush1.msra.mxu0 0.0
        %2203 = vmatprep.subr.mxu0 0.0
        %2204 = vmatpush1.msra.mxu0 0.0
        %2205 = vmatprep.subr.mxu0 0.0
        %2206 = vmatpush1.msra.mxu0 0.0
        %2207 = vmatprep.subr.mxu0 0.0
        %2208 = vmatpush1.msra.mxu0 0.0
        %2209 = vmatprep.subr.mxu0 0.0
        %2210 = vmatpush1.msra.mxu0 0.0
        %2211 = vmatprep.subr.mxu0 0.0
        %2212 = vmatpush1.msra.mxu0 0.0
        %2213 = vmatprep.subr.mxu0 0.0
        %2214 = vmatpush1.msra.mxu0 0.0
        %2215 = vmatprep.subr.mxu0 0.0
        %2216 = vmatpush1.msra.mxu0 0.0
        %2217 = vmatprep.subr.mxu0 0.0
        %2218 = vmatpush1.msra.mxu0 0.0
        %2219 = vmatprep.subr.mxu0 0.0
        %2220 = vmatpush1.msra.mxu0 0.0
        %2221 = vmatprep.subr.mxu0 0.0
        %2222 = vmatpush1.msra.mxu0 0.0
        %2223 = vmatprep.subr.mxu0 0.0
        %2224 = vmatpush1.msra.mxu0 0.0
        %2225 = vmatprep.subr.mxu0 0.0
        %2226 = vmatpush1.msra.mxu0 0.0
        %2227 = vmatprep.subr.mxu0 0.0
        %2228 = vmatpush1.msra.mxu0 0.0
        %2229 = vmatprep.subr.mxu0 0.0
        %2230 = vmatpush1.msra.mxu0 0.0
        %2231 = vmatprep.subr.mxu0 0.0
        %2232 = vmatpush1.msra.mxu0 0.0
        %2233 = vmatprep.subr.mxu0 0.0
        %2234 = vmatpush1.msra.mxu0 0.0
        %2235 = vmatprep.subr.mxu0 0.0
        %2236 = vmatpush1.msra.mxu0 0.0
        %2237 = vmatprep.subr.mxu0 0.0
        %2238 = vmatpush1.msra.mxu0 0.0
        %2239 = vmatprep.subr.mxu0 0.0
        %2240 = vmatpush1.msra.mxu0 0.0
        %2241 = vmatprep.subr.mxu0 0.0
        %2242 = vmatpush1.msra.mxu0 0.0
        %2243 = vmatprep.subr.mxu0 0.0
        %2244 = vmatpush1.msra.mxu0 0.0
        %2245 = vmatprep.subr.mxu0 0.0
        %2246 = vmatpush1.msra.mxu0 0.0
        %2247 = vmatprep.subr.mxu0 0.0
        %2248 = vmatpush1.msra.mxu0 0.0
        %2249 = vmatprep.subr.mxu0 0.0
        %2250 = vmatpush1.msra.mxu0 0.0
        %2251 = vmatprep.subr.mxu0 0.0
        %2252 = vmatpush1.msra.mxu0 0.0
        %2253 = vmatprep.subr.mxu0 0.0
        %2254 = vmatpush1.msra.mxu0 0.0
        %2255 = vmatprep.mubr.f32.mxu0 0.0
        %2256 = vmatmul.mubr.f32.gmra.mrb[0].mxu0 %v2005
        %v2257 = vpop.f32.mrb[0].mxu0
        %v2258 = vadd.f32 0.0, %v2257
        %v2259 = vpop.f32.mrb[0].mxu0
        %2260 = vmatprep.mubr.f32.mxu0 0.0
        %2261 = vmatmul.mubr.f32.gmra.mrb[0].mxu0 %v2007
        %v2262 = vpop.f32.mrb[0].mxu0
        %v2263 = vadd.f32 0.0, %v2262
        %v2264 = vpop.f32.mrb[0].mxu0
        %2265 = vmatprep.mubr.f32.mxu0 0.0
        %2266 = vmatmul.mubr.f32.gmra.mrb[0].mxu0 %v2010
        %v2267 = vpop.f32.mrb[0].mxu0
        %v2268 = vadd.f32 0.0, %v2267
        %v2269 = vpop.f32.mrb[0].mxu0
        %2270 = vdwg.mxu0
        %v2274 = vrot.slane %v2258, 2
        %v2275 = vrot.slane %v2263, 2
        %v2276 = vsel %vm1416, %v2274, %v2275
        %v2277 = vrot.slane %v2268, 2
        %v2278 = vsel %vm1416, %v2275, %v2277
        %v2281 = vadd.f32 %v2186, %v2276
        %v2282 = vadd.f32 %v2187, %v2278
        %s2283 = scalar_lea.vmem [#allocation5], 160
        %v2284 = vld [vmem:[%s2283] sm:$0xff]
        %v2285 = vld [vmem:[%s2283 + $0x8] sm:$0xff]
        %2286 = vmatprep.subr.mxu0 0.0
        %2287 = vmatpush1.msra.mxu0 %v2284
        %2288 = vmatprep.subr.mxu0 0.0
        %2289 = vmatpush1.msra.mxu0 %v2285
        %2290 = vmatprep.subr.mxu0 0.0
        %2291 = vmatpush1.msra.mxu0 0.0
        %2292 = vmatprep.subr.mxu0 0.0
        %2293 = vmatpush1.msra.mxu0 0.0
        %2294 = vmatprep.subr.mxu0 0.0
        %2295 = vmatpush1.msra.mxu0 0.0
        %2296 = vmatprep.subr.mxu0 0.0
        %2297 = vmatpush1.msra.mxu0 0.0
        %2298 = vmatprep.subr.mxu0 0.0
        %2299 = vmatpush1.msra.mxu0 0.0
        %2300 = vmatprep.subr.mxu0 0.0
        %2301 = vmatpush1.msra.mxu0 0.0
        %2302 = vmatprep.subr.mxu0 0.0
        %2303 = vmatpush1.msra.mxu0 0.0
        %2304 = vmatprep.subr.mxu0 0.0
        %2305 = vmatpush1.msra.mxu0 0.0
        %2306 = vmatprep.subr.mxu0 0.0
        %2307 = vmatpush1.msra.mxu0 0.0
        %2308 = vmatprep.subr.mxu0 0.0
        %2309 = vmatpush1.msra.mxu0 0.0
        %2310 = vmatprep.subr.mxu0 0.0
        %2311 = vmatpush1.msra.mxu0 0.0
        %2312 = vmatprep.subr.mxu0 0.0
        %2313 = vmatpush1.msra.mxu0 0.0
        %2314 = vmatprep.subr.mxu0 0.0
        %2315 = vmatpush1.msra.mxu0 0.0
        %2316 = vmatprep.subr.mxu0 0.0
        %2317 = vmatpush1.msra.mxu0 0.0
        %2318 = vmatprep.subr.mxu0 0.0
        %2319 = vmatpush1.msra.mxu0 0.0
        %2320 = vmatprep.subr.mxu0 0.0
        %2321 = vmatpush1.msra.mxu0 0.0
        %2322 = vmatprep.subr.mxu0 0.0
        %2323 = vmatpush1.msra.mxu0 0.0
        %2324 = vmatprep.subr.mxu0 0.0
        %2325 = vmatpush1.msra.mxu0 0.0
        %2326 = vmatprep.subr.mxu0 0.0
        %2327 = vmatpush1.msra.mxu0 0.0
        %2328 = vmatprep.subr.mxu0 0.0
        %2329 = vmatpush1.msra.mxu0 0.0
        %2330 = vmatprep.subr.mxu0 0.0
        %2331 = vmatpush1.msra.mxu0 0.0
        %2332 = vmatprep.subr.mxu0 0.0
        %2333 = vmatpush1.msra.mxu0 0.0
        %2334 = vmatprep.subr.mxu0 0.0
        %2335 = vmatpush1.msra.mxu0 0.0
        %2336 = vmatprep.subr.mxu0 0.0
        %2337 = vmatpush1.msra.mxu0 0.0
        %2338 = vmatprep.subr.mxu0 0.0
        %2339 = vmatpush1.msra.mxu0 0.0
        %2340 = vmatprep.subr.mxu0 0.0
        %2341 = vmatpush1.msra.mxu0 0.0
        %2342 = vmatprep.subr.mxu0 0.0
        %2343 = vmatpush1.msra.mxu0 0.0
        %2344 = vmatprep.subr.mxu0 0.0
        %2345 = vmatpush1.msra.mxu0 0.0
        %2346 = vmatprep.subr.mxu0 0.0
        %2347 = vmatpush1.msra.mxu0 0.0
        %2348 = vmatprep.subr.mxu0 0.0
        %2349 = vmatpush1.msra.mxu0 0.0
        %2350 = vmatprep.mubr.f32.mxu0 0.0
        %2351 = vmatmul.mubr.f32.gmra.mrb[0].mxu0 %v2005
        %v2352 = vpop.f32.mrb[0].mxu0
        %v2353 = vadd.f32 0.0, %v2352
        %v2354 = vpop.f32.mrb[0].mxu0
        %2355 = vmatprep.mubr.f32.mxu0 0.0
        %2356 = vmatmul.mubr.f32.gmra.mrb[0].mxu0 %v2007
        %v2357 = vpop.f32.mrb[0].mxu0
        %v2358 = vadd.f32 0.0, %v2357
        %v2359 = vpop.f32.mrb[0].mxu0
        %2360 = vmatprep.mubr.f32.mxu0 0.0
        %2361 = vmatmul.mubr.f32.gmra.mrb[0].mxu0 %v2010
        %v2362 = vpop.f32.mrb[0].mxu0
        %v2363 = vadd.f32 0.0, %v2362
        %v2364 = vpop.f32.mrb[0].mxu0
        %2365 = vdwg.mxu0
        %v2369 = vrot.slane %v2353, 3
        %v2370 = vrot.slane %v2358, 3
        %v2371 = vsel %vm1512, %v2369, %v2370
        %v2372 = vrot.slane %v2363, 3
        %v2373 = vsel %vm1512, %v2370, %v2372
        %v2376 = vadd.f32 %v2281, %v2371
        %v2377 = vadd.f32 %v2282, %v2373
        %s2378 = scalar_lea.vmem [#allocation5], 176
        %v2379 = vld [vmem:[%s2378] sm:$0xff]
        %v2380 = vld [vmem:[%s2378 + $0x8] sm:$0xff]
        %2381 = vmatprep.subr.mxu0 0.0
        %2382 = vmatpush1.msra.mxu0 %v2379
        %2383 = vmatprep.subr.mxu0 0.0
        %2384 = vmatpush1.msra.mxu0 %v2380
        %2385 = vmatprep.subr.mxu0 0.0
        %2386 = vmatpush1.msra.mxu0 0.0
        %2387 = vmatprep.subr.mxu0 0.0
        %2388 = vmatpush1.msra.mxu0 0.0
        %2389 = vmatprep.subr.mxu0 0.0
        %2390 = vmatpush1.msra.mxu0 0.0
        %2391 = vmatprep.subr.mxu0 0.0
        %2392 = vmatpush1.msra.mxu0 0.0
        %2393 = vmatprep.subr.mxu0 0.0
        %2394 = vmatpush1.msra.mxu0 0.0
        %2395 = vmatprep.subr.mxu0 0.0
        %2396 = vmatpush1.msra.mxu0 0.0
        %2397 = vmatprep.subr.mxu0 0.0
        %2398 = vmatpush1.msra.mxu0 0.0
        %2399 = vmatprep.subr.mxu0 0.0
        %2400 = vmatpush1.msra.mxu0 0.0
        %2401 = vmatprep.subr.mxu0 0.0
        %2402 = vmatpush1.msra.mxu0 0.0
        %2403 = vmatprep.subr.mxu0 0.0
        %2404 = vmatpush1.msra.mxu0 0.0
        %2405 = vmatprep.subr.mxu0 0.0
        %2406 = vmatpush1.msra.mxu0 0.0
        %2407 = vmatprep.subr.mxu0 0.0
        %2408 = vmatpush1.msra.mxu0 0.0
        %2409 = vmatprep.subr.mxu0 0.0
        %2410 = vmatpush1.msra.mxu0 0.0
        %2411 = vmatprep.subr.mxu0 0.0
        %2412 = vmatpush1.msra.mxu0 0.0
        %2413 = vmatprep.subr.mxu0 0.0
        %2414 = vmatpush1.msra.mxu0 0.0
        %2415 = vmatprep.subr.mxu0 0.0
        %2416 = vmatpush1.msra.mxu0 0.0
        %2417 = vmatprep.subr.mxu0 0.0
        %2418 = vmatpush1.msra.mxu0 0.0
        %2419 = vmatprep.subr.mxu0 0.0
        %2420 = vmatpush1.msra.mxu0 0.0
        %2421 = vmatprep.subr.mxu0 0.0
        %2422 = vmatpush1.msra.mxu0 0.0
        %2423 = vmatprep.subr.mxu0 0.0
        %2424 = vmatpush1.msra.mxu0 0.0
        %2425 = vmatprep.subr.mxu0 0.0
        %2426 = vmatpush1.msra.mxu0 0.0
        %2427 = vmatprep.subr.mxu0 0.0
        %2428 = vmatpush1.msra.mxu0 0.0
        %2429 = vmatprep.subr.mxu0 0.0
        %2430 = vmatpush1.msra.mxu0 0.0
        %2431 = vmatprep.subr.mxu0 0.0
        %2432 = vmatpush1.msra.mxu0 0.0
        %2433 = vmatprep.subr.mxu0 0.0
        %2434 = vmatpush1.msra.mxu0 0.0
        %2435 = vmatprep.subr.mxu0 0.0
        %2436 = vmatpush1.msra.mxu0 0.0
        %2437 = vmatprep.subr.mxu0 0.0
        %2438 = vmatpush1.msra.mxu0 0.0
        %2439 = vmatprep.subr.mxu0 0.0
        %2440 = vmatpush1.msra.mxu0 0.0
        %2441 = vmatprep.subr.mxu0 0.0
        %2442 = vmatpush1.msra.mxu0 0.0
        %2443 = vmatprep.subr.mxu0 0.0
        %2444 = vmatpush1.msra.mxu0 0.0
        %2445 = vmatprep.mubr.f32.mxu0 0.0
        %2446 = vmatmul.mubr.f32.gmra.mrb[0].mxu0 %v2005
        %v2447 = vpop.f32.mrb[0].mxu0
        %v2448 = vadd.f32 0.0, %v2447
        %v2449 = vpop.f32.mrb[0].mxu0
        %2450 = vmatprep.mubr.f32.mxu0 0.0
        %2451 = vmatmul.mubr.f32.gmra.mrb[0].mxu0 %v2007
        %v2452 = vpop.f32.mrb[0].mxu0
        %v2453 = vadd.f32 0.0, %v2452
        %v2454 = vpop.f32.mrb[0].mxu0
        %2455 = vmatprep.mubr.f32.mxu0 0.0
        %2456 = vmatmul.mubr.f32.gmra.mrb[0].mxu0 %v2010
        %v2457 = vpop.f32.mrb[0].mxu0
        %v2458 = vadd.f32 0.0, %v2457
        %v2459 = vpop.f32.mrb[0].mxu0
        %2460 = vdwg.mxu0
        %v2464 = vrot.slane %v2448, 4
        %v2465 = vrot.slane %v2453, 4
        %v2466 = vsel %vm1608, %v2464, %v2465
        %v2467 = vrot.slane %v2458, 4
        %v2468 = vsel %vm1608, %v2465, %v2467
        %v2471 = vadd.f32 %v2376, %v2466
        %v2472 = vadd.f32 %v2377, %v2468
        %s2473 = scalar_lea.vmem [#allocation5], 192
        %v2474 = vld [vmem:[%s2473] sm:$0xff]
        %v2475 = vld [vmem:[%s2473 + $0x8] sm:$0xff]
        %2476 = vmatprep.subr.mxu0 0.0
        %2477 = vmatpush1.msra.mxu0 %v2474
        %2478 = vmatprep.subr.mxu0 0.0
        %2479 = vmatpush1.msra.mxu0 %v2475
        %2480 = vmatprep.subr.mxu0 0.0
        %2481 = vmatpush1.msra.mxu0 0.0
        %2482 = vmatprep.subr.mxu0 0.0
        %2483 = vmatpush1.msra.mxu0 0.0
        %2484 = vmatprep.subr.mxu0 0.0
        %2485 = vmatpush1.msra.mxu0 0.0
        %2486 = vmatprep.subr.mxu0 0.0
        %2487 = vmatpush1.msra.mxu0 0.0
        %2488 = vmatprep.subr.mxu0 0.0
        %2489 = vmatpush1.msra.mxu0 0.0
        %2490 = vmatprep.subr.mxu0 0.0
        %2491 = vmatpush1.msra.mxu0 0.0
        %2492 = vmatprep.subr.mxu0 0.0
        %2493 = vmatpush1.msra.mxu0 0.0
        %2494 = vmatprep.subr.mxu0 0.0
        %2495 = vmatpush1.msra.mxu0 0.0
        %2496 = vmatprep.subr.mxu0 0.0
        %2497 = vmatpush1.msra.mxu0 0.0
        %2498 = vmatprep.subr.mxu0 0.0
        %2499 = vmatpush1.msra.mxu0 0.0
        %2500 = vmatprep.subr.mxu0 0.0
        %2501 = vmatpush1.msra.mxu0 0.0
        %2502 = vmatprep.subr.mxu0 0.0
        %2503 = vmatpush1.msra.mxu0 0.0
        %2504 = vmatprep.subr.mxu0 0.0
        %2505 = vmatpush1.msra.mxu0 0.0
        %2506 = vmatprep.subr.mxu0 0.0
        %2507 = vmatpush1.msra.mxu0 0.0
        %2508 = vmatprep.subr.mxu0 0.0
        %2509 = vmatpush1.msra.mxu0 0.0
        %2510 = vmatprep.subr.mxu0 0.0
        %2511 = vmatpush1.msra.mxu0 0.0
        %2512 = vmatprep.subr.mxu0 0.0
        %2513 = vmatpush1.msra.mxu0 0.0
        %2514 = vmatprep.subr.mxu0 0.0
        %2515 = vmatpush1.msra.mxu0 0.0
        %2516 = vmatprep.subr.mxu0 0.0
        %2517 = vmatpush1.msra.mxu0 0.0
        %2518 = vmatprep.subr.mxu0 0.0
        %2519 = vmatpush1.msra.mxu0 0.0
        %2520 = vmatprep.subr.mxu0 0.0
        %2521 = vmatpush1.msra.mxu0 0.0
        %2522 = vmatprep.subr.mxu0 0.0
        %2523 = vmatpush1.msra.mxu0 0.0
        %2524 = vmatprep.subr.mxu0 0.0
        %2525 = vmatpush1.msra.mxu0 0.0
        %2526 = vmatprep.subr.mxu0 0.0
        %2527 = vmatpush1.msra.mxu0 0.0
        %2528 = vmatprep.subr.mxu0 0.0
        %2529 = vmatpush1.msra.mxu0 0.0
        %2530 = vmatprep.subr.mxu0 0.0
        %2531 = vmatpush1.msra.mxu0 0.0
        %2532 = vmatprep.subr.mxu0 0.0
        %2533 = vmatpush1.msra.mxu0 0.0
        %2534 = vmatprep.subr.mxu0 0.0
        %2535 = vmatpush1.msra.mxu0 0.0
        %2536 = vmatprep.subr.mxu0 0.0
        %2537 = vmatpush1.msra.mxu0 0.0
        %2538 = vmatprep.subr.mxu0 0.0
        %2539 = vmatpush1.msra.mxu0 0.0
        %2540 = vmatprep.mubr.f32.mxu0 0.0
        %2541 = vmatmul.mubr.f32.gmra.mrb[0].mxu0 %v2005
        %v2542 = vpop.f32.mrb[0].mxu0
        %v2543 = vadd.f32 0.0, %v2542
        %v2544 = vpop.f32.mrb[0].mxu0
        %2545 = vmatprep.mubr.f32.mxu0 0.0
        %2546 = vmatmul.mubr.f32.gmra.mrb[0].mxu0 %v2007
        %v2547 = vpop.f32.mrb[0].mxu0
        %v2548 = vadd.f32 0.0, %v2547
        %v2549 = vpop.f32.mrb[0].mxu0
        %2550 = vmatprep.mubr.f32.mxu0 0.0
        %2551 = vmatmul.mubr.f32.gmra.mrb[0].mxu0 %v2010
        %v2552 = vpop.f32.mrb[0].mxu0
        %v2553 = vadd.f32 0.0, %v2552
        %v2554 = vpop.f32.mrb[0].mxu0
        %2555 = vdwg.mxu0
        %v2559 = vrot.slane %v2543, 5
        %v2560 = vrot.slane %v2548, 5
        %v2561 = vsel %vm1139, %v2559, %v2560
        %v2562 = vrot.slane %v2553, 5
        %v2563 = vsel %vm1139, %v2560, %v2562
        %v2566 = vadd.f32 %v2471, %v2561
        %v2567 = vadd.f32 %v2472, %v2563
        %s2568 = scalar_lea.vmem [#allocation5], 208
        %v2569 = vld [vmem:[%s2568] sm:$0xff]
        %v2570 = vld [vmem:[%s2568 + $0x8] sm:$0xff]
        %2571 = vmatprep.subr.mxu0 0.0
        %2572 = vmatpush1.msra.mxu0 %v2569
        %2573 = vmatprep.subr.mxu0 0.0
        %2574 = vmatpush1.msra.mxu0 %v2570
        %2575 = vmatprep.subr.mxu0 0.0
        %2576 = vmatpush1.msra.mxu0 0.0
        %2577 = vmatprep.subr.mxu0 0.0
        %2578 = vmatpush1.msra.mxu0 0.0
        %2579 = vmatprep.subr.mxu0 0.0
        %2580 = vmatpush1.msra.mxu0 0.0
        %2581 = vmatprep.subr.mxu0 0.0
        %2582 = vmatpush1.msra.mxu0 0.0
        %2583 = vmatprep.subr.mxu0 0.0
        %2584 = vmatpush1.msra.mxu0 0.0
        %2585 = vmatprep.subr.mxu0 0.0
        %2586 = vmatpush1.msra.mxu0 0.0
        %2587 = vmatprep.subr.mxu0 0.0
        %2588 = vmatpush1.msra.mxu0 0.0
        %2589 = vmatprep.subr.mxu0 0.0
        %2590 = vmatpush1.msra.mxu0 0.0
        %2591 = vmatprep.subr.mxu0 0.0
        %2592 = vmatpush1.msra.mxu0 0.0
        %2593 = vmatprep.subr.mxu0 0.0
        %2594 = vmatpush1.msra.mxu0 0.0
        %2595 = vmatprep.subr.mxu0 0.0
        %2596 = vmatpush1.msra.mxu0 0.0
        %2597 = vmatprep.subr.mxu0 0.0
        %2598 = vmatpush1.msra.mxu0 0.0
        %2599 = vmatprep.subr.mxu0 0.0
        %2600 = vmatpush1.msra.mxu0 0.0
        %2601 = vmatprep.subr.mxu0 0.0
        %2602 = vmatpush1.msra.mxu0 0.0
        %2603 = vmatprep.subr.mxu0 0.0
        %2604 = vmatpush1.msra.mxu0 0.0
        %2605 = vmatprep.subr.mxu0 0.0
        %2606 = vmatpush1.msra.mxu0 0.0
        %2607 = vmatprep.subr.mxu0 0.0
        %2608 = vmatpush1.msra.mxu0 0.0
        %2609 = vmatprep.subr.mxu0 0.0
        %2610 = vmatpush1.msra.mxu0 0.0
        %2611 = vmatprep.subr.mxu0 0.0
        %2612 = vmatpush1.msra.mxu0 0.0
        %2613 = vmatprep.subr.mxu0 0.0
        %2614 = vmatpush1.msra.mxu0 0.0
        %2615 = vmatprep.subr.mxu0 0.0
        %2616 = vmatpush1.msra.mxu0 0.0
        %2617 = vmatprep.subr.mxu0 0.0
        %2618 = vmatpush1.msra.mxu0 0.0
        %2619 = vmatprep.subr.mxu0 0.0
        %2620 = vmatpush1.msra.mxu0 0.0
        %2621 = vmatprep.subr.mxu0 0.0
        %2622 = vmatpush1.msra.mxu0 0.0
        %2623 = vmatprep.subr.mxu0 0.0
        %2624 = vmatpush1.msra.mxu0 0.0
        %2625 = vmatprep.subr.mxu0 0.0
        %2626 = vmatpush1.msra.mxu0 0.0
        %2627 = vmatprep.subr.mxu0 0.0
        %2628 = vmatpush1.msra.mxu0 0.0
        %2629 = vmatprep.subr.mxu0 0.0
        %2630 = vmatpush1.msra.mxu0 0.0
        %2631 = vmatprep.subr.mxu0 0.0
        %2632 = vmatpush1.msra.mxu0 0.0
        %2633 = vmatprep.subr.mxu0 0.0
        %2634 = vmatpush1.msra.mxu0 0.0
        %2635 = vmatprep.mubr.f32.mxu0 0.0
        %2636 = vmatmul.mubr.f32.gmra.mrb[0].mxu0 %v2005
        %v2637 = vpop.f32.mrb[0].mxu0
        %v2638 = vadd.f32 0.0, %v2637
        %v2639 = vpop.f32.mrb[0].mxu0
        %2640 = vmatprep.mubr.f32.mxu0 0.0
        %2641 = vmatmul.mubr.f32.gmra.mrb[0].mxu0 %v2007
        %v2642 = vpop.f32.mrb[0].mxu0
        %v2643 = vadd.f32 0.0, %v2642
        %v2644 = vpop.f32.mrb[0].mxu0
        %2645 = vmatprep.mubr.f32.mxu0 0.0
        %2646 = vmatmul.mubr.f32.gmra.mrb[0].mxu0 %v2010
        %v2647 = vpop.f32.mrb[0].mxu0
        %v2648 = vadd.f32 0.0, %v2647
        %v2649 = vpop.f32.mrb[0].mxu0
        %2650 = vdwg.mxu0
        %v2654 = vrot.slane %v2638, 6
        %v2655 = vrot.slane %v2643, 6
        %v2656 = vsel %vm560, %v2654, %v2655
        %v2657 = vrot.slane %v2648, 6
        %v2658 = vsel %vm560, %v2655, %v2657
        %v2661 = vadd.f32 %v2566, %v2656
        %v2662 = vadd.f32 %v2567, %v2658
        %v2663 = vxor.u32 %v2661, 2147483648
        %v2664 = vxor.u32 %v2662, 2147483648
        %v2665 = vmul.f32 %v2663, 1.442695
        %v2666 = vpow.pop %v2665
        %v2667 = vmul.f32 %v2664, 1.442695
        %v2668 = vpow.pop %v2667
        %v2669 = vadd.f32 %v2666, 1.0
        %v2670 = vadd.f32 %v2668, 1.0
        %v2671 = vrcp.pop %v2669
        %v2672 = vmul.f32 1.0, %v2671
        %v2673 = vrcp.pop %v2670
        %v2674 = vmul.f32 1.0, %v2673
        %v2675 = vld [vmem:[%s284] sm:$0xff]
        %v2676 = vld [vmem:[%s284 + $0x8] sm:$0xff]
        %v2677 = vld [vmem:[%s284 + $0x10] sm:$0xff]
        %v2678 = vld [vmem:[%s284 + $0x18] sm:$0xff]
        %v2679 = vld [vmem:[%s284 + $0x20] sm:$0xff]
        %v2680 = vld [vmem:[%s284 + $0x28] sm:$0xff]
        %v2681 = vld [vmem:[%s284 + $0x30] sm:$0xff]
        %v2682 = vld [vmem:[%s284 + $0x38] sm:$0xff]
        %v2683 = vld [vmem:[%s284 + $0x40] sm:$0xff]
        %v2684 = vld [vmem:[%s284 + $0x48] sm:$0xff]
        %v2685 = vld [vmem:[%s284 + $0x50] sm:$0xff]
        %v2686 = vld [vmem:[%s284 + $0x58] sm:$0xff]
        %v2687 = vld [vmem:[%s284 + $0x60] sm:$0xff]
        %v2688 = vld [vmem:[%s284 + $0x68] sm:$0xff]
        %v2689 = vld [vmem:[%s284 + $0x70] sm:$0xff]
        %v2690 = vld [vmem:[%s284 + $0x78] sm:$0xff]
        %v2691 = vld [vmem:[%s284 + $0x80] sm:$0xff]
        %v2692 = vld [vmem:[%s284 + $0x88] sm:$0xff]
        %v2693 = vld [vmem:[%s284 + $0x90] sm:$0xff]
        %v2694 = vld [vmem:[%s284 + $0x98] sm:$0xff]
        %v2695 = vld [vmem:[%s284 + $0xa0] sm:$0xff]
        %v2696 = vld [vmem:[%s284 + $0xa8] sm:$0xff]
        %v2697 = vld [vmem:[%s284 + $0xb0] sm:$0xff]
        %v2698 = vld [vmem:[%s284 + $0xb8] sm:$0xff]
        %v2699 = vld [vmem:[%s284 + $0xc0] sm:$0xff]
        %v2700 = vld [vmem:[%s284 + $0xc8] sm:$0xff]
        %v2701 = vld [vmem:[%s284 + $0xd0] sm:$0xff]
        %v2702 = vld [vmem:[%s284 + $0xd8] sm:$0xff]
        %v2703 = vld [vmem:[%s284 + $0xe0] sm:$0xff]
        %v2704 = vld [vmem:[%s284 + $0xe8] sm:$0xff]
        %v2705 = vld [vmem:[%s284 + $0xf0] sm:$0xff]
        %v2706 = vld [vmem:[%s284 + $0xf8] sm:$0xff]
        %v2707 = vlaneseq
        %v2708 = vshrl.u32 %v2707, 7
        %v2709 = vsub.s32 0, %v2708
        %v2710 = vrot.slane %v2672, %v2709
        %2712 = vbcast.lane.b32.xlu0 %v2710, 256
        %v2713 = vpop.permute.xlu0 %2712
        %s2715 = sor.u32 256, 8
        %2716 = vbcast.lane.b32.xlu0 %v2710, %s2715
        %v2717 = vpop.permute.xlu0 %2716
        %v2718 = vlaneseq
        %v2719 = vshrl.u32 %v2718, 7
        %v2720 = vsub.s32 1, %v2719
        %v2721 = vrot.slane %v2672, %v2720
        %2723 = vbcast.lane.b32.xlu0 %v2721, 256
        %v2724 = vpop.permute.xlu0 %2723
        %s2726 = sor.u32 256, 8
        %2727 = vbcast.lane.b32.xlu0 %v2721, %s2726
        %v2728 = vpop.permute.xlu0 %2727
        %v2729 = vlaneseq
        %v2730 = vshrl.u32 %v2729, 7
        %v2731 = vsub.s32 2, %v2730
        %v2732 = vrot.slane %v2672, %v2731
        %2734 = vbcast.lane.b32.xlu0 %v2732, 256
        %v2735 = vpop.permute.xlu0 %2734
        %s2737 = sor.u32 256, 8
        %2738 = vbcast.lane.b32.xlu0 %v2732, %s2737
        %v2739 = vpop.permute.xlu0 %2738
        %v2740 = vlaneseq
        %v2741 = vshrl.u32 %v2740, 7
        %v2742 = vsub.s32 3, %v2741
        %v2743 = vrot.slane %v2672, %v2742
        %2745 = vbcast.lane.b32.xlu0 %v2743, 256
        %v2746 = vpop.permute.xlu0 %2745
        %s2748 = sor.u32 256, 8
        %2749 = vbcast.lane.b32.xlu0 %v2743, %s2748
        %v2750 = vpop.permute.xlu0 %2749
        %v2751 = vlaneseq
        %v2752 = vshrl.u32 %v2751, 7
        %v2753 = vsub.s32 4, %v2752
        %v2754 = vrot.slane %v2672, %v2753
        %2756 = vbcast.lane.b32.xlu0 %v2754, 256
        %v2757 = vpop.permute.xlu0 %2756
        %s2759 = sor.u32 256, 8
        %2760 = vbcast.lane.b32.xlu0 %v2754, %s2759
        %v2761 = vpop.permute.xlu0 %2760
        %v2762 = vlaneseq
        %v2763 = vshrl.u32 %v2762, 7
        %v2764 = vsub.s32 5, %v2763
        %v2765 = vrot.slane %v2672, %v2764
        %2767 = vbcast.lane.b32.xlu0 %v2765, 256
        %v2768 = vpop.permute.xlu0 %2767
        %s2770 = sor.u32 256, 8
        %2771 = vbcast.lane.b32.xlu0 %v2765, %s2770
        %v2772 = vpop.permute.xlu0 %2771
        %v2773 = vlaneseq
        %v2774 = vshrl.u32 %v2773, 7
        %v2775 = vsub.s32 6, %v2774
        %v2776 = vrot.slane %v2672, %v2775
        %2778 = vbcast.lane.b32.xlu0 %v2776, 256
        %v2779 = vpop.permute.xlu0 %2778
        %s2781 = sor.u32 256, 8
        %2782 = vbcast.lane.b32.xlu0 %v2776, %s2781
        %v2783 = vpop.permute.xlu0 %2782
        %v2784 = vlaneseq
        %v2785 = vshrl.u32 %v2784, 7
        %v2786 = vsub.s32 7, %v2785
        %v2787 = vrot.slane %v2672, %v2786
        %2789 = vbcast.lane.b32.xlu0 %v2787, 256
        %v2790 = vpop.permute.xlu0 %2789
        %s2792 = sor.u32 256, 8
        %2793 = vbcast.lane.b32.xlu0 %v2787, %s2792
        %v2794 = vpop.permute.xlu0 %2793
        %v2795 = vlaneseq
        %v2796 = vshrl.u32 %v2795, 7
        %v2797 = vsub.s32 0, %v2796
        %v2798 = vrot.slane %v2674, %v2797
        %2800 = vbcast.lane.b32.xlu0 %v2798, 256
        %v2801 = vpop.permute.xlu0 %2800
        %s2803 = sor.u32 256, 8
        %2804 = vbcast.lane.b32.xlu0 %v2798, %s2803
        %v2805 = vpop.permute.xlu0 %2804
        %v2806 = vlaneseq
        %v2807 = vshrl.u32 %v2806, 7
        %v2808 = vsub.s32 1, %v2807
        %v2809 = vrot.slane %v2674, %v2808
        %2811 = vbcast.lane.b32.xlu0 %v2809, 256
        %v2812 = vpop.permute.xlu0 %2811
        %s2814 = sor.u32 256, 8
        %2815 = vbcast.lane.b32.xlu0 %v2809, %s2814
        %v2816 = vpop.permute.xlu0 %2815
        %v2817 = vlaneseq
        %v2818 = vshrl.u32 %v2817, 7
        %v2819 = vsub.s32 2, %v2818
        %v2820 = vrot.slane %v2674, %v2819
        %2822 = vbcast.lane.b32.xlu0 %v2820, 256
        %v2823 = vpop.permute.xlu0 %2822
        %s2825 = sor.u32 256, 8
        %2826 = vbcast.lane.b32.xlu0 %v2820, %s2825
        %v2827 = vpop.permute.xlu0 %2826
        %v2828 = vlaneseq
        %v2829 = vshrl.u32 %v2828, 7
        %v2830 = vsub.s32 3, %v2829
        %v2831 = vrot.slane %v2674, %v2830
        %2833 = vbcast.lane.b32.xlu0 %v2831, 256
        %v2834 = vpop.permute.xlu0 %2833
        %s2836 = sor.u32 256, 8
        %2837 = vbcast.lane.b32.xlu0 %v2831, %s2836
        %v2838 = vpop.permute.xlu0 %2837
        %v2839 = vlaneseq
        %v2840 = vshrl.u32 %v2839, 7
        %v2841 = vsub.s32 4, %v2840
        %v2842 = vrot.slane %v2674, %v2841
        %2844 = vbcast.lane.b32.xlu0 %v2842, 256
        %v2845 = vpop.permute.xlu0 %2844
        %s2847 = sor.u32 256, 8
        %2848 = vbcast.lane.b32.xlu0 %v2842, %s2847
        %v2849 = vpop.permute.xlu0 %2848
        %v2850 = vlaneseq
        %v2851 = vshrl.u32 %v2850, 7
        %v2852 = vsub.s32 5, %v2851
        %v2853 = vrot.slane %v2674, %v2852
        %2855 = vbcast.lane.b32.xlu0 %v2853, 256
        %v2856 = vpop.permute.xlu0 %2855
        %s2858 = sor.u32 256, 8
        %2859 = vbcast.lane.b32.xlu0 %v2853, %s2858
        %v2860 = vpop.permute.xlu0 %2859
        %v2861 = vlaneseq
        %v2862 = vshrl.u32 %v2861, 7
        %v2863 = vsub.s32 6, %v2862
        %v2864 = vrot.slane %v2674, %v2863
        %2866 = vbcast.lane.b32.xlu0 %v2864, 256
        %v2867 = vpop.permute.xlu0 %2866
        %s2869 = sor.u32 256, 8
        %2870 = vbcast.lane.b32.xlu0 %v2864, %s2869
        %v2871 = vpop.permute.xlu0 %2870
        %v2872 = vlaneseq
        %v2873 = vshrl.u32 %v2872, 7
        %v2874 = vsub.s32 7, %v2873
        %v2875 = vrot.slane %v2674, %v2874
        %2877 = vbcast.lane.b32.xlu0 %v2875, 256
        %v2878 = vpop.permute.xlu0 %2877
        %s2880 = sor.u32 256, 8
        %2881 = vbcast.lane.b32.xlu0 %v2875, %s2880
        %v2882 = vpop.permute.xlu0 %2881
        %v2883 = vmul.f32 %v2675, %v2713
        %v2884 = vmul.f32 %v2676, %v2717
        %v2885 = vmul.f32 %v2677, %v2724
        %v2886 = vmul.f32 %v2678, %v2728
        %v2887 = vmul.f32 %v2679, %v2735
        %v2888 = vmul.f32 %v2680, %v2739
        %v2889 = vmul.f32 %v2681, %v2746
        %v2890 = vmul.f32 %v2682, %v2750
        %v2891 = vmul.f32 %v2683, %v2757
        %v2892 = vmul.f32 %v2684, %v2761
        %v2893 = vmul.f32 %v2685, %v2768
        %v2894 = vmul.f32 %v2686, %v2772
        %v2895 = vmul.f32 %v2687, %v2779
        %v2896 = vmul.f32 %v2688, %v2783
        %v2897 = vmul.f32 %v2689, %v2790
        %v2898 = vmul.f32 %v2690, %v2794
        %v2899 = vmul.f32 %v2691, %v2801
        %v2900 = vmul.f32 %v2692, %v2805
        %v2901 = vmul.f32 %v2693, %v2812
        %v2902 = vmul.f32 %v2694, %v2816
        %v2903 = vmul.f32 %v2695, %v2823
        %v2904 = vmul.f32 %v2696, %v2827
        %v2905 = vmul.f32 %v2697, %v2834
        %v2906 = vmul.f32 %v2698, %v2838
        %v2907 = vmul.f32 %v2699, %v2845
        %v2908 = vmul.f32 %v2700, %v2849
        %v2909 = vmul.f32 %v2701, %v2856
        %v2910 = vmul.f32 %v2702, %v2860
        %v2911 = vmul.f32 %v2703, %v2867
        %v2912 = vmul.f32 %v2704, %v2871
        %v2913 = vmul.f32 %v2705, %v2878
        %v2914 = vmul.f32 %v2706, %v2882
        %2915 = vst.msk [vmem:[%s284] sm:$0xff] %vm317, %v2883
        %2916 = vst.msk [vmem:[%s284 + $0x8] sm:$0xff] %vm317, %v2884
        %2917 = vst.msk [vmem:[%s284 + $0x10] sm:$0xff] %vm317, %v2885
        %2918 = vst.msk [vmem:[%s284 + $0x18] sm:$0xff] %vm317, %v2886
        %2919 = vst.msk [vmem:[%s284 + $0x20] sm:$0xff] %vm317, %v2887
        %2920 = vst.msk [vmem:[%s284 + $0x28] sm:$0xff] %vm317, %v2888
        %2921 = vst.msk [vmem:[%s284 + $0x30] sm:$0xff] %vm317, %v2889
        %2922 = vst.msk [vmem:[%s284 + $0x38] sm:$0xff] %vm317, %v2890
        %2923 = vst.msk [vmem:[%s284 + $0x40] sm:$0xff] %vm317, %v2891
        %2924 = vst.msk [vmem:[%s284 + $0x48] sm:$0xff] %vm317, %v2892
        %2925 = vst.msk [vmem:[%s284 + $0x50] sm:$0xff] %vm317, %v2893
        %2926 = vst.msk [vmem:[%s284 + $0x58] sm:$0xff] %vm317, %v2894
        %2927 = vst.msk [vmem:[%s284 + $0x60] sm:$0xff] %vm317, %v2895
        %2928 = vst.msk [vmem:[%s284 + $0x68] sm:$0xff] %vm317, %v2896
        %2929 = vst.msk [vmem:[%s284 + $0x70] sm:$0xff] %vm317, %v2897
        %2930 = vst.msk [vmem:[%s284 + $0x78] sm:$0xff] %vm317, %v2898
        %2931 = vst.msk [vmem:[%s284 + $0x80] sm:$0xff] %vm317, %v2899
        %2932 = vst.msk [vmem:[%s284 + $0x88] sm:$0xff] %vm317, %v2900
        %2933 = vst.msk [vmem:[%s284 + $0x90] sm:$0xff] %vm317, %v2901
        %2934 = vst.msk [vmem:[%s284 + $0x98] sm:$0xff] %vm317, %v2902
        %2935 = vst.msk [vmem:[%s284 + $0xa0] sm:$0xff] %vm317, %v2903
        %2936 = vst.msk [vmem:[%s284 + $0xa8] sm:$0xff] %vm317, %v2904
        %2937 = vst.msk [vmem:[%s284 + $0xb0] sm:$0xff] %vm317, %v2905
        %2938 = vst.msk [vmem:[%s284 + $0xb8] sm:$0xff] %vm317, %v2906
        %2939 = vst.msk [vmem:[%s284 + $0xc0] sm:$0xff] %vm317, %v2907
        %2940 = vst.msk [vmem:[%s284 + $0xc8] sm:$0xff] %vm317, %v2908
        %2941 = vst.msk [vmem:[%s284 + $0xd0] sm:$0xff] %vm317, %v2909
        %2942 = vst.msk [vmem:[%s284 + $0xd8] sm:$0xff] %vm317, %v2910
        %2943 = vst.msk [vmem:[%s284 + $0xe0] sm:$0xff] %vm317, %v2911
        %2944 = vst.msk [vmem:[%s284 + $0xe8] sm:$0xff] %vm317, %v2912
        %2945 = vst.msk [vmem:[%s284 + $0xf0] sm:$0xff] %vm317, %v2913
        %2946 = vst.msk [vmem:[%s284 + $0xf8] sm:$0xff] %vm317, %v2914
        %s2947 = sand.u32 %s163, 1
        %s2948 = scalar_lea.sflag [#allocation4], %s2947
        %s2949 = sand.u32 %s163, 1
        %s2950 = smul.addr %s2949, 256
        %s2951 = scalar_lea.vmem [#allocation7], %s2950
        // Predicated region
        $region53: #{tpu_custom_call.1} parent=43 // pred_check
          %p2952 = pneg %p173
        $region54: #{tpu_custom_call.1} parent=43 // pred_check_branch
          %2954 = sbr.rel (%p2952) target = $region56
        $region55: #{tpu_custom_call.1} parent=43 // pred_region
          %s2956 = ssub.s32 4096, 4096
          %2957 = vsyncadd %s2948, %s2956
          %s2958 = smul.addr %s24, 32
          %s2959 = smul.addr %s2958, 128
          %s2960 = scalar_lea.hbm %s6, %s2959
          %s2961 = sshll.u32 %s2951, 4
          %s2962 = int_to_ptr.vmem [resolvable:$true] %s2961
          %2967 = dma.vmem_to_hbm [thread:$0]  %s2962, 4096, %s2960, %s2948, 128, 128, 8
        $region56: #{tpu_custom_call.1} parent=43 // pred_fallthru
          _
      $region44: #{tpu_custom_call.1} parent=5 // pred_fallthru
        _
      %p2968 = scmp.le.s32.totalorder 2, %s19
      // Predicated region
      $region57: #{tpu_custom_call.1} parent=5 // pred_check
        %p2969 = pneg %p2968
      $region58: #{tpu_custom_call.1} parent=5 // pred_check_branch
        %2971 = sbr.rel (%p2969) target = $region60
      $region59: #{tpu_custom_call.1} parent=5 // pred_region
        %s2972 = ssub.s32 %s19, 2
        // Predicated region
        $region61: #{tpu_custom_call.1} parent=59 // pred_check
          %p2973 = pneg %p179
        $region62: #{tpu_custom_call.1} parent=59 // pred_check_branch
          %2975 = sbr.rel (%p2973) target = $region64
        $region63: #{tpu_custom_call.1} parent=59 // pred_region
          %s2976 = sand.u32 %s164, 1
          %s2977 = scalar_lea.sflag [#allocation4], %s2976
          %s2978 = sand.u32 %s164, 1
          %s2979 = smul.addr %s2978, 256
          %s2980 = scalar_lea.vmem [#allocation7], %s2979
          %2981 = dma.done %s2977, 4096
        $region64: #{tpu_custom_call.1} parent=59 // pred_fallthru
          _
      $region60: #{tpu_custom_call.1} parent=5 // pred_fallthru
        _
    $region6: #{tpu_custom_call.1} parent=1 // loop_footer
      %s23 = sadd.s32 1, %s19
    $region7: #{tpu_custom_call.1} parent=1 // loop_footer_branch
      %18 = sbr.rel target = $region3
    $region8: #{tpu_custom_call.1} parent=1 // loop_exit
      _
    %2982 = vsyncpa [#allocation3], 1
    %s2983 = scalar_lea.sflag [#allocation3], 1
    %2984 = vsyncpa %s2983, 1
    %2985 = vsyncpa [#allocation6], 1
    %2986 = vsyncpa [#allocation4], 1
    %s2987 = scalar_lea.sflag [#allocation4], 1
    %2988 = vsyncpa %s2987, 1

</llo_original>
